<compile_context>
chip_gen: v6e
topology: v6e:2x2x1
jax: 0.10.0
libtpu: 0.0.40
codegen_flags: <defaults>
</compile_context>

<pallas_src>
import functools
import math

import jax
import jax.numpy as jnp
from jax import lax
from jax.experimental import pallas as pl
from jax.experimental.pallas import tpu as pltpu


# ---------------------------------------------------------------------------
# hardware-aware constants
# ---------------------------------------------------------------------------
def _detect_vmem_cap():
    try:
        return int(pltpu.get_tpu_info().vmem_capacity_bytes)
    except Exception:
        return 64 * 1024 * 1024          # conservative (v7x per-core VMEM)


_VMEM_CAP = _detect_vmem_cap()
_VMEM_LIMIT = int(min(_VMEM_CAP // 2, 64 * 1024 * 1024))   # scoped limit we request
_VMEM_BUDGET = int(_VMEM_LIMIT * 3 // 4)                   # what the tiler may plan on
_HARD_TM_CAP = 2048 if _VMEM_CAP >= 96 * 1024 * 1024 else 1024
_M_UNIT = 16                                               # bf16 sublane tile

_COMPILER_PARAMS = pltpu.CompilerParams(
    dimension_semantics=("parallel",),
    vmem_limit_bytes=_VMEM_LIMIT,
)


# ---------------------------------------------------------------------------
# tiling helpers
# ---------------------------------------------------------------------------
def _round_up(x, m):
    return (x + m - 1) // m * m


def _pick_tile(total, unit, max_tile):
    """Tile size in multiples of `unit`: <= max_tile, >= 2 grid steps when
    there is room, minimising zero padding first and then the step count."""
    max_tile = max(unit, min(max_tile, _round_up(total, unit)))
    if total >= 2 * unit:                      # keep >=2 steps (megacore/pipelining)
        max_tile = min(max_tile, _round_up((total + 1) // 2, unit))
    best_tile, best_key = unit, None
    t = unit
    while t <= max_tile:
        steps = -(-total // t)
        key = (steps * t - total, steps)       # (padding, steps)
        if best_key is None or key < best_key:
            best_key, best_tile = key, t
        t += unit
    return best_tile


def _tap_tiling(n_rows, row_len, per_flat_bytes, resident_bytes):
    """Rows-per-block so that TMf = rows * row_len is a multiple of _M_UNIT and
    the double-buffered working set stays inside the VMEM budget."""
    g = _M_UNIT // math.gcd(row_len, _M_UNIT)            # row granularity
    budget_rows = (_VMEM_BUDGET - resident_bytes) // max(per_flat_bytes * row_len, 1)
    cap_rows = max(_HARD_TM_CAP // row_len, 1)
    max_rows = min(budget_rows, cap_rows)
    max_rows = max(g, (max_rows // g) * g)
    tmr = _pick_tile(n_rows, g, max_rows)
    n_blocks = -(-n_rows // tmr)
    return tmr, tmr * row_len, n_blocks


# ---------------------------------------------------------------------------
# JAX-side operand preparation
# ---------------------------------------------------------------------------
def _im2col(x_nhwc, KH, KW, stride, pad):
    """im2col patches, tap order (kh, kw, cin) -> (N*Ho*Wo, KH*KW*Cin) bf16."""
    N, H, W, Cin = x_nhwc.shape
    xp = jnp.pad(x_nhwc.astype(jnp.bfloat16),
                 ((0, 0), (pad, pad), (pad, pad), (0, 0)))
    Ho = (H + 2 * pad - KH) // stride + 1
    Wo = (W + 2 * pad - KW) // stride + 1
    cols = []
    for kh in range(KH):
        for kw in range(KW):
            cols.append(
                xp[:, kh:kh + stride * Ho:stride, kw:kw + stride * Wo:stride, :])
    patches = jnp.concatenate(cols, axis=-1).reshape(N * Ho * Wo, KH * KW * Cin)
    return patches, Ho, Wo


def _weight_matrix(w_oihw):
    """PyTorch OIHW -> (KH*KW*Cin, Cout) bf16 matching the (kh, kw, cin) order."""
    Cout, Cin, KH, KW = w_oihw.shape
    return jnp.transpose(w_oihw, (2, 3, 1, 0)).reshape(
        KH * KW * Cin, Cout).astype(jnp.bfloat16)


def _build_halo_rows(x_nhwc):
    """Spatial pad=1 and stack the 3 H-halo row planes, flattened over
    (n, h, padded_w).  Returns rows (3, N*H*(W+2), C) bf16 and row_len=W+2."""
    N, H, W, C = x_nhwc.shape
    xp = jnp.pad(x_nhwc.astype(jnp.bfloat16),
                 ((0, 0), (1, 1), (1, 1), (0, 0)))
    rows = jnp.stack([xp[:, j:j + H] for j in range(3)], axis=0)   # (3,N,H,W+2,C)
    return rows.reshape(3, N * H * (W + 2), C), W + 2


# ---------------------------------------------------------------------------
# Pallas kernels
# ---------------------------------------------------------------------------
def _conv_mm_kernel(p_ref, w_ref, b_ref, o_ref, *, relu_out):
    acc = jnp.dot(p_ref[...], w_ref[...], preferred_element_type=jnp.float32)
    acc = acc + b_ref[...]
    if relu_out:
        acc = jnp.maximum(acc, 0.0)
    o_ref[...] = acc.astype(o_ref.dtype)


def _shift_up(y, dw):
    """result[m] = y[m + dw]; the dw tail rows are zero-filled.  The tail only
    ever lands in the padded-column positions that get discarded afterwards."""
    if dw == 0:
        return y
    tail = jnp.zeros((dw, y.shape[1]), y.dtype)
    return jnp.concatenate([y[dw:], tail], axis=0)


def _conv3x3_tap_kernel(x_ref, w_ref, b_ref, o_ref, *, relu_out):
    # x_ref: (3, TMf, Cin) bf16 halo rows (flattened padded-width rows)
    # w_ref: (9, Cin, Cout) bf16 tap weights;  b_ref: (1, Cout) f32
    TMf, Cout = o_ref.shape
    acc = jnp.zeros((TMf, Cout), jnp.float32)
    for kh in range(3):
        xr = x_ref[kh]
        for kw in range(3):
            y = jnp.dot(xr, w_ref[3 * kh + kw],
                        preferred_element_type=jnp.float32)
            acc = acc + _shift_up(y, kw)
    acc = acc + b_ref[...]
    if relu_out:
        acc = jnp.maximum(acc, 0.0)
    o_ref[...] = acc.astype(o_ref.dtype)


def _resblock_tap_kernel(x_ref, w1_ref, b1_ref, w2_ref, b2_ref, o_ref, *,
                         relu_out):
    # Fused  ReLU -> conv3x3 -> ReLU -> conv1x1 -> += input [-> ReLU].
    # x_ref: (3, TMf, C) bf16 halo rows of the *un-activated* block input.
    TMf, C = o_ref.shape
    Cres = w1_ref.shape[2]
    acc = jnp.zeros((TMf, Cres), jnp.float32)
    for kh in range(3):
        xr = jnp.maximum(x_ref[kh], 0)        # leading ReLU (pad zeros unaffected)
        for kw in range(3):
            y = jnp.dot(xr, w1_ref[3 * kh + kw],
                        preferred_element_type=jnp.float32)
            acc = acc + _shift_up(y, kw)
    h = jnp.maximum(acc + b1_ref[...], 0.0).astype(w2_ref.dtype)
    out = jnp.dot(h, w2_ref[...], preferred_element_type=jnp.float32) + b2_ref[...]
    # residual: un-activated input = centre halo row shifted by one column
    out = out + _shift_up(x_ref[1].astype(jnp.float32), 1)
    if relu_out:                              # fused Encoder trailing ReLU
        out = jnp.maximum(out, 0.0)
    o_ref[...] = out.astype(o_ref.dtype)


# ---------------------------------------------------------------------------
# Conv2d (4x4 / stride 2) via im2col + tiled Pallas matmul
# ---------------------------------------------------------------------------
def conv2d_im2col(x_nhwc, w_oihw, b, *, stride, pad, relu_out):
    N, H, W, Cin = x_nhwc.shape
    Cout, _, KH, KW = w_oihw.shape

    patches, Ho, Wo = _im2col(x_nhwc, KH, KW, stride, pad)      # bf16
    M, Kd = patches.shape

    per_row = 2 * (2 * Kd) + 2 * (4 * Cout) + 4 * Cout          # dbl-buffered io + acc
    resident = 2 * (2 * Kd * Cout) + 4 * Cout + (1 << 20)
    max_tm = (_VMEM_BUDGET - resident) // per_row
    max_tm = max(_M_UNIT, min(_HARD_TM_CAP, (max_tm // _M_UNIT) * _M_UNIT))
    TM = _pick_tile(M, _M_UNIT, max_tm)
    M_pad = _round_up(M, TM)
    if M_pad != M:
        patches = jnp.pad(patches, ((0, M_pad - M), (0, 0)))

    wmat = _weight_matrix(w_oihw)                                # (Kd, Cout) bf16
    bmat = b.reshape(1, Cout).astype(jnp.float32)

    cost = pl.CostEstimate(
        flops=2 * M_pad * Kd * Cout,
        transcendentals=0,
        bytes_accessed=2 * M_pad * Kd + 2 * Kd * Cout + 4 * Cout + 4 * M_pad * Cout,
    )
    out = pl.pallas_call(
        functools.partial(_conv_mm_kernel, relu_out=relu_out),
        grid=(M_pad // TM,),
        out_shape=jax.ShapeDtypeStruct((M_pad, Cout), jnp.float32),
        in_specs=[
            pl.BlockSpec((TM, Kd), lambda i: (i, 0)),     # patches: tiled over M
            pl.BlockSpec((Kd, Cout), lambda i: (0, 0)),   # weights: resident
            pl.BlockSpec((1, Cout), lambda i: (0, 0)),    # bias: resident
        ],
        out_specs=pl.BlockSpec((TM, Cout), lambda i: (i, 0)),
        compiler_params=_COMPILER_PARAMS,
        cost_estimate=cost,
    )(patches, wmat, bmat)

    return out[:M].reshape(N, Ho, Wo, Cout)


# ---------------------------------------------------------------------------
# 3x3 / stride-1 / pad-1 conv with in-kernel tap accumulation
# ---------------------------------------------------------------------------
def conv3x3_tap(x_nhwc, w_oihw, b, *, relu_out):
    N, H, W, Cin = x_nhwc.shape
    Cout = w_oihw.shape[0]
    rows, row_len = _build_halo_rows(x_nhwc)
    NH = N * H
    Mf = NH * row_len

    per_flat = 2 * (3 * 2 * Cin) + 2 * (4 * Cout) + 4 * Cout + 2 * Cin
    resident = 2 * (9 * 2 * Cin * Cout) + 4 * Cout + (1 << 20)
    TMr, TMf, n_blocks = _tap_tiling(NH, row_len, per_flat, resident)
    Mf_pad = n_blocks * TMf
    if Mf_pad != Mf:
        rows = jnp.pad(rows, ((0, 0), (0, Mf_pad - Mf), (0, 0)))

    wtaps = jnp.transpose(w_oihw, (2, 3, 1, 0)).reshape(
        9, Cin, Cout).astype(jnp.bfloat16)
    bmat = b.reshape(1, Cout).astype(jnp.float32)

    cost = pl.CostEstimate(
        flops=2 * Mf_pad * 9 * Cin * Cout,
        transcendentals=0,
        bytes_accessed=3 * 2 * Mf_pad * Cin + 18 * Cin * Cout + 4 * Cout
        + 4 * Mf_pad * Cout,
    )
    out = pl.pallas_call(
        functools.partial(_conv3x3_tap_kernel, relu_out=relu_out),
        grid=(n_blocks,),
        out_shape=jax.ShapeDtypeStruct((Mf_pad, Cout), jnp.float32),
        in_specs=[
            pl.BlockSpec((3, TMf, Cin), lambda i: (0, i, 0)),   # halo rows (tiled)
            pl.BlockSpec((9, Cin, Cout), lambda i: (0, 0, 0)),  # tap weights
            pl.BlockSpec((1, Cout), lambda i: (0, 0)),          # bias
        ],
        out_specs=pl.BlockSpec((TMf, Cout), lambda i: (i, 0)),
        compiler_params=_COMPILER_PARAMS,
        cost_estimate=cost,
    )(rows, wtaps, bmat)

    return out[:Mf].reshape(N, H, row_len, Cout)[:, :, :W, :]


# ---------------------------------------------------------------------------
# Fused ResBlock (ReLU -> 3x3 -> ReLU -> 1x1 -> += x), one pallas_call
# ---------------------------------------------------------------------------
def resblock_tap(x_nhwc, w1, b1, w2, b2, *, relu_out):
    N, H, W, C = x_nhwc.shape
    Cres = w1.shape[0]
    rows, row_len = _build_halo_rows(x_nhwc)
    NH = N * H
    Mf = NH * row_len

    per_flat = 2 * (3 * 2 * C) + 2 * (4 * C) + 4 * (C + Cres) + 2 * C
    resident = 2 * (9 * 2 * C * Cres + 2 * Cres * C) + 4 * (C + Cres) + (1 << 20)
    TMr, TMf, n_blocks = _tap_tiling(NH, row_len, per_flat, resident)
    Mf_pad = n_blocks * TMf
    if Mf_pad != Mf:
        rows = jnp.pad(rows, ((0, 0), (0, Mf_pad - Mf), (0, 0)))

    w1t = jnp.transpose(w1, (2, 3, 1, 0)).reshape(9, C, Cres).astype(jnp.bfloat16)
    b1m = b1.reshape(1, Cres).astype(jnp.float32)
    w2m = jnp.transpose(w2, (2, 3, 1, 0)).reshape(Cres, C).astype(jnp.bfloat16)
    b2m = b2.reshape(1, C).astype(jnp.float32)

    cost = pl.CostEstimate(
        flops=2 * Mf_pad * (9 * C * Cres + Cres * C),
        transcendentals=0,
        bytes_accessed=3 * 2 * Mf_pad * C + 2 * (9 * C * Cres + Cres * C)
        + 4 * (C + Cres) + 4 * Mf_pad * C,
    )
    out = pl.pallas_call(
        functools.partial(_resblock_tap_kernel, relu_out=relu_out),
        grid=(n_blocks,),
        out_shape=jax.ShapeDtypeStruct((Mf_pad, C), jnp.float32),
        in_specs=[
            pl.BlockSpec((3, TMf, C), lambda i: (0, i, 0)),    # halo rows (tiled)
            pl.BlockSpec((9, C, Cres), lambda i: (0, 0, 0)),   # 3x3 tap weights
            pl.BlockSpec((1, Cres), lambda i: (0, 0)),         # b1
            pl.BlockSpec((Cres, C), lambda i: (0, 0)),         # 1x1 weights
            pl.BlockSpec((1, C), lambda i: (0, 0)),            # b2
        ],
        out_specs=pl.BlockSpec((TMf, C), lambda i: (i, 0)),
        compiler_params=_COMPILER_PARAMS,
        cost_estimate=cost,
    )(rows, w1t, b1m, w2m, b2m)

    return out[:Mf].reshape(N, H, row_len, C)[:, :, :W, :]


# ---------------------------------------------------------------------------
# Parameter construction (deterministic, PyTorch-style uniform init)
# ---------------------------------------------------------------------------
def init_conv(key, cout, cin, kh, kw):
    k1, k2 = jax.random.split(key)
    fan_in = cin * kh * kw
    bound = 1.0 / (fan_in ** 0.5)
    w = jax.random.uniform(k1, (cout, cin, kh, kw), jnp.float32, -bound, bound)
    b = jax.random.uniform(k2, (cout,), jnp.float32, -bound, bound)
    return w, b


def init_encoder_params(key, in_channel, hid_channel, n_res_block,
                        n_res_channel, scale_factor):
    params = {"sub": [], "res": []}
    keys = jax.random.split(key, 64)
    ki = 0
    hc = hid_channel // (2 ** scale_factor)
    params["sub"].append(init_conv(keys[ki], hc, in_channel, 4, 4)); ki += 1
    for _ in range(scale_factor):
        params["sub"].append(init_conv(keys[ki], hc * 2, hc, 4, 4)); ki += 1
        hc = hc * 2
    params["sub"].append(init_conv(keys[ki], hid_channel, hc, 3, 3)); ki += 1
    for _ in range(n_res_block):
        c1 = init_conv(keys[ki], n_res_channel, hid_channel, 3, 3); ki += 1
        c2 = init_conv(keys[ki], hid_channel, n_res_channel, 1, 1); ki += 1
        params["res"].append((c1, c2))
    return params


# ---------------------------------------------------------------------------
# Encoder forward (matches the nn.Sequential semantics of the PyTorch module)
# ---------------------------------------------------------------------------
def encoder_forward(x_nchw, params, scale_factor, n_res_block):
    x = jnp.transpose(x_nchw, (0, 2, 3, 1))            # NCHW -> NHWC
    # SubSampleBlock: 4x4/s2 convs (im2col matmul); the following nn.ReLU is
    # fused into each producing conv's epilogue.
    for i in range(scale_factor + 1):
        w, b = params["sub"][i]
        x = conv2d_im2col(x, w, b, stride=2, pad=1, relu_out=True)
    # Final 3x3/s1 conv of the subsample stack: in-kernel tap accumulation.
    # No output ReLU (the ResBlock residual needs the un-activated x) unless
    # there are no ResBlocks, in which case the Encoder's trailing ReLU fuses.
    w, b = params["sub"][-1]
    x = conv3x3_tap(x, w, b, relu_out=(n_res_block == 0))
    # ResBlocks, fully fused; the last one also fuses the Encoder's final ReLU.
    for r in range(n_res_block):
        (w1, b1), (w2, b2) = params["res"][r]
        x = resblock_tap(x, w1, b1, w2, b2, relu_out=(r == n_res_block - 1))
    return jnp.transpose(x, (0, 3, 1, 2))              # NHWC -> NCHW


# ---------------------------------------------------------------------------
# Pure-JAX reference (f32) for correctness checking
# ---------------------------------------------------------------------------
def _conv_ref(x, w, b, stride, pad):
    dn = lax.conv_dimension_numbers(x.shape, w.shape, ("NHWC", "OIHW", "NHWC"))
    y = lax.conv_general_dilated(
        x, w, (stride, stride), [(pad, pad), (pad, pad)],
        dimension_numbers=dn, precision=lax.Precision.HIGHEST)
    return y + b.reshape(1, 1, 1, -1)


def encoder_ref(x_nchw, params, scale_factor, n_res_block):
    x = jnp.transpose(x_nchw, (0, 2, 3, 1))
    for i in range(scale_factor + 1):
        w, b = params["sub"][i]
        x = jax.nn.relu(_conv_ref(x, w, b, 2, 1))
    w, b = params["sub"][-1]
    x = _conv_ref(x, w, b, 1, 1)
    for _ in range(n_res_block):
        (w1, b1), (w2, b2) = params["res"][_]
        h = _conv_ref(jax.nn.relu(x), w1, b1, 1, 1)
        h = _conv_ref(jax.nn.relu(h), w2, b2, 1, 0)
        x = x + h
    x = jax.nn.relu(x)
    return jnp.transpose(x, (0, 3, 1, 2))


if __name__ == "__main__":
    # Small config consistent with the module: in=3, hid=32, 2 res blocks,
    # res_channel=16, scale_factor=1  => H, W divisible by 4.
    in_channel, hid_channel = 3, 32
    n_res_block, n_res_channel, scale_factor = 2, 16, 1
    N, H, W = 2, 16, 16

    key = jax.random.PRNGKey(0)
    kx, kp = jax.random.split(key)
    x = jax.random.normal(kx, (N, in_channel, H, W), jnp.float32)
    params = init_encoder_params(kp, in_channel, hid_channel, n_res_block,
                                 n_res_channel, scale_factor)

    fwd = jax.jit(encoder_forward, static_argnums=(2, 3))
    out = jax.block_until_ready(fwd(x, params, scale_factor, n_res_block))

    expected = (N, hid_channel, H // (2 ** (scale_factor + 1)),
                W // (2 ** (scale_factor + 1)))
    assert out.shape == expected, (out.shape, expected)
    assert bool(jnp.all(jnp.isfinite(out)))
    assert bool(jnp.all(out >= 0.0))          # fused trailing ReLU

    ref = jax.block_until_ready(
        encoder_ref(x, params, scale_factor, n_res_block))
    err = float(jnp.max(jnp.abs(out - ref)))
    assert err < 0.08, f"max abs error vs f32 reference: {err}"

    print("KERNEL_OK")
</pallas_src>

<mosaic_0001>
module attributes {stable_mosaic.version = 11 : i64} {
  func.func @_conv_mm_kernel(%arg0: i32, %arg1: memref<64x48xbf16, #tpu.memory_space<vmem>>, %arg2: memref<48x16xbf16, #tpu.memory_space<vmem>>, %arg3: memref<1x16xf32, #tpu.memory_space<vmem>>, %arg4: memref<64x16xf32, #tpu.memory_space<vmem>>) attributes {dimension_semantics = [#tpu.dimension_semantics<parallel>], iteration_bounds = array<i64: 2>, scalar_prefetch = 0 : i64, scratch_operands = 0 : i64, tpu.core_type = #tpu.core_type<tc>, window_params = [{transform_indices = @transform_0, window_bounds = array<i64: 64, 48>}, {pipeline_mode = #tpu.pipeline_mode<synchronous>, transform_indices = @transform_1, window_bounds = array<i64: 48, 16>}, {pipeline_mode = #tpu.pipeline_mode<synchronous>, transform_indices = @transform_2, window_bounds = array<i64: 1, 16>}, {transform_indices = @transform_3, window_bounds = array<i64: 64, 16>}]} {
    %c0 = arith.constant 0 : index
    %c0_0 = arith.constant 0 : index
    %0 = vector.load %arg1[%c0, %c0_0] : memref<64x48xbf16, #tpu.memory_space<vmem>>, vector<64x48xbf16>
    %c0_1 = arith.constant 0 : index
    %c0_2 = arith.constant 0 : index
    %1 = vector.load %arg2[%c0_1, %c0_2] : memref<48x16xbf16, #tpu.memory_space<vmem>>, vector<48x16xbf16>
    %cst = arith.constant dense<0.000000e+00> : vector<64x16xf32>
    %2 = tpu.matmul %0, %1, %cst {dimension_numbers = #tpu.dot_dimension_numbers<[1], [0], [0], [1], [0, 0, 1, 1], [], []>} : vector<64x48xbf16>, vector<48x16xbf16>, vector<64x16xf32> -> vector<64x16xf32>
    %c0_3 = arith.constant 0 : index
    %c0_4 = arith.constant 0 : index
    %3 = vector.load %arg3[%c0_3, %c0_4] : memref<1x16xf32, #tpu.memory_space<vmem>>, vector<1x16xf32>
    %4 = vector.broadcast %3 : vector<1x16xf32> to vector<64x16xf32>
    %5 = arith.addf %2, %4 : vector<64x16xf32>
    %cst_5 = arith.constant 0.000000e+00 : f32
    %6 = vector.broadcast %cst_5 : f32 to vector<64x16xf32>
    %7 = arith.maximumf %5, %6 : vector<64x16xf32>
    %c0_6 = arith.constant 0 : index
    %c0_7 = arith.constant 0 : index
    %8 = vector.load %arg4[%c0_6, %c0_7] : memref<64x16xf32, #tpu.memory_space<vmem>>, vector<64x16xf32>
    tpu.vector_store %arg4[%c0_6, %c0_7], %7 {strides = array<i32>} : memref<64x16xf32, #tpu.memory_space<vmem>>, vector<64x16xf32>,
    return
  }
  func.func @transform_0(%arg0: i32) -> (i32, i32) {
    %c0_i32 = arith.constant 0 : i32
    %c0_i32_0 = arith.constant 0 : i32
    return %arg0, %c0_i32 : i32, i32
  }
  func.func @transform_1(%arg0: i32) -> (i32, i32) {
    %c0_i32 = arith.constant 0 : i32
    %c0_i32_0 = arith.constant 0 : i32
    %c0_i32_1 = arith.constant 0 : i32
    return %c0_i32, %c0_i32_0 : i32, i32
  }
  func.func @transform_2(%arg0: i32) -> (i32, i32) {
    %c0_i32 = arith.constant 0 : i32
    %c0_i32_0 = arith.constant 0 : i32
    %c0_i32_1 = arith.constant 0 : i32
    return %c0_i32, %c0_i32_0 : i32, i32
  }
  func.func @transform_3(%arg0: i32) -> (i32, i32) {
    %c0_i32 = arith.constant 0 : i32
    %c0_i32_0 = arith.constant 0 : i32
    return %arg0, %c0_i32 : i32, i32
  }
}

module attributes {stable_mosaic.version = 11 : i64} {
  func.func @_conv_mm_kernel(%arg0: i32, %arg1: memref<16x256xbf16, #tpu.memory_space<vmem>>, %arg2: memref<256x32xbf16, #tpu.memory_space<vmem>>, %arg3: memref<1x32xf32, #tpu.memory_space<vmem>>, %arg4: memref<16x32xf32, #tpu.memory_space<vmem>>) attributes {dimension_semantics = [#tpu.dimension_semantics<parallel>], iteration_bounds = array<i64: 2>, scalar_prefetch = 0 : i64, scratch_operands = 0 : i64, tpu.core_type = #tpu.core_type<tc>, window_params = [{transform_indices = @transform_0, window_bounds = array<i64: 16, 256>}, {pipeline_mode = #tpu.pipeline_mode<synchronous>, transform_indices = @transform_1, window_bounds = array<i64: 256, 32>}, {pipeline_mode = #tpu.pipeline_mode<synchronous>, transform_indices = @transform_2, window_bounds = array<i64: 1, 32>}, {transform_indices = @transform_3, window_bounds = array<i64: 16, 32>}]} {
    %c0 = arith.constant 0 : index
    %c0_0 = arith.constant 0 : index
    %0 = vector.load %arg1[%c0, %c0_0] : memref<16x256xbf16, #tpu.memory_space<vmem>>, vector<16x256xbf16>
    %c0_1 = arith.constant 0 : index
    %c0_2 = arith.constant 0 : index
    %1 = vector.load %arg2[%c0_1, %c0_2] : memref<256x32xbf16, #tpu.memory_space<vmem>>, vector<256x32xbf16>
    %cst = arith.constant dense<0.000000e+00> : vector<16x32xf32>
    %2 = tpu.matmul %0, %1, %cst {dimension_numbers = #tpu.dot_dimension_numbers<[1], [0], [0], [1], [0, 0, 1, 1], [], []>} : vector<16x256xbf16>, vector<256x32xbf16>, vector<16x32xf32> -> vector<16x32xf32>
    %c0_3 = arith.constant 0 : index
    %c0_4 = arith.constant 0 : index
    %3 = vector.load %arg3[%c0_3, %c0_4] : memref<1x32xf32, #tpu.memory_space<vmem>>, vector<1x32xf32>
    %4 = vector.broadcast %3 : vector<1x32xf32> to vector<16x32xf32>
    %5 = arith.addf %2, %4 : vector<16x32xf32>
    %cst_5 = arith.constant 0.000000e+00 : f32
    %6 = vector.broadcast %cst_5 : f32 to vector<16x32xf32>
    %7 = arith.maximumf %5, %6 : vector<16x32xf32>
    %c0_6 = arith.constant 0 : index
    %c0_7 = arith.constant 0 : index
    %8 = vector.load %arg4[%c0_6, %c0_7] : memref<16x32xf32, #tpu.memory_space<vmem>>, vector<16x32xf32>
    tpu.vector_store %arg4[%c0_6, %c0_7], %7 {strides = array<i32>} : memref<16x32xf32, #tpu.memory_space<vmem>>, vector<16x32xf32>,
    return
  }
  func.func @transform_0(%arg0: i32) -> (i32, i32) {
    %c0_i32 = arith.constant 0 : i32
    %c0_i32_0 = arith.constant 0 : i32
    return %arg0, %c0_i32 : i32, i32
  }
  func.func @transform_1(%arg0: i32) -> (i32, i32) {
    %c0_i32 = arith.constant 0 : i32
    %c0_i32_0 = arith.constant 0 : i32
    %c0_i32_1 = arith.constant 0 : i32
    return %c0_i32, %c0_i32_0 : i32, i32
  }
  func.func @transform_2(%arg0: i32) -> (i32, i32) {
    %c0_i32 = arith.constant 0 : i32
    %c0_i32_0 = arith.constant 0 : i32
    %c0_i32_1 = arith.constant 0 : i32
    return %c0_i32, %c0_i32_0 : i32, i32
  }
  func.func @transform_3(%arg0: i32) -> (i32, i32) {
    %c0_i32 = arith.constant 0 : i32
    %c0_i32_0 = arith.constant 0 : i32
    return %arg0, %c0_i32 : i32, i32
  }
}

module attributes {stable_mosaic.version = 11 : i64} {
  func.func @_conv3x3_tap_kernel(%arg0: i32, %arg1: memref<3x48x32xbf16, #tpu.memory_space<vmem>>, %arg2: memref<9x32x32xbf16, #tpu.memory_space<vmem>>, %arg3: memref<1x32xf32, #tpu.memory_space<vmem>>, %arg4: memref<48x32xf32, #tpu.memory_space<vmem>>) attributes {dimension_semantics = [#tpu.dimension_semantics<parallel>], iteration_bounds = array<i64: 1>, scalar_prefetch = 0 : i64, scratch_operands = 0 : i64, tpu.core_type = #tpu.core_type<tc>, window_params = [{transform_indices = @transform_0, window_bounds = array<i64: 3, 48, 32>}, {pipeline_mode = #tpu.pipeline_mode<synchronous>, transform_indices = @transform_1, window_bounds = array<i64: 9, 32, 32>}, {pipeline_mode = #tpu.pipeline_mode<synchronous>, transform_indices = @transform_2, window_bounds = array<i64: 1, 32>}, {transform_indices = @transform_3, window_bounds = array<i64: 48, 32>}]} {
    %cst = arith.constant 0.000000e+00 : f32
    %0 = vector.broadcast %cst : f32 to vector<48x32xf32>
    %c0 = arith.constant 0 : index
    %c0_0 = arith.constant 0 : index
    %c0_1 = arith.constant 0 : index
    %1 = vector.load %arg1[%c0, %c0_0, %c0_1] : memref<3x48x32xbf16, #tpu.memory_space<vmem>>, vector<1x48x32xbf16>
    %2 = vector.shape_cast %1 : vector<1x48x32xbf16> to vector<48x32xbf16>
    %c0_2 = arith.constant 0 : index
    %c0_3 = arith.constant 0 : index
    %c0_4 = arith.constant 0 : index
    %3 = vector.load %arg2[%c0_2, %c0_3, %c0_4] : memref<9x32x32xbf16, #tpu.memory_space<vmem>>, vector<1x32x32xbf16>
    %4 = vector.shape_cast %3 : vector<1x32x32xbf16> to vector<32x32xbf16>
    %cst_5 = arith.constant dense<0.000000e+00> : vector<48x32xf32>
    %5 = tpu.matmul %2, %4, %cst_5 {dimension_numbers = #tpu.dot_dimension_numbers<[1], [0], [0], [1], [0, 0, 1, 1], [], []>} : vector<48x32xbf16>, vector<32x32xbf16>, vector<48x32xf32> -> vector<48x32xf32>
    %6 = arith.addf %0, %5 : vector<48x32xf32>
    %c1 = arith.constant 1 : index
    %c0_6 = arith.constant 0 : index
    %c0_7 = arith.constant 0 : index
    %7 = vector.load %arg2[%c1, %c0_6, %c0_7] : memref<9x32x32xbf16, #tpu.memory_space<vmem>>, vector<1x32x32xbf16>
    %8 = vector.shape_cast %7 : vector<1x32x32xbf16> to vector<32x32xbf16>
    %cst_8 = arith.constant dense<0.000000e+00> : vector<48x32xf32>
    %9 = tpu.matmul %2, %8, %cst_8 {dimension_numbers = #tpu.dot_dimension_numbers<[1], [0], [0], [1], [0, 0, 1, 1], [], []>} : vector<48x32xbf16>, vector<32x32xbf16>, vector<48x32xf32> -> vector<48x32xf32>
    %cst_9 = arith.constant 0.000000e+00 : f32
    %10 = vector.broadcast %cst_9 : f32 to vector<1x32xf32>
    %11 = vector.extract_strided_slice %9 {offsets = [1, 0], sizes = [47, 32], strides = [1, 1]} : vector<48x32xf32> to vector<47x32xf32>
    %12 = tpu.concatenate %11, %10 in 0 : vector<47x32xf32>, vector<1x32xf32> -> vector<48x32xf32>
    %13 = arith.addf %6, %12 : vector<48x32xf32>
    %c2 = arith.constant 2 : index
    %c0_10 = arith.constant 0 : index
    %c0_11 = arith.constant 0 : index
    %14 = vector.load %arg2[%c2, %c0_10, %c0_11] : memref<9x32x32xbf16, #tpu.memory_space<vmem>>, vector<1x32x32xbf16>
    %15 = vector.shape_cast %14 : vector<1x32x32xbf16> to vector<32x32xbf16>
    %cst_12 = arith.constant dense<0.000000e+00> : vector<48x32xf32>
    %16 = tpu.matmul %2, %15, %cst_12 {dimension_numbers = #tpu.dot_dimension_numbers<[1], [0], [0], [1], [0, 0, 1, 1], [], []>} : vector<48x32xbf16>, vector<32x32xbf16>, vector<48x32xf32> -> vector<48x32xf32>
    %cst_13 = arith.constant 0.000000e+00 : f32
    %17 = vector.broadcast %cst_13 : f32 to vector<2x32xf32>
    %18 = vector.extract_strided_slice %16 {offsets = [2, 0], sizes = [46, 32], strides = [1, 1]} : vector<48x32xf32> to vector<46x32xf32>
    %19 = tpu.concatenate %18, %17 in 0 : vector<46x32xf32>, vector<2x32xf32> -> vector<48x32xf32>
    %20 = arith.addf %13, %19 : vector<48x32xf32>
    %c1_14 = arith.constant 1 : index
    %c0_15 = arith.constant 0 : index
    %c0_16 = arith.constant 0 : index
    %21 = vector.load %arg1[%c1_14, %c0_15, %c0_16] : memref<3x48x32xbf16, #tpu.memory_space<vmem>>, vector<1x48x32xbf16>
    %22 = vector.shape_cast %21 : vector<1x48x32xbf16> to vector<48x32xbf16>
    %c3 = arith.constant 3 : index
    %c0_17 = arith.constant 0 : index
    %c0_18 = arith.constant 0 : index
    %23 = vector.load %arg2[%c3, %c0_17, %c0_18] : memref<9x32x32xbf16, #tpu.memory_space<vmem>>, vector<1x32x32xbf16>
    %24 = vector.shape_cast %23 : vector<1x32x32xbf16> to vector<32x32xbf16>
    %cst_19 = arith.constant dense<0.000000e+00> : vector<48x32xf32>
    %25 = tpu.matmul %22, %24, %cst_19 {dimension_numbers = #tpu.dot_dimension_numbers<[1], [0], [0], [1], [0, 0, 1, 1], [], []>} : vector<48x32xbf16>, vector<32x32xbf16>, vector<48x32xf32> -> vector<48x32xf32>
    %26 = arith.addf %20, %25 : vector<48x32xf32>
    %c4 = arith.constant 4 : index
    %c0_20 = arith.constant 0 : index
    %c0_21 = arith.constant 0 : index
    %27 = vector.load %arg2[%c4, %c0_20, %c0_21] : memref<9x32x32xbf16, #tpu.memory_space<vmem>>, vector<1x32x32xbf16>
    %28 = vector.shape_cast %27 : vector<1x32x32xbf16> to vector<32x32xbf16>
    %cst_22 = arith.constant dense<0.000000e+00> : vector<48x32xf32>
    %29 = tpu.matmul %22, %28, %cst_22 {dimension_numbers = #tpu.dot_dimension_numbers<[1], [0], [0], [1], [0, 0, 1, 1], [], []>} : vector<48x32xbf16>, vector<32x32xbf16>, vector<48x32xf32> -> vector<48x32xf32>
    %cst_23 = arith.constant 0.000000e+00 : f32
    %30 = vector.broadcast %cst_23 : f32 to vector<1x32xf32>
    %31 = vector.extract_strided_slice %29 {offsets = [1, 0], sizes = [47, 32], strides = [1, 1]} : vector<48x32xf32> to vector<47x32xf32>
    %32 = tpu.concatenate %31, %30 in 0 : vector<47x32xf32>, vector<1x32xf32> -> vector<48x32xf32>
    %33 = arith.addf %26, %32 : vector<48x32xf32>
    %c5 = arith.constant 5 : index
    %c0_24 = arith.constant 0 : index
    %c0_25 = arith.constant 0 : index
    %34 = vector.load %arg2[%c5, %c0_24, %c0_25] : memref<9x32x32xbf16, #tpu.memory_space<vmem>>, vector<1x32x32xbf16>
    %35 = vector.shape_cast %34 : vector<1x32x32xbf16> to vector<32x32xbf16>
    %cst_26 = arith.constant dense<0.000000e+00> : vector<48x32xf32>
    %36 = tpu.matmul %22, %35, %cst_26 {dimension_numbers = #tpu.dot_dimension_numbers<[1], [0], [0], [1], [0, 0, 1, 1], [], []>} : vector<48x32xbf16>, vector<32x32xbf16>, vector<48x32xf32> -> vector<48x32xf32>
    %cst_27 = arith.constant 0.000000e+00 : f32
    %37 = vector.broadcast %cst_27 : f32 to vector<2x32xf32>
    %38 = vector.extract_strided_slice %36 {offsets = [2, 0], sizes = [46, 32], strides = [1, 1]} : vector<48x32xf32> to vector<46x32xf32>
    %39 = tpu.concatenate %38, %37 in 0 : vector<46x32xf32>, vector<2x32xf32> -> vector<48x32xf32>
    %40 = arith.addf %33, %39 : vector<48x32xf32>
    %c2_28 = arith.constant 2 : index
    %c0_29 = arith.constant 0 : index
    %c0_30 = arith.constant 0 : index
    %41 = vector.load %arg1[%c2_28, %c0_29, %c0_30] : memref<3x48x32xbf16, #tpu.memory_space<vmem>>, vector<1x48x32xbf16>
    %42 = vector.shape_cast %41 : vector<1x48x32xbf16> to vector<48x32xbf16>
    %c6 = arith.constant 6 : index
    %c0_31 = arith.constant 0 : index
    %c0_32 = arith.constant 0 : index
    %43 = vector.load %arg2[%c6, %c0_31, %c0_32] : memref<9x32x32xbf16, #tpu.memory_space<vmem>>, vector<1x32x32xbf16>
    %44 = vector.shape_cast %43 : vector<1x32x32xbf16> to vector<32x32xbf16>
    %cst_33 = arith.constant dense<0.000000e+00> : vector<48x32xf32>
    %45 = tpu.matmul %42, %44, %cst_33 {dimension_numbers = #tpu.dot_dimension_numbers<[1], [0], [0], [1], [0, 0, 1, 1], [], []>} : vector<48x32xbf16>, vector<32x32xbf16>, vector<48x32xf32> -> vector<48x32xf32>
    %46 = arith.addf %40, %45 : vector<48x32xf32>
    %c7 = arith.constant 7 : index
    %c0_34 = arith.constant 0 : index
    %c0_35 = arith.constant 0 : index
    %47 = vector.load %arg2[%c7, %c0_34, %c0_35] : memref<9x32x32xbf16, #tpu.memory_space<vmem>>, vector<1x32x32xbf16>
    %48 = vector.shape_cast %47 : vector<1x32x32xbf16> to vector<32x32xbf16>
    %cst_36 = arith.constant dense<0.000000e+00> : vector<48x32xf32>
    %49 = tpu.matmul %42, %48, %cst_36 {dimension_numbers = #tpu.dot_dimension_numbers<[1], [0], [0], [1], [0, 0, 1, 1], [], []>} : vector<48x32xbf16>, vector<32x32xbf16>, vector<48x32xf32> -> vector<48x32xf32>
    %cst_37 = arith.constant 0.000000e+00 : f32
    %50 = vector.broadcast %cst_37 : f32 to vector<1x32xf32>
    %51 = vector.extract_strided_slice %49 {offsets = [1, 0], sizes = [47, 32], strides = [1, 1]} : vector<48x32xf32> to vector<47x32xf32>
    %52 = tpu.concatenate %51, %50 in 0 : vector<47x32xf32>, vector<1x32xf32> -> vector<48x32xf32>
    %53 = arith.addf %46, %52 : vector<48x32xf32>
    %c8 = arith.constant 8 : index
    %c0_38 = arith.constant 0 : index
    %c0_39 = arith.constant 0 : index
    %54 = vector.load %arg2[%c8, %c0_38, %c0_39] : memref<9x32x32xbf16, #tpu.memory_space<vmem>>, vector<1x32x32xbf16>
    %55 = vector.shape_cast %54 : vector<1x32x32xbf16> to vector<32x32xbf16>
    %cst_40 = arith.constant dense<0.000000e+00> : vector<48x32xf32>
    %56 = tpu.matmul %42, %55, %cst_40 {dimension_numbers = #tpu.dot_dimension_numbers<[1], [0], [0], [1], [0, 0, 1, 1], [], []>} : vector<48x32xbf16>, vector<32x32xbf16>, vector<48x32xf32> -> vector<48x32xf32>
    %cst_41 = arith.constant 0.000000e+00 : f32
    %57 = vector.broadcast %cst_41 : f32 to vector<2x32xf32>
    %58 = vector.extract_strided_slice %56 {offsets = [2, 0], sizes = [46, 32], strides = [1, 1]} : vector<48x32xf32> to vector<46x32xf32>
    %59 = tpu.concatenate %58, %57 in 0 : vector<46x32xf32>, vector<2x32xf32> -> vector<48x32xf32>
    %60 = arith.addf %53, %59 : vector<48x32xf32>
    %c0_42 = arith.constant 0 : index
    %c0_43 = arith.constant 0 : index
    %61 = vector.load %arg3[%c0_42, %c0_43] : memref<1x32xf32, #tpu.memory_space<vmem>>, vector<1x32xf32>
    %62 = vector.broadcast %61 : vector<1x32xf32> to vector<48x32xf32>
    %63 = arith.addf %60, %62 : vector<48x32xf32>
    %c0_44 = arith.constant 0 : index
    %c0_45 = arith.constant 0 : index
    %64 = vector.load %arg4[%c0_44, %c0_45] : memref<48x32xf32, #tpu.memory_space<vmem>>, vector<48x32xf32>
    tpu.vector_store %arg4[%c0_44, %c0_45], %63 {strides = array<i32>} : memref<48x32xf32, #tpu.memory_space<vmem>>, vector<48x32xf32>,
    return
  }
  func.func @transform_0(%arg0: i32) -> (i32, i32, i32) {
    %c0_i32 = arith.constant 0 : i32
    %c0_i32_0 = arith.constant 0 : i32
    %c0_i32_1 = arith.constant 0 : i32
    return %c0_i32, %arg0, %c0_i32_0 : i32, i32, i32
  }
  func.func @transform_1(%arg0: i32) -> (i32, i32, i32) {
    %c0_i32 = arith.constant 0 : i32
    %c0_i32_0 = arith.constant 0 : i32
    %c0_i32_1 = arith.constant 0 : i32
    %c0_i32_2 = arith.constant 0 : i32
    return %c0_i32, %c0_i32_0, %c0_i32_1 : i32, i32, i32
  }
  func.func @transform_2(%arg0: i32) -> (i32, i32) {
    %c0_i32 = arith.constant 0 : i32
    %c0_i32_0 = arith.constant 0 : i32
    %c0_i32_1 = arith.constant 0 : i32
    return %c0_i32, %c0_i32_0 : i32, i32
  }
  func.func @transform_3(%arg0: i32) -> (i32, i32) {
    %c0_i32 = arith.constant 0 : i32
    %c0_i32_0 = arith.constant 0 : i32
    return %arg0, %c0_i32 : i32, i32
  }
}

module attributes {stable_mosaic.version = 11 : i64} {
  func.func @_resblock_tap_kernel(%arg0: i32, %arg1: memref<3x48x32xbf16, #tpu.memory_space<vmem>>, %arg2: memref<9x32x16xbf16, #tpu.memory_space<vmem>>, %arg3: memref<1x16xf32, #tpu.memory_space<vmem>>, %arg4: memref<16x32xbf16, #tpu.memory_space<vmem>>, %arg5: memref<1x32xf32, #tpu.memory_space<vmem>>, %arg6: memref<48x32xf32, #tpu.memory_space<vmem>>) attributes {dimension_semantics = [#tpu.dimension_semantics<parallel>], iteration_bounds = array<i64: 1>, scalar_prefetch = 0 : i64, scratch_operands = 0 : i64, tpu.core_type = #tpu.core_type<tc>, window_params = [{transform_indices = @transform_0, window_bounds = array<i64: 3, 48, 32>}, {pipeline_mode = #tpu.pipeline_mode<synchronous>, transform_indices = @transform_1, window_bounds = array<i64: 9, 32, 16>}, {pipeline_mode = #tpu.pipeline_mode<synchronous>, transform_indices = @transform_2, window_bounds = array<i64: 1, 16>}, {pipeline_mode = #tpu.pipeline_mode<synchronous>, transform_indices = @transform_3, window_bounds = array<i64: 16, 32>}, {pipeline_mode = #tpu.pipeline_mode<synchronous>, transform_indices = @transform_4, window_bounds = array<i64: 1, 32>}, {transform_indices = @transform_5, window_bounds = array<i64: 48, 32>}]} {
    %cst = arith.constant 0.000000e+00 : f32
    %0 = vector.broadcast %cst : f32 to vector<48x16xf32>
    %c0 = arith.constant 0 : index
    %c0_0 = arith.constant 0 : index
    %c0_1 = arith.constant 0 : index
    %1 = vector.load %arg1[%c0, %c0_0, %c0_1] : memref<3x48x32xbf16, #tpu.memory_space<vmem>>, vector<1x48x32xbf16>
    %2 = vector.shape_cast %1 : vector<1x48x32xbf16> to vector<48x32xbf16>
    %cst_2 = arith.constant 0.000000e+00 : bf16
    %3 = vector.broadcast %cst_2 : bf16 to vector<48x32xbf16>
    %4 = arith.maximumf %2, %3 : vector<48x32xbf16>
    %c0_3 = arith.constant 0 : index
    %c0_4 = arith.constant 0 : index
    %c0_5 = arith.constant 0 : index
    %5 = vector.load %arg2[%c0_3, %c0_4, %c0_5] : memref<9x32x16xbf16, #tpu.memory_space<vmem>>, vector<1x32x16xbf16>
    %6 = vector.shape_cast %5 : vector<1x32x16xbf16> to vector<32x16xbf16>
    %cst_6 = arith.constant dense<0.000000e+00> : vector<48x16xf32>
    %7 = tpu.matmul %4, %6, %cst_6 {dimension_numbers = #tpu.dot_dimension_numbers<[1], [0], [0], [1], [0, 0, 1, 1], [], []>} : vector<48x32xbf16>, vector<32x16xbf16>, vector<48x16xf32> -> vector<48x16xf32>
    %8 = arith.addf %0, %7 : vector<48x16xf32>
    %c1 = arith.constant 1 : index
    %c0_7 = arith.constant 0 : index
    %c0_8 = arith.constant 0 : index
    %9 = vector.load %arg2[%c1, %c0_7, %c0_8] : memref<9x32x16xbf16, #tpu.memory_space<vmem>>, vector<1x32x16xbf16>
    %10 = vector.shape_cast %9 : vector<1x32x16xbf16> to vector<32x16xbf16>
    %cst_9 = arith.constant dense<0.000000e+00> : vector<48x16xf32>
    %11 = tpu.matmul %4, %10, %cst_9 {dimension_numbers = #tpu.dot_dimension_numbers<[1], [0], [0], [1], [0, 0, 1, 1], [], []>} : vector<48x32xbf16>, vector<32x16xbf16>, vector<48x16xf32> -> vector<48x16xf32>
    %cst_10 = arith.constant 0.000000e+00 : f32
    %12 = vector.broadcast %cst_10 : f32 to vector<1x16xf32>
    %13 = vector.extract_strided_slice %11 {offsets = [1, 0], sizes = [47, 16], strides = [1, 1]} : vector<48x16xf32> to vector<47x16xf32>
    %14 = tpu.concatenate %13, %12 in 0 : vector<47x16xf32>, vector<1x16xf32> -> vector<48x16xf32>
    %15 = arith.addf %8, %14 : vector<48x16xf32>
    %c2 = arith.constant 2 : index
    %c0_11 = arith.constant 0 : index
    %c0_12 = arith.constant 0 : index
    %16 = vector.load %arg2[%c2, %c0_11, %c0_12] : memref<9x32x16xbf16, #tpu.memory_space<vmem>>, vector<1x32x16xbf16>
    %17 = vector.shape_cast %16 : vector<1x32x16xbf16> to vector<32x16xbf16>
    %cst_13 = arith.constant dense<0.000000e+00> : vector<48x16xf32>
    %18 = tpu.matmul %4, %17, %cst_13 {dimension_numbers = #tpu.dot_dimension_numbers<[1], [0], [0], [1], [0, 0, 1, 1], [], []>} : vector<48x32xbf16>, vector<32x16xbf16>, vector<48x16xf32> -> vector<48x16xf32>
    %cst_14 = arith.constant 0.000000e+00 : f32
    %19 = vector.broadcast %cst_14 : f32 to vector<2x16xf32>
    %20 = vector.extract_strided_slice %18 {offsets = [2, 0], sizes = [46, 16], strides = [1, 1]} : vector<48x16xf32> to vector<46x16xf32>
    %21 = tpu.concatenate %20, %19 in 0 : vector<46x16xf32>, vector<2x16xf32> -> vector<48x16xf32>
    %22 = arith.addf %15, %21 : vector<48x16xf32>
    %c1_15 = arith.constant 1 : index
    %c0_16 = arith.constant 0 : index
    %c0_17 = arith.constant 0 : index
    %23 = vector.load %arg1[%c1_15, %c0_16, %c0_17] : memref<3x48x32xbf16, #tpu.memory_space<vmem>>, vector<1x48x32xbf16>
    %24 = vector.shape_cast %23 : vector<1x48x32xbf16> to vector<48x32xbf16>
    %cst_18 = arith.constant 0.000000e+00 : bf16
    %25 = vector.broadcast %cst_18 : bf16 to vector<48x32xbf16>
    %26 = arith.maximumf %24, %25 : vector<48x32xbf16>
    %c3 = arith.constant 3 : index
    %c0_19 = arith.constant 0 : index
    %c0_20 = arith.constant 0 : index
    %27 = vector.load %arg2[%c3, %c0_19, %c0_20] : memref<9x32x16xbf16, #tpu.memory_space<vmem>>, vector<1x32x16xbf16>
    %28 = vector.shape_cast %27 : vector<1x32x16xbf16> to vector<32x16xbf16>
    %cst_21 = arith.constant dense<0.000000e+00> : vector<48x16xf32>
    %29 = tpu.matmul %26, %28, %cst_21 {dimension_numbers = #tpu.dot_dimension_numbers<[1], [0], [0], [1], [0, 0, 1, 1], [], []>} : vector<48x32xbf16>, vector<32x16xbf16>, vector<48x16xf32> -> vector<48x16xf32>
    %30 = arith.addf %22, %29 : vector<48x16xf32>
    %c4 = arith.constant 4 : index
    %c0_22 = arith.constant 0 : index
    %c0_23 = arith.constant 0 : index
    %31 = vector.load %arg2[%c4, %c0_22, %c0_23] : memref<9x32x16xbf16, #tpu.memory_space<vmem>>, vector<1x32x16xbf16>
    %32 = vector.shape_cast %31 : vector<1x32x16xbf16> to vector<32x16xbf16>
    %cst_24 = arith.constant dense<0.000000e+00> : vector<48x16xf32>
    %33 = tpu.matmul %26, %32, %cst_24 {dimension_numbers = #tpu.dot_dimension_numbers<[1], [0], [0], [1], [0, 0, 1, 1], [], []>} : vector<48x32xbf16>, vector<32x16xbf16>, vector<48x16xf32> -> vector<48x16xf32>
    %cst_25 = arith.constant 0.000000e+00 : f32
    %34 = vector.broadcast %cst_25 : f32 to vector<1x16xf32>
    %35 = vector.extract_strided_slice %33 {offsets = [1, 0], sizes = [47, 16], strides = [1, 1]} : vector<48x16xf32> to vector<47x16xf32>
    %36 = tpu.concatenate %35, %34 in 0 : vector<47x16xf32>, vector<1x16xf32> -> vector<48x16xf32>
    %37 = arith.addf %30, %36 : vector<48x16xf32>
    %c5 = arith.constant 5 : index
    %c0_26 = arith.constant 0 : index
    %c0_27 = arith.constant 0 : index
    %38 = vector.load %arg2[%c5, %c0_26, %c0_27] : memref<9x32x16xbf16, #tpu.memory_space<vmem>>, vector<1x32x16xbf16>
    %39 = vector.shape_cast %38 : vector<1x32x16xbf16> to vector<32x16xbf16>
    %cst_28 = arith.constant dense<0.000000e+00> : vector<48x16xf32>
    %40 = tpu.matmul %26, %39, %cst_28 {dimension_numbers = #tpu.dot_dimension_numbers<[1], [0], [0], [1], [0, 0, 1, 1], [], []>} : vector<48x32xbf16>, vector<32x16xbf16>, vector<48x16xf32> -> vector<48x16xf32>
    %cst_29 = arith.constant 0.000000e+00 : f32
    %41 = vector.broadcast %cst_29 : f32 to vector<2x16xf32>
    %42 = vector.extract_strided_slice %40 {offsets = [2, 0], sizes = [46, 16], strides = [1, 1]} : vector<48x16xf32> to vector<46x16xf32>
    %43 = tpu.concatenate %42, %41 in 0 : vector<46x16xf32>, vector<2x16xf32> -> vector<48x16xf32>
    %44 = arith.addf %37, %43 : vector<48x16xf32>
    %c2_30 = arith.constant 2 : index
    %c0_31 = arith.constant 0 : index
    %c0_32 = arith.constant 0 : index
    %45 = vector.load %arg1[%c2_30, %c0_31, %c0_32] : memref<3x48x32xbf16, #tpu.memory_space<vmem>>, vector<1x48x32xbf16>
    %46 = vector.shape_cast %45 : vector<1x48x32xbf16> to vector<48x32xbf16>
    %cst_33 = arith.constant 0.000000e+00 : bf16
    %47 = vector.broadcast %cst_33 : bf16 to vector<48x32xbf16>
    %48 = arith.maximumf %46, %47 : vector<48x32xbf16>
    %c6 = arith.constant 6 : index
    %c0_34 = arith.constant 0 : index
    %c0_35 = arith.constant 0 : index
    %49 = vector.load %arg2[%c6, %c0_34, %c0_35] : memref<9x32x16xbf16, #tpu.memory_space<vmem>>, vector<1x32x16xbf16>
    %50 = vector.shape_cast %49 : vector<1x32x16xbf16> to vector<32x16xbf16>
    %cst_36 = arith.constant dense<0.000000e+00> : vector<48x16xf32>
    %51 = tpu.matmul %48, %50, %cst_36 {dimension_numbers = #tpu.dot_dimension_numbers<[1], [0], [0], [1], [0, 0, 1, 1], [], []>} : vector<48x32xbf16>, vector<32x16xbf16>, vector<48x16xf32> -> vector<48x16xf32>
    %52 = arith.addf %44, %51 : vector<48x16xf32>
    %c7 = arith.constant 7 : index
    %c0_37 = arith.constant 0 : index
    %c0_38 = arith.constant 0 : index
    %53 = vector.load %arg2[%c7, %c0_37, %c0_38] : memref<9x32x16xbf16, #tpu.memory_space<vmem>>, vector<1x32x16xbf16>
    %54 = vector.shape_cast %53 : vector<1x32x16xbf16> to vector<32x16xbf16>
    %cst_39 = arith.constant dense<0.000000e+00> : vector<48x16xf32>
    %55 = tpu.matmul %48, %54, %cst_39 {dimension_numbers = #tpu.dot_dimension_numbers<[1], [0], [0], [1], [0, 0, 1, 1], [], []>} : vector<48x32xbf16>, vector<32x16xbf16>, vector<48x16xf32> -> vector<48x16xf32>
    %cst_40 = arith.constant 0.000000e+00 : f32
    %56 = vector.broadcast %cst_40 : f32 to vector<1x16xf32>
    %57 = vector.extract_strided_slice %55 {offsets = [1, 0], sizes = [47, 16], strides = [1, 1]} : vector<48x16xf32> to vector<47x16xf32>
    %58 = tpu.concatenate %57, %56 in 0 : vector<47x16xf32>, vector<1x16xf32> -> vector<48x16xf32>
    %59 = arith.addf %52, %58 : vector<48x16xf32>
    %c8 = arith.constant 8 : index
    %c0_41 = arith.constant 0 : index
    %c0_42 = arith.constant 0 : index
    %60 = vector.load %arg2[%c8, %c0_41, %c0_42] : memref<9x32x16xbf16, #tpu.memory_space<vmem>>, vector<1x32x16xbf16>
    %61 = vector.shape_cast %60 : vector<1x32x16xbf16> to vector<32x16xbf16>
    %cst_43 = arith.constant dense<0.000000e+00> : vector<48x16xf32>
    %62 = tpu.matmul %48, %61, %cst_43 {dimension_numbers = #tpu.dot_dimension_numbers<[1], [0], [0], [1], [0, 0, 1, 1], [], []>} : vector<48x32xbf16>, vector<32x16xbf16>, vector<48x16xf32> -> vector<48x16xf32>
    %cst_44 = arith.constant 0.000000e+00 : f32
    %63 = vector.broadcast %cst_44 : f32 to vector<2x16xf32>
    %64 = vector.extract_strided_slice %62 {offsets = [2, 0], sizes = [46, 16], strides = [1, 1]} : vector<48x16xf32> to vector<46x16xf32>
    %65 = tpu.concatenate %64, %63 in 0 : vector<46x16xf32>, vector<2x16xf32> -> vector<48x16xf32>
    %66 = arith.addf %59, %65 : vector<48x16xf32>
    %c0_45 = arith.constant 0 : index
    %c0_46 = arith.constant 0 : index
    %67 = vector.load %arg3[%c0_45, %c0_46] : memref<1x16xf32, #tpu.memory_space<vmem>>, vector<1x16xf32>
    %68 = vector.broadcast %67 : vector<1x16xf32> to vector<48x16xf32>
    %69 = arith.addf %66, %68 : vector<48x16xf32>
    %cst_47 = arith.constant 0.000000e+00 : f32
    %70 = vector.broadcast %cst_47 : f32 to vector<48x16xf32>
    %71 = arith.maximumf %69, %70 : vector<48x16xf32>
    %72 = arith.truncf %71 : vector<48x16xf32> to vector<48x16xbf16>
    %c0_48 = arith.constant 0 : index
    %c0_49 = arith.constant 0 : index
    %73 = vector.load %arg4[%c0_48, %c0_49] : memref<16x32xbf16, #tpu.memory_space<vmem>>, vector<16x32xbf16>
    %cst_50 = arith.constant dense<0.000000e+00> : vector<48x32xf32>
    %74 = tpu.matmul %72, %73, %cst_50 {dimension_numbers = #tpu.dot_dimension_numbers<[1], [0], [0], [1], [0, 0, 1, 1], [], []>} : vector<48x16xbf16>, vector<16x32xbf16>, vector<48x32xf32> -> vector<48x32xf32>
    %c0_51 = arith.constant 0 : index
    %c0_52 = arith.constant 0 : index
    %75 = vector.load %arg5[%c0_51, %c0_52] : memref<1x32xf32, #tpu.memory_space<vmem>>, vector<1x32xf32>
    %76 = vector.broadcast %75 : vector<1x32xf32> to vector<48x32xf32>
    %77 = arith.addf %74, %76 : vector<48x32xf32>
    %c1_53 = arith.constant 1 : index
    %c0_54 = arith.constant 0 : index
    %c0_55 = arith.constant 0 : index
    %78 = vector.load %arg1[%c1_53, %c0_54, %c0_55] : memref<3x48x32xbf16, #tpu.memory_space<vmem>>, vector<1x48x32xbf16>
    %79 = vector.shape_cast %78 : vector<1x48x32xbf16> to vector<48x32xbf16>
    %80 = arith.extf %79 : vector<48x32xbf16> to vector<48x32xf32>
    %cst_56 = arith.constant 0.000000e+00 : f32
    %81 = vector.broadcast %cst_56 : f32 to vector<1x32xf32>
    %82 = vector.extract_strided_slice %80 {offsets = [1, 0], sizes = [47, 32], strides = [1, 1]} : vector<48x32xf32> to vector<47x32xf32>
    %83 = tpu.concatenate %82, %81 in 0 : vector<47x32xf32>, vector<1x32xf32> -> vector<48x32xf32>
    %84 = arith.addf %77, %83 : vector<48x32xf32>
    %cst_57 = arith.constant 0.000000e+00 : f32
    %85 = vector.broadcast %cst_57 : f32 to vector<48x32xf32>
    %86 = arith.maximumf %84, %85 : vector<48x32xf32>
    %c0_58 = arith.constant 0 : index
    %c0_59 = arith.constant 0 : index
    %87 = vector.load %arg6[%c0_58, %c0_59] : memref<48x32xf32, #tpu.memory_space<vmem>>, vector<48x32xf32>
    tpu.vector_store %arg6[%c0_58, %c0_59], %86 {strides = array<i32>} : memref<48x32xf32, #tpu.memory_space<vmem>>, vector<48x32xf32>,
    return
  }
  func.func @transform_0(%arg0: i32) -> (i32, i32, i32) {
    %c0_i32 = arith.constant 0 : i32
    %c0_i32_0 = arith.constant 0 : i32
    %c0_i32_1 = arith.constant 0 : i32
    return %c0_i32, %arg0, %c0_i32_0 : i32, i32, i32
  }
  func.func @transform_1(%arg0: i32) -> (i32, i32, i32) {
    %c0_i32 = arith.constant 0 : i32
    %c0_i32_0 = arith.constant 0 : i32
    %c0_i32_1 = arith.constant 0 : i32
    %c0_i32_2 = arith.constant 0 : i32
    return %c0_i32, %c0_i32_0, %c0_i32_1 : i32, i32, i32
  }
  func.func @transform_2(%arg0: i32) -> (i32, i32) {
    %c0_i32 = arith.constant 0 : i32
    %c0_i32_0 = arith.constant 0 : i32
    %c0_i32_1 = arith.constant 0 : i32
    return %c0_i32, %c0_i32_0 : i32, i32
  }
  func.func @transform_3(%arg0: i32) -> (i32, i32) {
    %c0_i32 = arith.constant 0 : i32
    %c0_i32_0 = arith.constant 0 : i32
    %c0_i32_1 = arith.constant 0 : i32
    return %c0_i32, %c0_i32_0 : i32, i32
  }
  func.func @transform_4(%arg0: i32) -> (i32, i32) {
    %c0_i32 = arith.constant 0 : i32
    %c0_i32_0 = arith.constant 0 : i32
    %c0_i32_1 = arith.constant 0 : i32
    return %c0_i32, %c0_i32_0 : i32, i32
  }
  func.func @transform_5(%arg0: i32) -> (i32, i32) {
    %c0_i32 = arith.constant 0 : i32
    %c0_i32_0 = arith.constant 0 : i32
    return %arg0, %c0_i32 : i32, i32
  }
}

module attributes {stable_mosaic.version = 11 : i64} {
  func.func @_resblock_tap_kernel(%arg0: i32, %arg1: memref<3x48x32xbf16, #tpu.memory_space<vmem>>, %arg2: memref<9x32x16xbf16, #tpu.memory_space<vmem>>, %arg3: memref<1x16xf32, #tpu.memory_space<vmem>>, %arg4: memref<16x32xbf16, #tpu.memory_space<vmem>>, %arg5: memref<1x32xf32, #tpu.memory_space<vmem>>, %arg6: memref<48x32xf32, #tpu.memory_space<vmem>>) attributes {dimension_semantics = [#tpu.dimension_semantics<parallel>], iteration_bounds = array<i64: 1>, scalar_prefetch = 0 : i64, scratch_operands = 0 : i64, tpu.core_type = #tpu.core_type<tc>, window_params = [{transform_indices = @transform_0, window_bounds = array<i64: 3, 48, 32>}, {pipeline_mode = #tpu.pipeline_mode<synchronous>, transform_indices = @transform_1, window_bounds = array<i64: 9, 32, 16>}, {pipeline_mode = #tpu.pipeline_mode<synchronous>, transform_indices = @transform_2, window_bounds = array<i64: 1, 16>}, {pipeline_mode = #tpu.pipeline_mode<synchronous>, transform_indices = @transform_3, window_bounds = array<i64: 16, 32>}, {pipeline_mode = #tpu.pipeline_mode<synchronous>, transform_indices = @transform_4, window_bounds = array<i64: 1, 32>}, {transform_indices = @transform_5, window_bounds = array<i64: 48, 32>}]} {
    %cst = arith.constant 0.000000e+00 : f32
    %0 = vector.broadcast %cst : f32 to vector<48x16xf32>
    %c0 = arith.constant 0 : index
    %c0_0 = arith.constant 0 : index
    %c0_1 = arith.constant 0 : index
    %1 = vector.load %arg1[%c0, %c0_0, %c0_1] : memref<3x48x32xbf16, #tpu.memory_space<vmem>>, vector<1x48x32xbf16>
    %2 = vector.shape_cast %1 : vector<1x48x32xbf16> to vector<48x32xbf16>
    %cst_2 = arith.constant 0.000000e+00 : bf16
    %3 = vector.broadcast %cst_2 : bf16 to vector<48x32xbf16>
    %4 = arith.maximumf %2, %3 : vector<48x32xbf16>
    %c0_3 = arith.constant 0 : index
    %c0_4 = arith.constant 0 : index
    %c0_5 = arith.constant 0 : index
    %5 = vector.load %arg2[%c0_3, %c0_4, %c0_5] : memref<9x32x16xbf16, #tpu.memory_space<vmem>>, vector<1x32x16xbf16>
    %6 = vector.shape_cast %5 : vector<1x32x16xbf16> to vector<32x16xbf16>
    %cst_6 = arith.constant dense<0.000000e+00> : vector<48x16xf32>
    %7 = tpu.matmul %4, %6, %cst_6 {dimension_numbers = #tpu.dot_dimension_numbers<[1], [0], [0], [1], [0, 0, 1, 1], [], []>} : vector<48x32xbf16>, vector<32x16xbf16>, vector<48x16xf32> -> vector<48x16xf32>
    %8 = arith.addf %0, %7 : vector<48x16xf32>
    %c1 = arith.constant 1 : index
    %c0_7 = arith.constant 0 : index
    %c0_8 = arith.constant 0 : index
    %9 = vector.load %arg2[%c1, %c0_7, %c0_8] : memref<9x32x16xbf16, #tpu.memory_space<vmem>>, vector<1x32x16xbf16>
    %10 = vector.shape_cast %9 : vector<1x32x16xbf16> to vector<32x16xbf16>
    %cst_9 = arith.constant dense<0.000000e+00> : vector<48x16xf32>
    %11 = tpu.matmul %4, %10, %cst_9 {dimension_numbers = #tpu.dot_dimension_numbers<[1], [0], [0], [1], [0, 0, 1, 1], [], []>} : vector<48x32xbf16>, vector<32x16xbf16>, vector<48x16xf32> -> vector<48x16xf32>
    %cst_10 = arith.constant 0.000000e+00 : f32
    %12 = vector.broadcast %cst_10 : f32 to vector<1x16xf32>
    %13 = vector.extract_strided_slice %11 {offsets = [1, 0], sizes = [47, 16], strides = [1, 1]} : vector<48x16xf32> to vector<47x16xf32>
    %14 = tpu.concatenate %13, %12 in 0 : vector<47x16xf32>, vector<1x16xf32> -> vector<48x16xf32>
    %15 = arith.addf %8, %14 : vector<48x16xf32>
    %c2 = arith.constant 2 : index
    %c0_11 = arith.constant 0 : index
    %c0_12 = arith.constant 0 : index
    %16 = vector.load %arg2[%c2, %c0_11, %c0_12] : memref<9x32x16xbf16, #tpu.memory_space<vmem>>, vector<1x32x16xbf16>
    %17 = vector.shape_cast %16 : vector<1x32x16xbf16> to vector<32x16xbf16>
    %cst_13 = arith.constant dense<0.000000e+00> : vector<48x16xf32>
    %18 = tpu.matmul %4, %17, %cst_13 {dimension_numbers = #tpu.dot_dimension_numbers<[1], [0], [0], [1], [0, 0, 1, 1], [], []>} : vector<48x32xbf16>, vector<32x16xbf16>, vector<48x16xf32> -> vector<48x16xf32>
    %cst_14 = arith.constant 0.000000e+00 : f32
    %19 = vector.broadcast %cst_14 : f32 to vector<2x16xf32>
    %20 = vector.extract_strided_slice %18 {offsets = [2, 0], sizes = [46, 16], strides = [1, 1]} : vector<48x16xf32> to vector<46x16xf32>
    %21 = tpu.concatenate %20, %19 in 0 : vector<46x16xf32>, vector<2x16xf32> -> vector<48x16xf32>
    %22 = arith.addf %15, %21 : vector<48x16xf32>
    %c1_15 = arith.constant 1 : index
    %c0_16 = arith.constant 0 : index
    %c0_17 = arith.constant 0 : index
    %23 = vector.load %arg1[%c1_15, %c0_16, %c0_17] : memref<3x48x32xbf16, #tpu.memory_space<vmem>>, vector<1x48x32xbf16>
    %24 = vector.shape_cast %23 : vector<1x48x32xbf16> to vector<48x32xbf16>
    %cst_18 = arith.constant 0.000000e+00 : bf16
    %25 = vector.broadcast %cst_18 : bf16 to vector<48x32xbf16>
    %26 = arith.maximumf %24, %25 : vector<48x32xbf16>
    %c3 = arith.constant 3 : index
    %c0_19 = arith.constant 0 : index
    %c0_20 = arith.constant 0 : index
    %27 = vector.load %arg2[%c3, %c0_19, %c0_20] : memref<9x32x16xbf16, #tpu.memory_space<vmem>>, vector<1x32x16xbf16>
    %28 = vector.shape_cast %27 : vector<1x32x16xbf16> to vector<32x16xbf16>
    %cst_21 = arith.constant dense<0.000000e+00> : vector<48x16xf32>
    %29 = tpu.matmul %26, %28, %cst_21 {dimension_numbers = #tpu.dot_dimension_numbers<[1], [0], [0], [1], [0, 0, 1, 1], [], []>} : vector<48x32xbf16>, vector<32x16xbf16>, vector<48x16xf32> -> vector<48x16xf32>
    %30 = arith.addf %22, %29 : vector<48x16xf32>
    %c4 = arith.constant 4 : index
    %c0_22 = arith.constant 0 : index
    %c0_23 = arith.constant 0 : index
    %31 = vector.load %arg2[%c4, %c0_22, %c0_23] : memref<9x32x16xbf16, #tpu.memory_space<vmem>>, vector<1x32x16xbf16>
    %32 = vector.shape_cast %31 : vector<1x32x16xbf16> to vector<32x16xbf16>
    %cst_24 = arith.constant dense<0.000000e+00> : vector<48x16xf32>
    %33 = tpu.matmul %26, %32, %cst_24 {dimension_numbers = #tpu.dot_dimension_numbers<[1], [0], [0], [1], [0, 0, 1, 1], [], []>} : vector<48x32xbf16>, vector<32x16xbf16>, vector<48x16xf32> -> vector<48x16xf32>
    %cst_25 = arith.constant 0.000000e+00 : f32
    %34 = vector.broadcast %cst_25 : f32 to vector<1x16xf32>
    %35 = vector.extract_strided_slice %33 {offsets = [1, 0], sizes = [47, 16], strides = [1, 1]} : vector<48x16xf32> to vector<47x16xf32>
    %36 = tpu.concatenate %35, %34 in 0 : vector<47x16xf32>, vector<1x16xf32> -> vector<48x16xf32>
    %37 = arith.addf %30, %36 : vector<48x16xf32>
    %c5 = arith.constant 5 : index
    %c0_26 = arith.constant 0 : index
    %c0_27 = arith.constant 0 : index
    %38 = vector.load %arg2[%c5, %c0_26, %c0_27] : memref<9x32x16xbf16, #tpu.memory_space<vmem>>, vector<1x32x16xbf16>
    %39 = vector.shape_cast %38 : vector<1x32x16xbf16> to vector<32x16xbf16>
    %cst_28 = arith.constant dense<0.000000e+00> : vector<48x16xf32>
    %40 = tpu.matmul %26, %39, %cst_28 {dimension_numbers = #tpu.dot_dimension_numbers<[1], [0], [0], [1], [0, 0, 1, 1], [], []>} : vector<48x32xbf16>, vector<32x16xbf16>, vector<48x16xf32> -> vector<48x16xf32>
    %cst_29 = arith.constant 0.000000e+00 : f32
    %41 = vector.broadcast %cst_29 : f32 to vector<2x16xf32>
    %42 = vector.extract_strided_slice %40 {offsets = [2, 0], sizes = [46, 16], strides = [1, 1]} : vector<48x16xf32> to vector<46x16xf32>
    %43 = tpu.concatenate %42, %41 in 0 : vector<46x16xf32>, vector<2x16xf32> -> vector<48x16xf32>
    %44 = arith.addf %37, %43 : vector<48x16xf32>
    %c2_30 = arith.constant 2 : index
    %c0_31 = arith.constant 0 : index
    %c0_32 = arith.constant 0 : index
    %45 = vector.load %arg1[%c2_30, %c0_31, %c0_32] : memref<3x48x32xbf16, #tpu.memory_space<vmem>>, vector<1x48x32xbf16>
    %46 = vector.shape_cast %45 : vector<1x48x32xbf16> to vector<48x32xbf16>
    %cst_33 = arith.constant 0.000000e+00 : bf16
    %47 = vector.broadcast %cst_33 : bf16 to vector<48x32xbf16>
    %48 = arith.maximumf %46, %47 : vector<48x32xbf16>
    %c6 = arith.constant 6 : index
    %c0_34 = arith.constant 0 : index
    %c0_35 = arith.constant 0 : index
    %49 = vector.load %arg2[%c6, %c0_34, %c0_35] : memref<9x32x16xbf16, #tpu.memory_space<vmem>>, vector<1x32x16xbf16>
    %50 = vector.shape_cast %49 : vector<1x32x16xbf16> to vector<32x16xbf16>
    %cst_36 = arith.constant dense<0.000000e+00> : vector<48x16xf32>
    %51 = tpu.matmul %48, %50, %cst_36 {dimension_numbers = #tpu.dot_dimension_numbers<[1], [0], [0], [1], [0, 0, 1, 1], [], []>} : vector<48x32xbf16>, vector<32x16xbf16>, vector<48x16xf32> -> vector<48x16xf32>
    %52 = arith.addf %44, %51 : vector<48x16xf32>
    %c7 = arith.constant 7 : index
    %c0_37 = arith.constant 0 : index
    %c0_38 = arith.constant 0 : index
    %53 = vector.load %arg2[%c7, %c0_37, %c0_38] : memref<9x32x16xbf16, #tpu.memory_space<vmem>>, vector<1x32x16xbf16>
    %54 = vector.shape_cast %53 : vector<1x32x16xbf16> to vector<32x16xbf16>
    %cst_39 = arith.constant dense<0.000000e+00> : vector<48x16xf32>
    %55 = tpu.matmul %48, %54, %cst_39 {dimension_numbers = #tpu.dot_dimension_numbers<[1], [0], [0], [1], [0, 0, 1, 1], [], []>} : vector<48x32xbf16>, vector<32x16xbf16>, vector<48x16xf32> -> vector<48x16xf32>
    %cst_40 = arith.constant 0.000000e+00 : f32
    %56 = vector.broadcast %cst_40 : f32 to vector<1x16xf32>
    %57 = vector.extract_strided_slice %55 {offsets = [1, 0], sizes = [47, 16], strides = [1, 1]} : vector<48x16xf32> to vector<47x16xf32>
    %58 = tpu.concatenate %57, %56 in 0 : vector<47x16xf32>, vector<1x16xf32> -> vector<48x16xf32>
    %59 = arith.addf %52, %58 : vector<48x16xf32>
    %c8 = arith.constant 8 : index
    %c0_41 = arith.constant 0 : index
    %c0_42 = arith.constant 0 : index
    %60 = vector.load %arg2[%c8, %c0_41, %c0_42] : memref<9x32x16xbf16, #tpu.memory_space<vmem>>, vector<1x32x16xbf16>
    %61 = vector.shape_cast %60 : vector<1x32x16xbf16> to vector<32x16xbf16>
    %cst_43 = arith.constant dense<0.000000e+00> : vector<48x16xf32>
    %62 = tpu.matmul %48, %61, %cst_43 {dimension_numbers = #tpu.dot_dimension_numbers<[1], [0], [0], [1], [0, 0, 1, 1], [], []>} : vector<48x32xbf16>, vector<32x16xbf16>, vector<48x16xf32> -> vector<48x16xf32>
    %cst_44 = arith.constant 0.000000e+00 : f32
    %63 = vector.broadcast %cst_44 : f32 to vector<2x16xf32>
    %64 = vector.extract_strided_slice %62 {offsets = [2, 0], sizes = [46, 16], strides = [1, 1]} : vector<48x16xf32> to vector<46x16xf32>
    %65 = tpu.concatenate %64, %63 in 0 : vector<46x16xf32>, vector<2x16xf32> -> vector<48x16xf32>
    %66 = arith.addf %59, %65 : vector<48x16xf32>
    %c0_45 = arith.constant 0 : index
    %c0_46 = arith.constant 0 : index
    %67 = vector.load %arg3[%c0_45, %c0_46] : memref<1x16xf32, #tpu.memory_space<vmem>>, vector<1x16xf32>
    %68 = vector.broadcast %67 : vector<1x16xf32> to vector<48x16xf32>
    %69 = arith.addf %66, %68 : vector<48x16xf32>
    %cst_47 = arith.constant 0.000000e+00 : f32
    %70 = vector.broadcast %cst_47 : f32 to vector<48x16xf32>
    %71 = arith.maximumf %69, %70 : vector<48x16xf32>
    %72 = arith.truncf %71 : vector<48x16xf32> to vector<48x16xbf16>
    %c0_48 = arith.constant 0 : index
    %c0_49 = arith.constant 0 : index
    %73 = vector.load %arg4[%c0_48, %c0_49] : memref<16x32xbf16, #tpu.memory_space<vmem>>, vector<16x32xbf16>
    %cst_50 = arith.constant dense<0.000000e+00> : vector<48x32xf32>
    %74 = tpu.matmul %72, %73, %cst_50 {dimension_numbers = #tpu.dot_dimension_numbers<[1], [0], [0], [1], [0, 0, 1, 1], [], []>} : vector<48x16xbf16>, vector<16x32xbf16>, vector<48x32xf32> -> vector<48x32xf32>
    %c0_51 = arith.constant 0 : index
    %c0_52 = arith.constant 0 : index
    %75 = vector.load %arg5[%c0_51, %c0_52] : memref<1x32xf32, #tpu.memory_space<vmem>>, vector<1x32xf32>
    %76 = vector.broadcast %75 : vector<1x32xf32> to vector<48x32xf32>
    %77 = arith.addf %74, %76 : vector<48x32xf32>
    %c1_53 = arith.constant 1 : index
    %c0_54 = arith.constant 0 : index
    %c0_55 = arith.constant 0 : index
    %78 = vector.load %arg1[%c1_53, %c0_54, %c0_55] : memref<3x48x32xbf16, #tpu.memory_space<vmem>>, vector<1x48x32xbf16>
    %79 = vector.shape_cast %78 : vector<1x48x32xbf16> to vector<48x32xbf16>
    %80 = arith.extf %79 : vector<48x32xbf16> to vector<48x32xf32>
    %cst_56 = arith.constant 0.000000e+00 : f32
    %81 = vector.broadcast %cst_56 : f32 to vector<1x32xf32>
    %82 = vector.extract_strided_slice %80 {offsets = [1, 0], sizes = [47, 32], strides = [1, 1]} : vector<48x32xf32> to vector<47x32xf32>
    %83 = tpu.concatenate %82, %81 in 0 : vector<47x32xf32>, vector<1x32xf32> -> vector<48x32xf32>
    %84 = arith.addf %77, %83 : vector<48x32xf32>
    %c0_57 = arith.constant 0 : index
    %c0_58 = arith.constant 0 : index
    %85 = vector.load %arg6[%c0_57, %c0_58] : memref<48x32xf32, #tpu.memory_space<vmem>>, vector<48x32xf32>
    tpu.vector_store %arg6[%c0_57, %c0_58], %84 {strides = array<i32>} : memref<48x32xf32, #tpu.memory_space<vmem>>, vector<48x32xf32>,
    return
  }
  func.func @transform_0(%arg0: i32) -> (i32, i32, i32) {
    %c0_i32 = arith.constant 0 : i32
    %c0_i32_0 = arith.constant 0 : i32
    %c0_i32_1 = arith.constant 0 : i32
    return %c0_i32, %arg0, %c0_i32_0 : i32, i32, i32
  }
  func.func @transform_1(%arg0: i32) -> (i32, i32, i32) {
    %c0_i32 = arith.constant 0 : i32
    %c0_i32_0 = arith.constant 0 : i32
    %c0_i32_1 = arith.constant 0 : i32
    %c0_i32_2 = arith.constant 0 : i32
    return %c0_i32, %c0_i32_0, %c0_i32_1 : i32, i32, i32
  }
  func.func @transform_2(%arg0: i32) -> (i32, i32) {
    %c0_i32 = arith.constant 0 : i32
    %c0_i32_0 = arith.constant 0 : i32
    %c0_i32_1 = arith.constant 0 : i32
    return %c0_i32, %c0_i32_0 : i32, i32
  }
  func.func @transform_3(%arg0: i32) -> (i32, i32) {
    %c0_i32 = arith.constant 0 : i32
    %c0_i32_0 = arith.constant 0 : i32
    %c0_i32_1 = arith.constant 0 : i32
    return %c0_i32, %c0_i32_0 : i32, i32
  }
  func.func @transform_4(%arg0: i32) -> (i32, i32) {
    %c0_i32 = arith.constant 0 : i32
    %c0_i32_0 = arith.constant 0 : i32
    %c0_i32_1 = arith.constant 0 : i32
    return %c0_i32, %c0_i32_0 : i32, i32
  }
  func.func @transform_5(%arg0: i32) -> (i32, i32) {
    %c0_i32 = arith.constant 0 : i32
    %c0_i32_0 = arith.constant 0 : i32
    return %arg0, %c0_i32 : i32, i32
  }
}

</mosaic_0001>

<llo_original>
// kernel: encoder_forward.5
$region0: #{encoder_forward.5}
  #allocation0 [shape = 'u32[]', space=smem, size = 0x4, offset = 0x4, fixed_abs, tag = 'smem constant byte address 0x4 - core index']
  #allocation1 [shape = 'u32[144,128]{1,0:T(1,128)}', space=vmem, size = 0x12000, scoped, tag = 'internal scratch']
  %s0 = inlined_call_operand.vmem [shape: bf16[128,48], index: 0, kind: input, shape index: {}]
  %s1 = inlined_call_operand.vmem [shape: bf16[48,16], index: 1, kind: input, shape index: {}]
  %s2 = inlined_call_operand.vmem [shape: f32[1,16], index: 2, kind: input, shape index: {}]
  %s3 = inlined_call_operand.vmem [shape: f32[128,16], index: 3, kind: output, shape index: {}]
  %s4 = sld [smem:[#allocation0]]
  $region45: #{encoder_forward.5} parent=0
    _
  %s6 = ssub.s32 1, %s4
  %s7 = scalar_select 0, %s6, %s4
  loop: start=0, step=1, limit=4
  $region2: #{encoder_forward.5} parent=0 // loop_pre_header
    _
  $region3: #{encoder_forward.5} parent=0 // loop_header
    %s9 = sphi 0, %s13
    %p10 = scmp.ge.s32.totalorder %s9, 4
    %s19 = sphi 0, %s21
    %s22 = sphi 0, %s19
    %s23 = sphi 0, %s22
    %s39 = sphi 0, %s23
    %s43 = sphi 0, %s43
    %s45 = sphi 0, %s43
    %s46 = sphi 0, %s45
    %s60 = sphi 0, %s46
    %s64 = sphi 0, %s64
    %s66 = sphi 0, %s64
    %s67 = sphi 0, %s66
    %s81 = sphi 0, %s67
    %s87 = sphi 0, %s89
    %s90 = sphi 0, %s87
    %s91 = sphi 0, %s90
    %s107 = sphi 0, %s91
  $region4: #{encoder_forward.5} parent=0 // loop_header_branch
    %12 = sbr.rel (%p10) target = $region8
  $region5: #{encoder_forward.5} parent=0 // loop_body
    %s14 = ssub.s32 %s9, 1
    %s15 = ssub.s32 %s9, 2
    %s16 = sadd.s32 %s9, 1
    %s17 = ssub.s32 %s9, %s16
    %p18 = scmp.eq.s32.totalorder %s17, 0
    %s20 = sadd.s32 %s19, 1
    %s21 = scalar_select %p18, %s19, %s20
    %p24 = pneg %p18
    %p25 = scmp.eq.s32.totalorder %s9, 1
    %p26 = por %p24, %p25
    %p27 = scmp.ne.s32.totalorder %s19, %s22
    %p28 = scmp.eq.s32.totalorder %s9, 0
    %p29 = por %p27, %p28
    %p30 = scmp.ne.s32.totalorder %s19, %s22
    %p31 = scmp.eq.s32.totalorder %s14, 1
    %p32 = por %p30, %p31
    %p33 = scmp.ne.s32.totalorder %s22, %s23
    %p34 = scmp.eq.s32.totalorder %s14, 0
    %p35 = por %p33, %p34
    %p36 = scmp.ne.s32.totalorder %s22, %s23
    %p37 = scmp.eq.s32.totalorder %s15, 1
    %p38 = por %p36, %p37
    %p40 = scmp.ne.s32.totalorder %s23, %s39
    %p41 = scmp.eq.s32.totalorder %s15, 0
    %p42 = por %p40, %p41
    %s44 = sadd.s32 %s43, 1
    %p47 = scmp.eq.s32.totalorder %s9, 1
    %p48 = scmp.ne.s32.totalorder %s43, %s45
    %p49 = scmp.eq.s32.totalorder %s9, 0
    %p50 = por %p48, %p49
    %p51 = scmp.ne.s32.totalorder %s43, %s45
    %p52 = scmp.eq.s32.totalorder %s14, 1
    %p53 = por %p51, %p52
    %p54 = scmp.ne.s32.totalorder %s45, %s46
    %p55 = scmp.eq.s32.totalorder %s14, 0
    %p56 = por %p54, %p55
    %p57 = scmp.ne.s32.totalorder %s45, %s46
    %p58 = scmp.eq.s32.totalorder %s15, 1
    %p59 = por %p57, %p58
    %p61 = scmp.ne.s32.totalorder %s46, %s60
    %p62 = scmp.eq.s32.totalorder %s15, 0
    %p63 = por %p61, %p62
    %s65 = sadd.s32 %s64, 1
    %p68 = scmp.eq.s32.totalorder %s9, 1
    %p69 = scmp.ne.s32.totalorder %s64, %s66
    %p70 = scmp.eq.s32.totalorder %s9, 0
    %p71 = por %p69, %p70
    %p72 = scmp.ne.s32.totalorder %s64, %s66
    %p73 = scmp.eq.s32.totalorder %s14, 1
    %p74 = por %p72, %p73
    %p75 = scmp.ne.s32.totalorder %s66, %s67
    %p76 = scmp.eq.s32.totalorder %s14, 0
    %p77 = por %p75, %p76
    %p78 = scmp.ne.s32.totalorder %s66, %s67
    %p79 = scmp.eq.s32.totalorder %s15, 1
    %p80 = por %p78, %p79
    %p82 = scmp.ne.s32.totalorder %s67, %s81
    %p83 = scmp.eq.s32.totalorder %s15, 0
    %p84 = por %p82, %p83
    %s85 = ssub.s32 %s9, %s16
    %p86 = scmp.eq.s32.totalorder %s85, 0
    %s88 = sadd.s32 %s87, 1
    %s89 = scalar_select %p86, %s87, %s88
    %p92 = pneg %p86
    %p93 = scmp.eq.s32.totalorder %s9, 1
    %p94 = por %p92, %p93
    %p95 = scmp.ne.s32.totalorder %s87, %s90
    %p96 = scmp.eq.s32.totalorder %s9, 0
    %p97 = por %p95, %p96
    %p98 = scmp.ne.s32.totalorder %s87, %s90
    %p99 = scmp.eq.s32.totalorder %s14, 1
    %p100 = por %p98, %p99
    %p101 = scmp.ne.s32.totalorder %s90, %s91
    %p102 = scmp.eq.s32.totalorder %s14, 0
    %p103 = por %p101, %p102
    %p104 = scmp.ne.s32.totalorder %s90, %s91
    %p105 = scmp.eq.s32.totalorder %s15, 1
    %p106 = por %p104, %p105
    %p108 = scmp.ne.s32.totalorder %s91, %s107
    %p109 = scmp.eq.s32.totalorder %s15, 0
    %p110 = por %p108, %p109
    %p111 = scmp.le.s32.totalorder 1, %s9
    %p112 = scmp.lt.s32.totalorder %s9, 3
    %p113 = pnand %p111, %p112
    %p114 = pneg %p113
    // Predicated region
    $region9: #{encoder_forward.5} parent=5 // pred_check
      _
    $region10: #{encoder_forward.5} parent=5 // pred_check_branch
      %116 = sbr.rel (%p113) target = $region12
    $region11: #{encoder_forward.5} parent=5 // pred_region
      %s117 = ssub.s32 %s9, 1
      // Predicated region
      $region13: #{encoder_forward.5} parent=11 // pred_check
        %p118 = pneg %p56
      $region14: #{encoder_forward.5} parent=11 // pred_check_branch
        %120 = sbr.rel (%p118) target = $region16
      $region15: #{encoder_forward.5} parent=11 // pred_region
        _
      $region16: #{encoder_forward.5} parent=11 // pred_fallthru
        _
      // Predicated region
      $region17: #{encoder_forward.5} parent=11 // pred_check
        %p121 = pneg %p77
      $region18: #{encoder_forward.5} parent=11 // pred_check_branch
        %123 = sbr.rel (%p121) target = $region20
      $region19: #{encoder_forward.5} parent=11 // pred_region
        _
      $region20: #{encoder_forward.5} parent=11 // pred_fallthru
        _
    $region12: #{encoder_forward.5} parent=5 // pred_fallthru
      _
    %p124 = scmp.lt.s32.totalorder %s9, 2
    // Predicated region
    $region21: #{encoder_forward.5} parent=5 // pred_check
      %p125 = pneg %p124
    $region22: #{encoder_forward.5} parent=5 // pred_check_branch
      %127 = sbr.rel (%p125) target = $region24
    $region23: #{encoder_forward.5} parent=5 // pred_region
      // Predicated region
      $region25: #{encoder_forward.5} parent=23 // pred_check
        %p128 = pneg %p29
      $region26: #{encoder_forward.5} parent=23 // pred_check_branch
        %130 = sbr.rel (%p128) target = $region28
      $region27: #{encoder_forward.5} parent=23 // pred_region
        %s131 = smul.u32 8, %s9
        %p132 = scmp.lt.s32.totalorder %s131, 15
        %s133 = scalar_select %p132, %s131, 15
        %s134 = smul.addr %s133, 4
        %s135 = scalar_lea.vmem %s0, %s134
        %s136 = smul.u32 8, %s9
      $region28: #{encoder_forward.5} parent=23 // pred_fallthru
        _
    $region24: #{encoder_forward.5} parent=5 // pred_fallthru
      _
    %p137 = scmp.le.s32.totalorder 1, %s9
    %p138 = scmp.lt.s32.totalorder %s9, 3
    %p139 = pnand %p137, %p138
    %p140 = pneg %p139
    // Predicated region
    $region29: #{encoder_forward.5} parent=5 // pred_check
      _
    $region30: #{encoder_forward.5} parent=5 // pred_check_branch
      %142 = sbr.rel (%p139) target = $region32
    $region31: #{encoder_forward.5} parent=5 // pred_region
      %s143 = ssub.s32 %s9, 1
      %s144 = smul.u32 8, %s14
      %p145 = scmp.lt.s32.totalorder %s144, 15
      %s146 = scalar_select %p145, %s144, 15
      %s147 = smul.addr %s146, 4
      %s148 = scalar_lea.vmem %s0, %s147
      %p149 = pneg %p35
      %p150 = pneg %p32
      %p151 = pneg %p56
      %p152 = pneg %p53
      %p153 = pneg %p77
      %p154 = pneg %p74
      %p155 = pneg %p103
      %p156 = pneg %p100
      %s157 = smul.u32 8, %s14
      %p158 = scmp.lt.s32.totalorder %s157, 15
      %s159 = scalar_select %p158, %s157, 15
      %s160 = smul.addr %s159, 8
      %s161 = scalar_lea.vmem %s3, %s160
      %s162 = smul.u32 8, %s14
      %p163 = scmp.lt.s32.totalorder %s162, 15
      %s164 = scalar_select %p163, %s162, 15
      %s165 = smul.addr %s164, 4
      %s166 = scalar_lea.vmem %s0, %s165
      %s167 = smul.u32 8, %s14
      %s168 = smul.u32 8, %s14
      %p169 = scmp.lt.s32.totalorder %s168, 15
      %s170 = scalar_select %p169, %s168, 15
      %s171 = smul.addr %s170, 8
      %s172 = scalar_lea.vmem %s3, %s171
      %s173 = smul.u32 8, %s14
      %v175 = vld [vmem:[%s166] sm:$0xf]
      %v176 = vld [vmem:[%s166 + $0x4] sm:$0xf]
      %v177 = vld [vmem:[%s166 + $0x8] sm:$0xf]
      %v178 = vld [vmem:[%s166 + $0xc] sm:$0xf]
      %v179 = vld [vmem:[%s166 + $0x10] sm:$0xf]
      %v180 = vld [vmem:[%s166 + $0x14] sm:$0xf]
      %v181 = vld [vmem:[%s166 + $0x18] sm:$0xf]
      %v182 = vld [vmem:[%s166 + $0x1c] sm:$0xf]
      %v183 = vld [vmem:[%s1] sm:$0xf]
      %v184 = vld [vmem:[%s1 + $0x4] sm:$0xf]
      %v185 = vld [vmem:[%s1 + $0x8] sm:$0xf]
      %v186 = vld [vmem:[%s1 + $0xc] sm:$0xf]
      %v187 = vld [vmem:[%s1 + $0x10] sm:$0xf]
      %v188 = vld [vmem:[%s1 + $0x14] sm:$0xf]
      %v189 = vld [vmem:[%s2] sm:$0x1]
      %v191 = vlaneseq
      %v192 = vshrl.u32 %v191, 7
      %v193 = vsub.s32 0, %v192
      %v194 = vrot.slane %v189, %v193
      %v204 = vunpack.c.l.b16 %v175
      %v205 = vunpack.c.l.b16 %v176
      %v206 = vunpack.c.l.b16 %v177
      %v207 = vunpack.c.l.b16 %v178
      %v208 = vunpack.c.l.b16 %v179
      %v209 = vunpack.c.l.b16 %v180
      %v210 = vunpack.c.l.b16 %v181
      %v211 = vunpack.c.l.b16 %v182
      %v212 = vpack.c.b16 %v205, %v204
      %v213 = vpack.c.b16 %v207, %v206
      %v214 = vpack.c.b16 %v209, %v208
      %v215 = vpack.c.b16 %v211, %v210
      %v222 = vunpack.c.l.b16 %v183
      %v223 = vunpack.c.l.b16 %v184
      %v224 = vunpack.c.l.b16 %v185
      %v225 = vunpack.c.l.b16 %v186
      %v226 = vunpack.c.l.b16 %v187
      %v227 = vunpack.c.l.b16 %v188
      %v228 = vpack.c.b16 %v223, %v222
      %v229 = vpack.c.b16 %v225, %v224
      %v230 = vpack.c.b16 %v227, %v226
      %vm234 = vcmask 392192
      %v236 = vsel %vm234, %v212, 0
      %v239 = vsel %vm234, %v213, 0
      %v242 = vsel %vm234, %v214, 0
      %v245 = vsel %vm234, %v215, 0
      %247 = vmatprep.subr.bf16.mxu0 0
      %248 = vmatpush1.bf16.msra.mxu0 0
      %249 = vmatprep.subr.bf16.mxu0 0
      %250 = vmatpush1.bf16.msra.mxu0 0
      %251 = vmatprep.subr.bf16.mxu0 0
      %252 = vmatpush1.bf16.msra.mxu0 0
      %253 = vmatprep.subr.bf16.mxu0 0
      %254 = vmatpush1.bf16.msra.mxu0 0
      %255 = vmatprep.subr.bf16.mxu0 0
      %256 = vmatpush1.bf16.msra.mxu0 0
      %257 = vmatprep.subr.bf16.mxu0 0
      %258 = vmatpush1.bf16.msra.mxu0 %v230
      %259 = vmatprep.subr.bf16.mxu0 0
      %260 = vmatpush1.bf16.msra.mxu0 %v229
      %261 = vmatprep.subr.bf16.mxu0 0
      %262 = vmatpush1.bf16.msra.mxu0 %v228
      %263 = vmatprep.subr.bf16.mxu0 0
      %264 = vmatpush2.bf16.msra.mxu0 0
      %265 = vmatprep.subr.bf16.mxu0 0
      %266 = vmatpush2.bf16.msra.mxu0 0
      %267 = vmatprep.subr.bf16.mxu0 0
      %268 = vmatpush2.bf16.msra.mxu0 0
      %269 = vmatprep.subr.bf16.mxu0 0
      %270 = vmatpush2.bf16.msra.mxu0 0
      %271 = vmatprep.subr.bf16.mxu0 0
      %272 = vmatpush2.bf16.msra.mxu0 0
      %273 = vmatprep.subr.bf16.mxu0 0
      %274 = vmatpush2.bf16.msra.mxu0 0
      %275 = vmatprep.subr.bf16.mxu0 0
      %276 = vmatpush2.bf16.msra.mxu0 0
      %277 = vmatprep.subr.bf16.mxu0 0
      %278 = vmatpush2.bf16.msra.mxu0 0
      %279 = vmatprep.mubr.bf16.mxu0 0
      %280 = vmatmul.mubr.bf16.gmra.mxu0 %v236
      %v281 = vpop.f32.mrf.mxu0
      %v282 = vadd.f32 %v194, %v281
      %v283 = vpop.f32.mrf.mxu0
      %v284 = vpop.f32.mrf.mxu0
      %v285 = vadd.f32 %v194, %v284
      %v286 = vpop.f32.mrf.mxu0
      %287 = vmatprep.mubr.bf16.mxu0 0
      %288 = vmatmul.mubr.bf16.gmra.mxu0 %v239
      %v289 = vpop.f32.mrf.mxu0
      %v290 = vadd.f32 %v194, %v289
      %v291 = vpop.f32.mrf.mxu0
      %v292 = vpop.f32.mrf.mxu0
      %v293 = vadd.f32 %v194, %v292
      %v294 = vpop.f32.mrf.mxu0
      %295 = vmatprep.mubr.bf16.mxu0 0
      %296 = vmatmul.mubr.bf16.gmra.mxu0 %v242
      %v297 = vpop.f32.mrf.mxu0
      %v298 = vadd.f32 %v194, %v297
      %v299 = vpop.f32.mrf.mxu0
      %v300 = vpop.f32.mrf.mxu0
      %v301 = vadd.f32 %v194, %v300
      %v302 = vpop.f32.mrf.mxu0
      %303 = vmatprep.mubr.bf16.mxu0 0
      %304 = vmatmul.mubr.bf16.gmra.mxu0 %v245
      %v305 = vpop.f32.mrf.mxu0
      %v306 = vadd.f32 %v194, %v305
      %v307 = vpop.f32.mrf.mxu0
      %v308 = vpop.f32.mrf.mxu0
      %v309 = vadd.f32 %v194, %v308
      %v310 = vpop.f32.mrf.mxu0
      %311 = vdwg.mxu0
      %v312 = vmax.f32 %v282, 0.0
      %v313 = vmax.f32 %v285, 0.0
      %v314 = vmax.f32 %v290, 0.0
      %v315 = vmax.f32 %v293, 0.0
      %v316 = vmax.f32 %v298, 0.0
      %v317 = vmax.f32 %v301, 0.0
      %v318 = vmax.f32 %v306, 0.0
      %v319 = vmax.f32 %v309, 0.0
      %vm320 = vcmask 130048
      %321 = vst.msk [vmem:[%s172] sm:$0xff] %vm320, %v312
      %322 = vst.msk [vmem:[%s172 + $0x8] sm:$0xff] %vm320, %v313
      %323 = vst.msk [vmem:[%s172 + $0x10] sm:$0xff] %vm320, %v314
      %324 = vst.msk [vmem:[%s172 + $0x18] sm:$0xff] %vm320, %v315
      %325 = vst.msk [vmem:[%s172 + $0x20] sm:$0xff] %vm320, %v316
      %326 = vst.msk [vmem:[%s172 + $0x28] sm:$0xff] %vm320, %v317
      %327 = vst.msk [vmem:[%s172 + $0x30] sm:$0xff] %vm320, %v318
      %328 = vst.msk [vmem:[%s172 + $0x38] sm:$0xff] %vm320, %v319
      %s329 = smul.u32 8, %s14
      %p330 = scmp.lt.s32.totalorder %s329, 15
      %s331 = scalar_select %p330, %s329, 15
      %s332 = smul.addr %s331, 8
      %s333 = scalar_lea.vmem %s3, %s332
      // Predicated region
      $region33: #{encoder_forward.5} parent=31 // pred_check
        %p334 = pneg %p100
      $region34: #{encoder_forward.5} parent=31 // pred_check_branch
        %336 = sbr.rel (%p334) target = $region36
      $region35: #{encoder_forward.5} parent=31 // pred_region
        %s337 = smul.u32 8, %s14
      $region36: #{encoder_forward.5} parent=31 // pred_fallthru
        _
    $region32: #{encoder_forward.5} parent=5 // pred_fallthru
      _
    %p338 = scmp.le.s32.totalorder 2, %s9
    // Predicated region
    $region37: #{encoder_forward.5} parent=5 // pred_check
      %p339 = pneg %p338
    $region38: #{encoder_forward.5} parent=5 // pred_check_branch
      %341 = sbr.rel (%p339) target = $region40
    $region39: #{encoder_forward.5} parent=5 // pred_region
      %s342 = ssub.s32 %s9, 2
      // Predicated region
      $region41: #{encoder_forward.5} parent=39 // pred_check
        %p343 = pneg %p106
      $region42: #{encoder_forward.5} parent=39 // pred_check_branch
        %345 = sbr.rel (%p343) target = $region44
      $region43: #{encoder_forward.5} parent=39 // pred_region
        %s346 = smul.u32 8, %s15
        %p347 = scmp.lt.s32.totalorder %s346, 15
        %s348 = scalar_select %p347, %s346, 15
        %s349 = smul.addr %s348, 8
        %s350 = scalar_lea.vmem %s3, %s349
      $region44: #{encoder_forward.5} parent=39 // pred_fallthru
        _
    $region40: #{encoder_forward.5} parent=5 // pred_fallthru
      _
  $region6: #{encoder_forward.5} parent=0 // loop_footer
    %s13 = sadd.s32 1, %s9
  $region7: #{encoder_forward.5} parent=0 // loop_footer_branch
    %8 = sbr.rel target = $region3
  $region8: #{encoder_forward.5} parent=0 // loop_exit
    _

// kernel: encoder_forward.6
$region0: #{encoder_forward.6}
  #allocation0 [shape = 'u32[]', space=smem, size = 0x4, offset = 0x4, fixed_abs, tag = 'smem constant byte address 0x4 - core index']
  #allocation1 [shape = 'u32[144,128]{1,0:T(1,128)}', space=vmem, size = 0x12000, scoped, tag = 'internal scratch']
  %s0 = inlined_call_operand.vmem [shape: bf16[32,256], index: 0, kind: input, shape index: {}]
  %s1 = inlined_call_operand.vmem [shape: bf16[256,32], index: 1, kind: input, shape index: {}]
  %s2 = inlined_call_operand.vmem [shape: f32[1,32], index: 2, kind: input, shape index: {}]
  %s3 = inlined_call_operand.vmem [shape: f32[32,32], index: 3, kind: output, shape index: {}]
  %s4 = sld [smem:[#allocation0]]
  $region45: #{encoder_forward.6} parent=0
    _
  %s6 = ssub.s32 1, %s4
  %s7 = scalar_select 0, %s6, %s4
  loop: start=0, step=1, limit=4
  $region2: #{encoder_forward.6} parent=0 // loop_pre_header
    _
  $region3: #{encoder_forward.6} parent=0 // loop_header
    %s9 = sphi 0, %s13
    %p10 = scmp.ge.s32.totalorder %s9, 4
    %s19 = sphi 0, %s21
    %s22 = sphi 0, %s19
    %s23 = sphi 0, %s22
    %s39 = sphi 0, %s23
    %s43 = sphi 0, %s43
    %s45 = sphi 0, %s43
    %s46 = sphi 0, %s45
    %s60 = sphi 0, %s46
    %s64 = sphi 0, %s64
    %s66 = sphi 0, %s64
    %s67 = sphi 0, %s66
    %s81 = sphi 0, %s67
    %s87 = sphi 0, %s89
    %s90 = sphi 0, %s87
    %s91 = sphi 0, %s90
    %s107 = sphi 0, %s91
  $region4: #{encoder_forward.6} parent=0 // loop_header_branch
    %12 = sbr.rel (%p10) target = $region8
  $region5: #{encoder_forward.6} parent=0 // loop_body
    %s14 = ssub.s32 %s9, 1
    %s15 = ssub.s32 %s9, 2
    %s16 = sadd.s32 %s9, 1
    %s17 = ssub.s32 %s9, %s16
    %p18 = scmp.eq.s32.totalorder %s17, 0
    %s20 = sadd.s32 %s19, 1
    %s21 = scalar_select %p18, %s19, %s20
    %p24 = pneg %p18
    %p25 = scmp.eq.s32.totalorder %s9, 1
    %p26 = por %p24, %p25
    %p27 = scmp.ne.s32.totalorder %s19, %s22
    %p28 = scmp.eq.s32.totalorder %s9, 0
    %p29 = por %p27, %p28
    %p30 = scmp.ne.s32.totalorder %s19, %s22
    %p31 = scmp.eq.s32.totalorder %s14, 1
    %p32 = por %p30, %p31
    %p33 = scmp.ne.s32.totalorder %s22, %s23
    %p34 = scmp.eq.s32.totalorder %s14, 0
    %p35 = por %p33, %p34
    %p36 = scmp.ne.s32.totalorder %s22, %s23
    %p37 = scmp.eq.s32.totalorder %s15, 1
    %p38 = por %p36, %p37
    %p40 = scmp.ne.s32.totalorder %s23, %s39
    %p41 = scmp.eq.s32.totalorder %s15, 0
    %p42 = por %p40, %p41
    %s44 = sadd.s32 %s43, 1
    %p47 = scmp.eq.s32.totalorder %s9, 1
    %p48 = scmp.ne.s32.totalorder %s43, %s45
    %p49 = scmp.eq.s32.totalorder %s9, 0
    %p50 = por %p48, %p49
    %p51 = scmp.ne.s32.totalorder %s43, %s45
    %p52 = scmp.eq.s32.totalorder %s14, 1
    %p53 = por %p51, %p52
    %p54 = scmp.ne.s32.totalorder %s45, %s46
    %p55 = scmp.eq.s32.totalorder %s14, 0
    %p56 = por %p54, %p55
    %p57 = scmp.ne.s32.totalorder %s45, %s46
    %p58 = scmp.eq.s32.totalorder %s15, 1
    %p59 = por %p57, %p58
    %p61 = scmp.ne.s32.totalorder %s46, %s60
    %p62 = scmp.eq.s32.totalorder %s15, 0
    %p63 = por %p61, %p62
    %s65 = sadd.s32 %s64, 1
    %p68 = scmp.eq.s32.totalorder %s9, 1
    %p69 = scmp.ne.s32.totalorder %s64, %s66
    %p70 = scmp.eq.s32.totalorder %s9, 0
    %p71 = por %p69, %p70
    %p72 = scmp.ne.s32.totalorder %s64, %s66
    %p73 = scmp.eq.s32.totalorder %s14, 1
    %p74 = por %p72, %p73
    %p75 = scmp.ne.s32.totalorder %s66, %s67
    %p76 = scmp.eq.s32.totalorder %s14, 0
    %p77 = por %p75, %p76
    %p78 = scmp.ne.s32.totalorder %s66, %s67
    %p79 = scmp.eq.s32.totalorder %s15, 1
    %p80 = por %p78, %p79
    %p82 = scmp.ne.s32.totalorder %s67, %s81
    %p83 = scmp.eq.s32.totalorder %s15, 0
    %p84 = por %p82, %p83
    %s85 = ssub.s32 %s9, %s16
    %p86 = scmp.eq.s32.totalorder %s85, 0
    %s88 = sadd.s32 %s87, 1
    %s89 = scalar_select %p86, %s87, %s88
    %p92 = pneg %p86
    %p93 = scmp.eq.s32.totalorder %s9, 1
    %p94 = por %p92, %p93
    %p95 = scmp.ne.s32.totalorder %s87, %s90
    %p96 = scmp.eq.s32.totalorder %s9, 0
    %p97 = por %p95, %p96
    %p98 = scmp.ne.s32.totalorder %s87, %s90
    %p99 = scmp.eq.s32.totalorder %s14, 1
    %p100 = por %p98, %p99
    %p101 = scmp.ne.s32.totalorder %s90, %s91
    %p102 = scmp.eq.s32.totalorder %s14, 0
    %p103 = por %p101, %p102
    %p104 = scmp.ne.s32.totalorder %s90, %s91
    %p105 = scmp.eq.s32.totalorder %s15, 1
    %p106 = por %p104, %p105
    %p108 = scmp.ne.s32.totalorder %s91, %s107
    %p109 = scmp.eq.s32.totalorder %s15, 0
    %p110 = por %p108, %p109
    %p111 = scmp.le.s32.totalorder 1, %s9
    %p112 = scmp.lt.s32.totalorder %s9, 3
    %p113 = pnand %p111, %p112
    %p114 = pneg %p113
    // Predicated region
    $region9: #{encoder_forward.6} parent=5 // pred_check
      _
    $region10: #{encoder_forward.6} parent=5 // pred_check_branch
      %116 = sbr.rel (%p113) target = $region12
    $region11: #{encoder_forward.6} parent=5 // pred_region
      %s117 = ssub.s32 %s9, 1
      // Predicated region
      $region13: #{encoder_forward.6} parent=11 // pred_check
        %p118 = pneg %p56
      $region14: #{encoder_forward.6} parent=11 // pred_check_branch
        %120 = sbr.rel (%p118) target = $region16
      $region15: #{encoder_forward.6} parent=11 // pred_region
        _
      $region16: #{encoder_forward.6} parent=11 // pred_fallthru
        _
      // Predicated region
      $region17: #{encoder_forward.6} parent=11 // pred_check
        %p121 = pneg %p77
      $region18: #{encoder_forward.6} parent=11 // pred_check_branch
        %123 = sbr.rel (%p121) target = $region20
      $region19: #{encoder_forward.6} parent=11 // pred_region
        _
      $region20: #{encoder_forward.6} parent=11 // pred_fallthru
        _
    $region12: #{encoder_forward.6} parent=5 // pred_fallthru
      _
    %p124 = scmp.lt.s32.totalorder %s9, 2
    // Predicated region
    $region21: #{encoder_forward.6} parent=5 // pred_check
      %p125 = pneg %p124
    $region22: #{encoder_forward.6} parent=5 // pred_check_branch
      %127 = sbr.rel (%p125) target = $region24
    $region23: #{encoder_forward.6} parent=5 // pred_region
      // Predicated region
      $region25: #{encoder_forward.6} parent=23 // pred_check
        %p128 = pneg %p29
      $region26: #{encoder_forward.6} parent=23 // pred_check_branch
        %130 = sbr.rel (%p128) target = $region28
      $region27: #{encoder_forward.6} parent=23 // pred_region
        %s131 = smul.u32 2, %s9
        %p132 = scmp.lt.s32.totalorder %s131, 3
        %s133 = scalar_select %p132, %s131, 3
        %s134 = smul.addr %s133, 2
        %s135 = smul.addr %s134, 4
        %s136 = scalar_lea.vmem %s0, %s135
        %s137 = smul.u32 2, %s9
      $region28: #{encoder_forward.6} parent=23 // pred_fallthru
        _
    $region24: #{encoder_forward.6} parent=5 // pred_fallthru
      _
    %p138 = scmp.le.s32.totalorder 1, %s9
    %p139 = scmp.lt.s32.totalorder %s9, 3
    %p140 = pnand %p138, %p139
    %p141 = pneg %p140
    // Predicated region
    $region29: #{encoder_forward.6} parent=5 // pred_check
      _
    $region30: #{encoder_forward.6} parent=5 // pred_check_branch
      %143 = sbr.rel (%p140) target = $region32
    $region31: #{encoder_forward.6} parent=5 // pred_region
      %s144 = ssub.s32 %s9, 1
      %s145 = smul.u32 2, %s14
      %p146 = scmp.lt.s32.totalorder %s145, 3
      %s147 = scalar_select %p146, %s145, 3
      %s148 = smul.addr %s147, 2
      %s149 = smul.addr %s148, 4
      %s150 = scalar_lea.vmem %s0, %s149
      %p151 = pneg %p35
      %p152 = pneg %p32
      %p153 = pneg %p56
      %p154 = pneg %p53
      %p155 = pneg %p77
      %p156 = pneg %p74
      %p157 = pneg %p103
      %p158 = pneg %p100
      %s159 = smul.u32 2, %s14
      %p160 = scmp.lt.s32.totalorder %s159, 3
      %s161 = scalar_select %p160, %s159, 3
      %s162 = smul.addr %s161, 8
      %s163 = scalar_lea.vmem %s3, %s162
      %s164 = smul.u32 2, %s14
      %p165 = scmp.lt.s32.totalorder %s164, 3
      %s166 = scalar_select %p165, %s164, 3
      %s167 = smul.addr %s166, 2
      %s168 = smul.addr %s167, 4
      %s169 = scalar_lea.vmem %s0, %s168
      %s170 = smul.u32 2, %s14
      %s171 = smul.u32 2, %s14
      %p172 = scmp.lt.s32.totalorder %s171, 3
      %s173 = scalar_select %p172, %s171, 3
      %s174 = smul.addr %s173, 8
      %s175 = scalar_lea.vmem %s3, %s174
      %s176 = smul.u32 2, %s14
      %v178 = vld [vmem:[%s169] sm:$0xff]
      %v179 = vld [vmem:[%s169 + $0x8] sm:$0xff]
      %v180 = vld [vmem:[%s1] sm:$0xf]
      %v181 = vld [vmem:[%s1 + $0x4] sm:$0xf]
      %v182 = vld [vmem:[%s1 + $0x8] sm:$0xf]
      %v183 = vld [vmem:[%s1 + $0xc] sm:$0xf]
      %v184 = vld [vmem:[%s1 + $0x10] sm:$0xf]
      %v185 = vld [vmem:[%s1 + $0x14] sm:$0xf]
      %v186 = vld [vmem:[%s1 + $0x18] sm:$0xf]
      %v187 = vld [vmem:[%s1 + $0x1c] sm:$0xf]
      %v188 = vld [vmem:[%s1 + $0x20] sm:$0xf]
      %v189 = vld [vmem:[%s1 + $0x24] sm:$0xf]
      %v190 = vld [vmem:[%s1 + $0x28] sm:$0xf]
      %v191 = vld [vmem:[%s1 + $0x2c] sm:$0xf]
      %v192 = vld [vmem:[%s1 + $0x30] sm:$0xf]
      %v193 = vld [vmem:[%s1 + $0x34] sm:$0xf]
      %v194 = vld [vmem:[%s1 + $0x38] sm:$0xf]
      %v195 = vld [vmem:[%s1 + $0x3c] sm:$0xf]
      %v196 = vld [vmem:[%s1 + $0x40] sm:$0xf]
      %v197 = vld [vmem:[%s1 + $0x44] sm:$0xf]
      %v198 = vld [vmem:[%s1 + $0x48] sm:$0xf]
      %v199 = vld [vmem:[%s1 + $0x4c] sm:$0xf]
      %v200 = vld [vmem:[%s1 + $0x50] sm:$0xf]
      %v201 = vld [vmem:[%s1 + $0x54] sm:$0xf]
      %v202 = vld [vmem:[%s1 + $0x58] sm:$0xf]
      %v203 = vld [vmem:[%s1 + $0x5c] sm:$0xf]
      %v204 = vld [vmem:[%s1 + $0x60] sm:$0xf]
      %v205 = vld [vmem:[%s1 + $0x64] sm:$0xf]
      %v206 = vld [vmem:[%s1 + $0x68] sm:$0xf]
      %v207 = vld [vmem:[%s1 + $0x6c] sm:$0xf]
      %v208 = vld [vmem:[%s1 + $0x70] sm:$0xf]
      %v209 = vld [vmem:[%s1 + $0x74] sm:$0xf]
      %v210 = vld [vmem:[%s1 + $0x78] sm:$0xf]
      %v211 = vld [vmem:[%s1 + $0x7c] sm:$0xf]
      %v212 = vld [vmem:[%s2] sm:$0x1]
      %v214 = vlaneseq
      %v215 = vshrl.u32 %v214, 7
      %v216 = vsub.s32 0, %v215
      %v217 = vrot.slane %v212, %v216
      %v221 = vunpack.c.l.b16 %v178
      %v222 = vunpack.c.h.b16 %v178
      %v223 = vunpack.c.l.b16 %v179
      %v224 = vunpack.c.h.b16 %v179
      %v225 = vpack.c.b16 %v223, %v221
      %v226 = vpack.c.b16 %v224, %v222
      %v261 = vunpack.c.l.b16 %v180
      %v262 = vunpack.c.l.b16 %v181
      %v263 = vunpack.c.l.b16 %v182
      %v264 = vunpack.c.l.b16 %v183
      %v265 = vunpack.c.l.b16 %v184
      %v266 = vunpack.c.l.b16 %v185
      %v267 = vunpack.c.l.b16 %v186
      %v268 = vunpack.c.l.b16 %v187
      %v269 = vunpack.c.l.b16 %v188
      %v270 = vunpack.c.l.b16 %v189
      %v271 = vunpack.c.l.b16 %v190
      %v272 = vunpack.c.l.b16 %v191
      %v273 = vunpack.c.l.b16 %v192
      %v274 = vunpack.c.l.b16 %v193
      %v275 = vunpack.c.l.b16 %v194
      %v276 = vunpack.c.l.b16 %v195
      %v277 = vunpack.c.l.b16 %v196
      %v278 = vunpack.c.l.b16 %v197
      %v279 = vunpack.c.l.b16 %v198
      %v280 = vunpack.c.l.b16 %v199
      %v281 = vunpack.c.l.b16 %v200
      %v282 = vunpack.c.l.b16 %v201
      %v283 = vunpack.c.l.b16 %v202
      %v284 = vunpack.c.l.b16 %v203
      %v285 = vunpack.c.l.b16 %v204
      %v286 = vunpack.c.l.b16 %v205
      %v287 = vunpack.c.l.b16 %v206
      %v288 = vunpack.c.l.b16 %v207
      %v289 = vunpack.c.l.b16 %v208
      %v290 = vunpack.c.l.b16 %v209
      %v291 = vunpack.c.l.b16 %v210
      %v292 = vunpack.c.l.b16 %v211
      %v293 = vpack.c.b16 %v262, %v261
      %v294 = vpack.c.b16 %v264, %v263
      %v295 = vpack.c.b16 %v266, %v265
      %v296 = vpack.c.b16 %v268, %v267
      %v297 = vpack.c.b16 %v270, %v269
      %v298 = vpack.c.b16 %v272, %v271
      %v299 = vpack.c.b16 %v274, %v273
      %v300 = vpack.c.b16 %v276, %v275
      %v301 = vpack.c.b16 %v278, %v277
      %v302 = vpack.c.b16 %v280, %v279
      %v303 = vpack.c.b16 %v282, %v281
      %v304 = vpack.c.b16 %v284, %v283
      %v305 = vpack.c.b16 %v286, %v285
      %v306 = vpack.c.b16 %v288, %v287
      %v307 = vpack.c.b16 %v290, %v289
      %v308 = vpack.c.b16 %v292, %v291
      %325 = vmatprep.subr.bf16.mxu0 0
      %326 = vmatpush1.bf16.msra.mxu0 %v300
      %327 = vmatprep.subr.bf16.mxu0 0
      %328 = vmatpush1.bf16.msra.mxu0 %v299
      %329 = vmatprep.subr.bf16.mxu0 0
      %330 = vmatpush1.bf16.msra.mxu0 %v298
      %331 = vmatprep.subr.bf16.mxu0 0
      %332 = vmatpush1.bf16.msra.mxu0 %v297
      %333 = vmatprep.subr.bf16.mxu0 0
      %334 = vmatpush1.bf16.msra.mxu0 %v296
      %335 = vmatprep.subr.bf16.mxu0 0
      %336 = vmatpush1.bf16.msra.mxu0 %v295
      %337 = vmatprep.subr.bf16.mxu0 0
      %338 = vmatpush1.bf16.msra.mxu0 %v294
      %339 = vmatprep.subr.bf16.mxu0 0
      %340 = vmatpush1.bf16.msra.mxu0 %v293
      %341 = vmatprep.subr.bf16.mxu0 0
      %342 = vmatpush2.bf16.msra.mxu0 %v308
      %343 = vmatprep.subr.bf16.mxu0 0
      %344 = vmatpush2.bf16.msra.mxu0 %v307
      %345 = vmatprep.subr.bf16.mxu0 0
      %346 = vmatpush2.bf16.msra.mxu0 %v306
      %347 = vmatprep.subr.bf16.mxu0 0
      %348 = vmatpush2.bf16.msra.mxu0 %v305
      %349 = vmatprep.subr.bf16.mxu0 0
      %350 = vmatpush2.bf16.msra.mxu0 %v304
      %351 = vmatprep.subr.bf16.mxu0 0
      %352 = vmatpush2.bf16.msra.mxu0 %v303
      %353 = vmatprep.subr.bf16.mxu0 0
      %354 = vmatpush2.bf16.msra.mxu0 %v302
      %355 = vmatprep.subr.bf16.mxu0 0
      %356 = vmatpush2.bf16.msra.mxu0 %v301
      %357 = vmatprep.mubr.bf16.mxu0 %v226
      %358 = vmatmul.mubr.bf16.gmra.mxu0 %v225
      %v359 = vpop.f32.mrf.mxu0
      %v360 = vadd.f32 %v217, %v359
      %v361 = vpop.f32.mrf.mxu0
      %v362 = vpop.f32.mrf.mxu0
      %v363 = vadd.f32 %v217, %v362
      %v364 = vpop.f32.mrf.mxu0
      %365 = vdwg.mxu0
      %v366 = vmax.f32 %v360, 0.0
      %v367 = vmax.f32 %v363, 0.0
      %vm368 = vcmask 261120
      %369 = vst.msk [vmem:[%s175] sm:$0xff] %vm368, %v366
      %370 = vst.msk [vmem:[%s175 + $0x8] sm:$0xff] %vm368, %v367
      %s371 = smul.u32 2, %s14
      %p372 = scmp.lt.s32.totalorder %s371, 3
      %s373 = scalar_select %p372, %s371, 3
      %s374 = smul.addr %s373, 8
      %s375 = scalar_lea.vmem %s3, %s374
      // Predicated region
      $region33: #{encoder_forward.6} parent=31 // pred_check
        %p376 = pneg %p100
      $region34: #{encoder_forward.6} parent=31 // pred_check_branch
        %378 = sbr.rel (%p376) target = $region36
      $region35: #{encoder_forward.6} parent=31 // pred_region
        %s379 = smul.u32 2, %s14
      $region36: #{encoder_forward.6} parent=31 // pred_fallthru
        _
    $region32: #{encoder_forward.6} parent=5 // pred_fallthru
      _
    %p380 = scmp.le.s32.totalorder 2, %s9
    // Predicated region
    $region37: #{encoder_forward.6} parent=5 // pred_check
      %p381 = pneg %p380
    $region38: #{encoder_forward.6} parent=5 // pred_check_branch
      %383 = sbr.rel (%p381) target = $region40
    $region39: #{encoder_forward.6} parent=5 // pred_region
      %s384 = ssub.s32 %s9, 2
      // Predicated region
      $region41: #{encoder_forward.6} parent=39 // pred_check
        %p385 = pneg %p106
      $region42: #{encoder_forward.6} parent=39 // pred_check_branch
        %387 = sbr.rel (%p385) target = $region44
      $region43: #{encoder_forward.6} parent=39 // pred_region
        %s388 = smul.u32 2, %s15
        %p389 = scmp.lt.s32.totalorder %s388, 3
        %s390 = scalar_select %p389, %s388, 3
        %s391 = smul.addr %s390, 8
        %s392 = scalar_lea.vmem %s3, %s391
      $region44: #{encoder_forward.6} parent=39 // pred_fallthru
        _
    $region40: #{encoder_forward.6} parent=5 // pred_fallthru
      _
  $region6: #{encoder_forward.6} parent=0 // loop_footer
    %s13 = sadd.s32 1, %s9
  $region7: #{encoder_forward.6} parent=0 // loop_footer_branch
    %8 = sbr.rel target = $region3
  $region8: #{encoder_forward.6} parent=0 // loop_exit
    _

// kernel: encoder_forward.7
$region0: #{encoder_forward.7}
  #allocation0 [shape = 'u32[]', space=smem, size = 0x4, offset = 0x4, fixed_abs, tag = 'smem constant byte address 0x4 - core index']
  #allocation1 [shape = 'u32[144,128]{1,0:T(1,128)}', space=vmem, size = 0x12000, scoped, tag = 'internal scratch']
  %s0 = inlined_call_operand.vmem [shape: bf16[3,48,32], index: 0, kind: input, shape index: {}]
  %s1 = inlined_call_operand.vmem [shape: bf16[9,32,32], index: 1, kind: input, shape index: {}]
  %s2 = inlined_call_operand.vmem [shape: f32[1,32], index: 2, kind: input, shape index: {}]
  %s3 = inlined_call_operand.vmem [shape: f32[48,32], index: 3, kind: output, shape index: {}]
  %s4 = sld [smem:[#allocation0]]
  $region22: #{encoder_forward.7} parent=0
    _
  %s6 = ssub.s32 1, %s4
  %s7 = scalar_select 0, %s6, %s4
  // Predicated region
  $region2: #{encoder_forward.7} parent=0 // pred_check
    _
  $region3: #{encoder_forward.7} parent=0 // pred_check_branch
    %9 = sbr.rel (0) target = $region5
  $region4: #{encoder_forward.7} parent=0 // pred_region
    _
  $region5: #{encoder_forward.7} parent=0 // pred_fallthru
    _
  // Predicated region
  $region6: #{encoder_forward.7} parent=0 // pred_check
    _
  $region7: #{encoder_forward.7} parent=0 // pred_check_branch
    %11 = sbr.rel (0) target = $region9
  $region8: #{encoder_forward.7} parent=0 // pred_region
    _
  $region9: #{encoder_forward.7} parent=0 // pred_fallthru
    _
  // Predicated region
  $region10: #{encoder_forward.7} parent=0 // pred_check
    _
  $region11: #{encoder_forward.7} parent=0 // pred_check_branch
    %13 = sbr.rel (0) target = $region13
  $region12: #{encoder_forward.7} parent=0 // pred_region
    _
  $region13: #{encoder_forward.7} parent=0 // pred_fallthru
    _
  %v15 = vld [vmem:[%s0] sm:$0xf]
  %v16 = vld [vmem:[%s0 + $0x4] sm:$0xf]
  %v17 = vld [vmem:[%s0 + $0x8] sm:$0xf]
  %v18 = vld [vmem:[%s0 + $0xc] sm:$0xf]
  %v19 = vld [vmem:[%s0 + $0x10] sm:$0xf]
  %v20 = vld [vmem:[%s0 + $0x14] sm:$0xf]
  %v21 = vld [vmem:[%s1] sm:$0xf]
  %v22 = vld [vmem:[%s1 + $0x4] sm:$0xf]
  %v23 = vld [vmem:[%s1 + $0x8] sm:$0xf]
  %v24 = vld [vmem:[%s1 + $0xc] sm:$0xf]
  %s25 = scalar_lea.vmem %s1, 16
  %v26 = vld [vmem:[%s25] sm:$0xf]
  %v27 = vld [vmem:[%s25 + $0x4] sm:$0xf]
  %v28 = vld [vmem:[%s25 + $0x8] sm:$0xf]
  %v29 = vld [vmem:[%s25 + $0xc] sm:$0xf]
  %v36 = vunpack.c.l.b16 %v15
  %v37 = vunpack.c.l.b16 %v16
  %v38 = vunpack.c.l.b16 %v17
  %v39 = vunpack.c.l.b16 %v18
  %v40 = vunpack.c.l.b16 %v19
  %v41 = vunpack.c.l.b16 %v20
  %v42 = vpack.c.b16 %v37, %v36
  %v43 = vpack.c.b16 %v39, %v38
  %v44 = vpack.c.b16 %v41, %v40
  %v49 = vunpack.c.l.b16 %v26
  %v50 = vunpack.c.l.b16 %v27
  %v51 = vunpack.c.l.b16 %v28
  %v52 = vunpack.c.l.b16 %v29
  %v53 = vpack.c.b16 %v50, %v49
  %v54 = vpack.c.b16 %v52, %v51
  %vm57 = vcmask 261120
  %v59 = vsel %vm57, %v42, 0
  %v62 = vsel %vm57, %v43, 0
  %v65 = vsel %vm57, %v44, 0
  %67 = vmatprep.subr.bf16.mxu0 0
  %68 = vmatpush1.bf16.msra.mxu0 0
  %69 = vmatprep.subr.bf16.mxu0 0
  %70 = vmatpush1.bf16.msra.mxu0 0
  %71 = vmatprep.subr.bf16.mxu0 0
  %72 = vmatpush1.bf16.msra.mxu0 0
  %73 = vmatprep.subr.bf16.mxu0 0
  %74 = vmatpush1.bf16.msra.mxu0 0
  %75 = vmatprep.subr.bf16.mxu0 0
  %76 = vmatpush1.bf16.msra.mxu0 0
  %77 = vmatprep.subr.bf16.mxu0 0
  %78 = vmatpush1.bf16.msra.mxu0 0
  %79 = vmatprep.subr.bf16.mxu0 0
  %80 = vmatpush1.bf16.msra.mxu0 %v54
  %81 = vmatprep.subr.bf16.mxu0 0
  %82 = vmatpush1.bf16.msra.mxu0 %v53
  %83 = vmatprep.subr.bf16.mxu0 0
  %84 = vmatpush2.bf16.msra.mxu0 0
  %85 = vmatprep.subr.bf16.mxu0 0
  %86 = vmatpush2.bf16.msra.mxu0 0
  %87 = vmatprep.subr.bf16.mxu0 0
  %88 = vmatpush2.bf16.msra.mxu0 0
  %89 = vmatprep.subr.bf16.mxu0 0
  %90 = vmatpush2.bf16.msra.mxu0 0
  %91 = vmatprep.subr.bf16.mxu0 0
  %92 = vmatpush2.bf16.msra.mxu0 0
  %93 = vmatprep.subr.bf16.mxu0 0
  %94 = vmatpush2.bf16.msra.mxu0 0
  %95 = vmatprep.subr.bf16.mxu0 0
  %96 = vmatpush2.bf16.msra.mxu0 0
  %97 = vmatprep.subr.bf16.mxu0 0
  %98 = vmatpush2.bf16.msra.mxu0 0
  %99 = vmatprep.mubr.bf16.mxu0 0
  %100 = vmatmul.mubr.bf16.gmra.mxu0 %v59
  %v101 = vpop.f32.mrf.mxu0
  %v102 = vadd.f32 0.0, %v101
  %v103 = vpop.f32.mrf.mxu0
  %v104 = vpop.f32.mrf.mxu0
  %v105 = vadd.f32 0.0, %v104
  %v106 = vpop.f32.mrf.mxu0
  %107 = vmatprep.mubr.bf16.mxu0 0
  %108 = vmatmul.mubr.bf16.gmra.mxu0 %v62
  %v109 = vpop.f32.mrf.mxu0
  %v110 = vadd.f32 0.0, %v109
  %v111 = vpop.f32.mrf.mxu0
  %v112 = vpop.f32.mrf.mxu0
  %v113 = vadd.f32 0.0, %v112
  %v114 = vpop.f32.mrf.mxu0
  %115 = vmatprep.mubr.bf16.mxu0 0
  %116 = vmatmul.mubr.bf16.gmra.mxu0 %v65
  %v117 = vpop.f32.mrf.mxu0
  %v118 = vadd.f32 0.0, %v117
  %v119 = vpop.f32.mrf.mxu0
  %v120 = vpop.f32.mrf.mxu0
  %v121 = vadd.f32 0.0, %v120
  %v122 = vpop.f32.mrf.mxu0
  %123 = vdwg.mxu0
  %vm130 = vcmask 1046528
  %v131 = vrot.slane %v102, 1
  %v132 = vrot.slane %v105, 1
  %v133 = vsel %vm130, %v131, %v132
  %v134 = vrot.slane %v110, 1
  %v135 = vsel %vm130, %v132, %v134
  %v136 = vrot.slane %v113, 1
  %v137 = vsel %vm130, %v134, %v136
  %v138 = vrot.slane %v118, 1
  %v139 = vsel %vm130, %v136, %v138
  %v140 = vrot.slane %v121, 1
  %v141 = vsel %vm130, %v138, %v140
  %v148 = vsel %vm130, %v140, 0.0
  %v153 = vunpack.c.l.b16 %v21
  %v154 = vunpack.c.l.b16 %v22
  %v155 = vunpack.c.l.b16 %v23
  %v156 = vunpack.c.l.b16 %v24
  %v157 = vpack.c.b16 %v154, %v153
  %v158 = vpack.c.b16 %v156, %v155
  %161 = vmatprep.subr.bf16.mxu0 0
  %162 = vmatpush1.bf16.msra.mxu0 0
  %163 = vmatprep.subr.bf16.mxu0 0
  %164 = vmatpush1.bf16.msra.mxu0 0
  %165 = vmatprep.subr.bf16.mxu0 0
  %166 = vmatpush1.bf16.msra.mxu0 0
  %167 = vmatprep.subr.bf16.mxu0 0
  %168 = vmatpush1.bf16.msra.mxu0 0
  %169 = vmatprep.subr.bf16.mxu0 0
  %170 = vmatpush1.bf16.msra.mxu0 0
  %171 = vmatprep.subr.bf16.mxu0 0
  %172 = vmatpush1.bf16.msra.mxu0 0
  %173 = vmatprep.subr.bf16.mxu0 0
  %174 = vmatpush1.bf16.msra.mxu0 %v158
  %175 = vmatprep.subr.bf16.mxu0 0
  %176 = vmatpush1.bf16.msra.mxu0 %v157
  %177 = vmatprep.subr.bf16.mxu0 0
  %178 = vmatpush2.bf16.msra.mxu0 0
  %179 = vmatprep.subr.bf16.mxu0 0
  %180 = vmatpush2.bf16.msra.mxu0 0
  %181 = vmatprep.subr.bf16.mxu0 0
  %182 = vmatpush2.bf16.msra.mxu0 0
  %183 = vmatprep.subr.bf16.mxu0 0
  %184 = vmatpush2.bf16.msra.mxu0 0
  %185 = vmatprep.subr.bf16.mxu0 0
  %186 = vmatpush2.bf16.msra.mxu0 0
  %187 = vmatprep.subr.bf16.mxu0 0
  %188 = vmatpush2.bf16.msra.mxu0 0
  %189 = vmatprep.subr.bf16.mxu0 0
  %190 = vmatpush2.bf16.msra.mxu0 0
  %191 = vmatprep.subr.bf16.mxu0 0
  %192 = vmatpush2.bf16.msra.mxu0 0
  %193 = vmatprep.mubr.bf16.mxu0 0
  %194 = vmatmul.mubr.bf16.gmra.mxu0 %v59
  %v195 = vpop.f32.mrf.mxu0
  %v196 = vadd.f32 %v133, %v195
  %v197 = vpop.f32.mrf.mxu0
  %v198 = vpop.f32.mrf.mxu0
  %v199 = vadd.f32 %v135, %v198
  %v200 = vpop.f32.mrf.mxu0
  %201 = vmatprep.mubr.bf16.mxu0 0
  %202 = vmatmul.mubr.bf16.gmra.mxu0 %v62
  %v203 = vpop.f32.mrf.mxu0
  %v204 = vadd.f32 %v137, %v203
  %v205 = vpop.f32.mrf.mxu0
  %v206 = vpop.f32.mrf.mxu0
  %v207 = vadd.f32 %v139, %v206
  %v208 = vpop.f32.mrf.mxu0
  %209 = vmatprep.mubr.bf16.mxu0 0
  %210 = vmatmul.mubr.bf16.gmra.mxu0 %v65
  %v211 = vpop.f32.mrf.mxu0
  %v212 = vadd.f32 %v141, %v211
  %v213 = vpop.f32.mrf.mxu0
  %v214 = vpop.f32.mrf.mxu0
  %v215 = vadd.f32 %v148, %v214
  %v216 = vpop.f32.mrf.mxu0
  %217 = vdwg.mxu0
  %s218 = scalar_lea.vmem %s1, 32
  %v219 = vld [vmem:[%s218] sm:$0xf]
  %v220 = vld [vmem:[%s218 + $0x4] sm:$0xf]
  %v221 = vld [vmem:[%s218 + $0x8] sm:$0xf]
  %v222 = vld [vmem:[%s218 + $0xc] sm:$0xf]
  %v227 = vunpack.c.l.b16 %v219
  %v228 = vunpack.c.l.b16 %v220
  %v229 = vunpack.c.l.b16 %v221
  %v230 = vunpack.c.l.b16 %v222
  %v231 = vpack.c.b16 %v228, %v227
  %v232 = vpack.c.b16 %v230, %v229
  %235 = vmatprep.subr.bf16.mxu0 0
  %236 = vmatpush1.bf16.msra.mxu0 0
  %237 = vmatprep.subr.bf16.mxu0 0
  %238 = vmatpush1.bf16.msra.mxu0 0
  %239 = vmatprep.subr.bf16.mxu0 0
  %240 = vmatpush1.bf16.msra.mxu0 0
  %241 = vmatprep.subr.bf16.mxu0 0
  %242 = vmatpush1.bf16.msra.mxu0 0
  %243 = vmatprep.subr.bf16.mxu0 0
  %244 = vmatpush1.bf16.msra.mxu0 0
  %245 = vmatprep.subr.bf16.mxu0 0
  %246 = vmatpush1.bf16.msra.mxu0 0
  %247 = vmatprep.subr.bf16.mxu0 0
  %248 = vmatpush1.bf16.msra.mxu0 %v232
  %249 = vmatprep.subr.bf16.mxu0 0
  %250 = vmatpush1.bf16.msra.mxu0 %v231
  %251 = vmatprep.subr.bf16.mxu0 0
  %252 = vmatpush2.bf16.msra.mxu0 0
  %253 = vmatprep.subr.bf16.mxu0 0
  %254 = vmatpush2.bf16.msra.mxu0 0
  %255 = vmatprep.subr.bf16.mxu0 0
  %256 = vmatpush2.bf16.msra.mxu0 0
  %257 = vmatprep.subr.bf16.mxu0 0
  %258 = vmatpush2.bf16.msra.mxu0 0
  %259 = vmatprep.subr.bf16.mxu0 0
  %260 = vmatpush2.bf16.msra.mxu0 0
  %261 = vmatprep.subr.bf16.mxu0 0
  %262 = vmatpush2.bf16.msra.mxu0 0
  %263 = vmatprep.subr.bf16.mxu0 0
  %264 = vmatpush2.bf16.msra.mxu0 0
  %265 = vmatprep.subr.bf16.mxu0 0
  %266 = vmatpush2.bf16.msra.mxu0 0
  %267 = vmatprep.mubr.bf16.mxu0 0
  %268 = vmatmul.mubr.bf16.gmra.mxu0 %v59
  %v269 = vpop.f32.mrf.mxu0
  %v270 = vadd.f32 0.0, %v269
  %v271 = vpop.f32.mrf.mxu0
  %v272 = vpop.f32.mrf.mxu0
  %v273 = vadd.f32 0.0, %v272
  %v274 = vpop.f32.mrf.mxu0
  %275 = vmatprep.mubr.bf16.mxu0 0
  %276 = vmatmul.mubr.bf16.gmra.mxu0 %v62
  %v277 = vpop.f32.mrf.mxu0
  %v278 = vadd.f32 0.0, %v277
  %v279 = vpop.f32.mrf.mxu0
  %v280 = vpop.f32.mrf.mxu0
  %v281 = vadd.f32 0.0, %v280
  %v282 = vpop.f32.mrf.mxu0
  %283 = vmatprep.mubr.bf16.mxu0 0
  %284 = vmatmul.mubr.bf16.gmra.mxu0 %v65
  %v285 = vpop.f32.mrf.mxu0
  %v286 = vadd.f32 0.0, %v285
  %v287 = vpop.f32.mrf.mxu0
  %v288 = vpop.f32.mrf.mxu0
  %v289 = vadd.f32 0.0, %v288
  %v290 = vpop.f32.mrf.mxu0
  %291 = vdwg.mxu0
  %vm298 = vcmask 1045504
  %v299 = vrot.slane %v270, 2
  %v300 = vrot.slane %v273, 2
  %v301 = vsel %vm298, %v299, %v300
  %v302 = vrot.slane %v278, 2
  %v303 = vsel %vm298, %v300, %v302
  %v304 = vrot.slane %v281, 2
  %v305 = vsel %vm298, %v302, %v304
  %v306 = vrot.slane %v286, 2
  %v307 = vsel %vm298, %v304, %v306
  %v308 = vrot.slane %v289, 2
  %v309 = vsel %vm298, %v306, %v308
  %v316 = vsel %vm298, %v308, 0.0
  %v317 = vadd.f32 %v196, %v301
  %v318 = vadd.f32 %v199, %v303
  %v319 = vadd.f32 %v204, %v305
  %v320 = vadd.f32 %v207, %v307
  %v321 = vadd.f32 %v212, %v309
  %v322 = vadd.f32 %v215, %v316
  %s323 = scalar_lea.vmem %s0, 24
  %v324 = vld [vmem:[%s323] sm:$0xf]
  %v325 = vld [vmem:[%s323 + $0x4] sm:$0xf]
  %v326 = vld [vmem:[%s323 + $0x8] sm:$0xf]
  %v327 = vld [vmem:[%s323 + $0xc] sm:$0xf]
  %v328 = vld [vmem:[%s323 + $0x10] sm:$0xf]
  %v329 = vld [vmem:[%s323 + $0x14] sm:$0xf]
  %s330 = scalar_lea.vmem %s1, 48
  %v331 = vld [vmem:[%s330] sm:$0xf]
  %v332 = vld [vmem:[%s330 + $0x4] sm:$0xf]
  %v333 = vld [vmem:[%s330 + $0x8] sm:$0xf]
  %v334 = vld [vmem:[%s330 + $0xc] sm:$0xf]
  %v341 = vunpack.c.l.b16 %v324
  %v342 = vunpack.c.l.b16 %v325
  %v343 = vunpack.c.l.b16 %v326
  %v344 = vunpack.c.l.b16 %v327
  %v345 = vunpack.c.l.b16 %v328
  %v346 = vunpack.c.l.b16 %v329
  %v347 = vpack.c.b16 %v342, %v341
  %v348 = vpack.c.b16 %v344, %v343
  %v349 = vpack.c.b16 %v346, %v345
  %v354 = vunpack.c.l.b16 %v331
  %v355 = vunpack.c.l.b16 %v332
  %v356 = vunpack.c.l.b16 %v333
  %v357 = vunpack.c.l.b16 %v334
  %v358 = vpack.c.b16 %v355, %v354
  %v359 = vpack.c.b16 %v357, %v356
  %v363 = vsel %vm57, %v347, 0
  %v366 = vsel %vm57, %v348, 0
  %v369 = vsel %vm57, %v349, 0
  %371 = vmatprep.subr.bf16.mxu0 0
  %372 = vmatpush1.bf16.msra.mxu0 0
  %373 = vmatprep.subr.bf16.mxu0 0
  %374 = vmatpush1.bf16.msra.mxu0 0
  %375 = vmatprep.subr.bf16.mxu0 0
  %376 = vmatpush1.bf16.msra.mxu0 0
  %377 = vmatprep.subr.bf16.mxu0 0
  %378 = vmatpush1.bf16.msra.mxu0 0
  %379 = vmatprep.subr.bf16.mxu0 0
  %380 = vmatpush1.bf16.msra.mxu0 0
  %381 = vmatprep.subr.bf16.mxu0 0
  %382 = vmatpush1.bf16.msra.mxu0 0
  %383 = vmatprep.subr.bf16.mxu0 0
  %384 = vmatpush1.bf16.msra.mxu0 %v359
  %385 = vmatprep.subr.bf16.mxu0 0
  %386 = vmatpush1.bf16.msra.mxu0 %v358
  %387 = vmatprep.subr.bf16.mxu0 0
  %388 = vmatpush2.bf16.msra.mxu0 0
  %389 = vmatprep.subr.bf16.mxu0 0
  %390 = vmatpush2.bf16.msra.mxu0 0
  %391 = vmatprep.subr.bf16.mxu0 0
  %392 = vmatpush2.bf16.msra.mxu0 0
  %393 = vmatprep.subr.bf16.mxu0 0
  %394 = vmatpush2.bf16.msra.mxu0 0
  %395 = vmatprep.subr.bf16.mxu0 0
  %396 = vmatpush2.bf16.msra.mxu0 0
  %397 = vmatprep.subr.bf16.mxu0 0
  %398 = vmatpush2.bf16.msra.mxu0 0
  %399 = vmatprep.subr.bf16.mxu0 0
  %400 = vmatpush2.bf16.msra.mxu0 0
  %401 = vmatprep.subr.bf16.mxu0 0
  %402 = vmatpush2.bf16.msra.mxu0 0
  %403 = vmatprep.mubr.bf16.mxu0 0
  %404 = vmatmul.mubr.bf16.gmra.mxu0 %v363
  %v405 = vpop.f32.mrf.mxu0
  %v406 = vadd.f32 0.0, %v405
  %v407 = vpop.f32.mrf.mxu0
  %v408 = vpop.f32.mrf.mxu0
  %v409 = vadd.f32 0.0, %v408
  %v410 = vpop.f32.mrf.mxu0
  %411 = vmatprep.mubr.bf16.mxu0 0
  %412 = vmatmul.mubr.bf16.gmra.mxu0 %v366
  %v413 = vpop.f32.mrf.mxu0
  %v414 = vadd.f32 0.0, %v413
  %v415 = vpop.f32.mrf.mxu0
  %v416 = vpop.f32.mrf.mxu0
  %v417 = vadd.f32 0.0, %v416
  %v418 = vpop.f32.mrf.mxu0
  %419 = vmatprep.mubr.bf16.mxu0 0
  %420 = vmatmul.mubr.bf16.gmra.mxu0 %v369
  %v421 = vpop.f32.mrf.mxu0
  %v422 = vadd.f32 0.0, %v421
  %v423 = vpop.f32.mrf.mxu0
  %v424 = vpop.f32.mrf.mxu0
  %v425 = vadd.f32 0.0, %v424
  %v426 = vpop.f32.mrf.mxu0
  %427 = vdwg.mxu0
  %v428 = vadd.f32 %v317, %v406
  %v429 = vadd.f32 %v318, %v409
  %v430 = vadd.f32 %v319, %v414
  %v431 = vadd.f32 %v320, %v417
  %v432 = vadd.f32 %v321, %v422
  %v433 = vadd.f32 %v322, %v425
  %s434 = scalar_lea.vmem %s1, 64
  %v435 = vld [vmem:[%s434] sm:$0xf]
  %v436 = vld [vmem:[%s434 + $0x4] sm:$0xf]
  %v437 = vld [vmem:[%s434 + $0x8] sm:$0xf]
  %v438 = vld [vmem:[%s434 + $0xc] sm:$0xf]
  %v443 = vunpack.c.l.b16 %v435
  %v444 = vunpack.c.l.b16 %v436
  %v445 = vunpack.c.l.b16 %v437
  %v446 = vunpack.c.l.b16 %v438
  %v447 = vpack.c.b16 %v444, %v443
  %v448 = vpack.c.b16 %v446, %v445
  %451 = vmatprep.subr.bf16.mxu0 0
  %452 = vmatpush1.bf16.msra.mxu0 0
  %453 = vmatprep.subr.bf16.mxu0 0
  %454 = vmatpush1.bf16.msra.mxu0 0
  %455 = vmatprep.subr.bf16.mxu0 0
  %456 = vmatpush1.bf16.msra.mxu0 0
  %457 = vmatprep.subr.bf16.mxu0 0
  %458 = vmatpush1.bf16.msra.mxu0 0
  %459 = vmatprep.subr.bf16.mxu0 0
  %460 = vmatpush1.bf16.msra.mxu0 0
  %461 = vmatprep.subr.bf16.mxu0 0
  %462 = vmatpush1.bf16.msra.mxu0 0
  %463 = vmatprep.subr.bf16.mxu0 0
  %464 = vmatpush1.bf16.msra.mxu0 %v448
  %465 = vmatprep.subr.bf16.mxu0 0
  %466 = vmatpush1.bf16.msra.mxu0 %v447
  %467 = vmatprep.subr.bf16.mxu0 0
  %468 = vmatpush2.bf16.msra.mxu0 0
  %469 = vmatprep.subr.bf16.mxu0 0
  %470 = vmatpush2.bf16.msra.mxu0 0
  %471 = vmatprep.subr.bf16.mxu0 0
  %472 = vmatpush2.bf16.msra.mxu0 0
  %473 = vmatprep.subr.bf16.mxu0 0
  %474 = vmatpush2.bf16.msra.mxu0 0
  %475 = vmatprep.subr.bf16.mxu0 0
  %476 = vmatpush2.bf16.msra.mxu0 0
  %477 = vmatprep.subr.bf16.mxu0 0
  %478 = vmatpush2.bf16.msra.mxu0 0
  %479 = vmatprep.subr.bf16.mxu0 0
  %480 = vmatpush2.bf16.msra.mxu0 0
  %481 = vmatprep.subr.bf16.mxu0 0
  %482 = vmatpush2.bf16.msra.mxu0 0
  %483 = vmatprep.mubr.bf16.mxu0 0
  %484 = vmatmul.mubr.bf16.gmra.mxu0 %v363
  %v485 = vpop.f32.mrf.mxu0
  %v486 = vadd.f32 0.0, %v485
  %v487 = vpop.f32.mrf.mxu0
  %v488 = vpop.f32.mrf.mxu0
  %v489 = vadd.f32 0.0, %v488
  %v490 = vpop.f32.mrf.mxu0
  %491 = vmatprep.mubr.bf16.mxu0 0
  %492 = vmatmul.mubr.bf16.gmra.mxu0 %v366
  %v493 = vpop.f32.mrf.mxu0
  %v494 = vadd.f32 0.0, %v493
  %v495 = vpop.f32.mrf.mxu0
  %v496 = vpop.f32.mrf.mxu0
  %v497 = vadd.f32 0.0, %v496
  %v498 = vpop.f32.mrf.mxu0
  %499 = vmatprep.mubr.bf16.mxu0 0
  %500 = vmatmul.mubr.bf16.gmra.mxu0 %v369
  %v501 = vpop.f32.mrf.mxu0
  %v502 = vadd.f32 0.0, %v501
  %v503 = vpop.f32.mrf.mxu0
  %v504 = vpop.f32.mrf.mxu0
  %v505 = vadd.f32 0.0, %v504
  %v506 = vpop.f32.mrf.mxu0
  %507 = vdwg.mxu0
  %v514 = vrot.slane %v486, 1
  %v515 = vrot.slane %v489, 1
  %v516 = vsel %vm130, %v514, %v515
  %v517 = vrot.slane %v494, 1
  %v518 = vsel %vm130, %v515, %v517
  %v519 = vrot.slane %v497, 1
  %v520 = vsel %vm130, %v517, %v519
  %v521 = vrot.slane %v502, 1
  %v522 = vsel %vm130, %v519, %v521
  %v523 = vrot.slane %v505, 1
  %v524 = vsel %vm130, %v521, %v523
  %v531 = vsel %vm130, %v523, 0.0
  %v532 = vadd.f32 %v428, %v516
  %v533 = vadd.f32 %v429, %v518
  %v534 = vadd.f32 %v430, %v520
  %v535 = vadd.f32 %v431, %v522
  %v536 = vadd.f32 %v432, %v524
  %v537 = vadd.f32 %v433, %v531
  %s538 = scalar_lea.vmem %s1, 80
  %v539 = vld [vmem:[%s538] sm:$0xf]
  %v540 = vld [vmem:[%s538 + $0x4] sm:$0xf]
  %v541 = vld [vmem:[%s538 + $0x8] sm:$0xf]
  %v542 = vld [vmem:[%s538 + $0xc] sm:$0xf]
  %v547 = vunpack.c.l.b16 %v539
  %v548 = vunpack.c.l.b16 %v540
  %v549 = vunpack.c.l.b16 %v541
  %v550 = vunpack.c.l.b16 %v542
  %v551 = vpack.c.b16 %v548, %v547
  %v552 = vpack.c.b16 %v550, %v549
  %555 = vmatprep.subr.bf16.mxu0 0
  %556 = vmatpush1.bf16.msra.mxu0 0
  %557 = vmatprep.subr.bf16.mxu0 0
  %558 = vmatpush1.bf16.msra.mxu0 0
  %559 = vmatprep.subr.bf16.mxu0 0
  %560 = vmatpush1.bf16.msra.mxu0 0
  %561 = vmatprep.subr.bf16.mxu0 0
  %562 = vmatpush1.bf16.msra.mxu0 0
  %563 = vmatprep.subr.bf16.mxu0 0
  %564 = vmatpush1.bf16.msra.mxu0 0
  %565 = vmatprep.subr.bf16.mxu0 0
  %566 = vmatpush1.bf16.msra.mxu0 0
  %567 = vmatprep.subr.bf16.mxu0 0
  %568 = vmatpush1.bf16.msra.mxu0 %v552
  %569 = vmatprep.subr.bf16.mxu0 0
  %570 = vmatpush1.bf16.msra.mxu0 %v551
  %571 = vmatprep.subr.bf16.mxu0 0
  %572 = vmatpush2.bf16.msra.mxu0 0
  %573 = vmatprep.subr.bf16.mxu0 0
  %574 = vmatpush2.bf16.msra.mxu0 0
  %575 = vmatprep.subr.bf16.mxu0 0
  %576 = vmatpush2.bf16.msra.mxu0 0
  %577 = vmatprep.subr.bf16.mxu0 0
  %578 = vmatpush2.bf16.msra.mxu0 0
  %579 = vmatprep.subr.bf16.mxu0 0
  %580 = vmatpush2.bf16.msra.mxu0 0
  %581 = vmatprep.subr.bf16.mxu0 0
  %582 = vmatpush2.bf16.msra.mxu0 0
  %583 = vmatprep.subr.bf16.mxu0 0
  %584 = vmatpush2.bf16.msra.mxu0 0
  %585 = vmatprep.subr.bf16.mxu0 0
  %586 = vmatpush2.bf16.msra.mxu0 0
  %587 = vmatprep.mubr.bf16.mxu0 0
  %588 = vmatmul.mubr.bf16.gmra.mxu0 %v363
  %v589 = vpop.f32.mrf.mxu0
  %v590 = vadd.f32 0.0, %v589
  %v591 = vpop.f32.mrf.mxu0
  %v592 = vpop.f32.mrf.mxu0
  %v593 = vadd.f32 0.0, %v592
  %v594 = vpop.f32.mrf.mxu0
  %595 = vmatprep.mubr.bf16.mxu0 0
  %596 = vmatmul.mubr.bf16.gmra.mxu0 %v366
  %v597 = vpop.f32.mrf.mxu0
  %v598 = vadd.f32 0.0, %v597
  %v599 = vpop.f32.mrf.mxu0
  %v600 = vpop.f32.mrf.mxu0
  %v601 = vadd.f32 0.0, %v600
  %v602 = vpop.f32.mrf.mxu0
  %603 = vmatprep.mubr.bf16.mxu0 0
  %604 = vmatmul.mubr.bf16.gmra.mxu0 %v369
  %v605 = vpop.f32.mrf.mxu0
  %v606 = vadd.f32 0.0, %v605
  %v607 = vpop.f32.mrf.mxu0
  %v608 = vpop.f32.mrf.mxu0
  %v609 = vadd.f32 0.0, %v608
  %v610 = vpop.f32.mrf.mxu0
  %611 = vdwg.mxu0
  %v618 = vrot.slane %v590, 2
  %v619 = vrot.slane %v593, 2
  %v620 = vsel %vm298, %v618, %v619
  %v621 = vrot.slane %v598, 2
  %v622 = vsel %vm298, %v619, %v621
  %v623 = vrot.slane %v601, 2
  %v624 = vsel %vm298, %v621, %v623
  %v625 = vrot.slane %v606, 2
  %v626 = vsel %vm298, %v623, %v625
  %v627 = vrot.slane %v609, 2
  %v628 = vsel %vm298, %v625, %v627
  %v635 = vsel %vm298, %v627, 0.0
  %v636 = vadd.f32 %v532, %v620
  %v637 = vadd.f32 %v533, %v622
  %v638 = vadd.f32 %v534, %v624
  %v639 = vadd.f32 %v535, %v626
  %v640 = vadd.f32 %v536, %v628
  %v641 = vadd.f32 %v537, %v635
  %s642 = scalar_lea.vmem %s0, 48
  %v643 = vld [vmem:[%s642] sm:$0xf]
  %v644 = vld [vmem:[%s642 + $0x4] sm:$0xf]
  %v645 = vld [vmem:[%s642 + $0x8] sm:$0xf]
  %v646 = vld [vmem:[%s642 + $0xc] sm:$0xf]
  %v647 = vld [vmem:[%s642 + $0x10] sm:$0xf]
  %v648 = vld [vmem:[%s642 + $0x14] sm:$0xf]
  %s649 = scalar_lea.vmem %s1, 96
  %v650 = vld [vmem:[%s649] sm:$0xf]
  %v651 = vld [vmem:[%s649 + $0x4] sm:$0xf]
  %v652 = vld [vmem:[%s649 + $0x8] sm:$0xf]
  %v653 = vld [vmem:[%s649 + $0xc] sm:$0xf]
  %v660 = vunpack.c.l.b16 %v643
  %v661 = vunpack.c.l.b16 %v644
  %v662 = vunpack.c.l.b16 %v645
  %v663 = vunpack.c.l.b16 %v646
  %v664 = vunpack.c.l.b16 %v647
  %v665 = vunpack.c.l.b16 %v648
  %v666 = vpack.c.b16 %v661, %v660
  %v667 = vpack.c.b16 %v663, %v662
  %v668 = vpack.c.b16 %v665, %v664
  %v673 = vunpack.c.l.b16 %v650
  %v674 = vunpack.c.l.b16 %v651
  %v675 = vunpack.c.l.b16 %v652
  %v676 = vunpack.c.l.b16 %v653
  %v677 = vpack.c.b16 %v674, %v673
  %v678 = vpack.c.b16 %v676, %v675
  %v682 = vsel %vm57, %v666, 0
  %v685 = vsel %vm57, %v667, 0
  %v688 = vsel %vm57, %v668, 0
  %690 = vmatprep.subr.bf16.mxu0 0
  %691 = vmatpush1.bf16.msra.mxu0 0
  %692 = vmatprep.subr.bf16.mxu0 0
  %693 = vmatpush1.bf16.msra.mxu0 0
  %694 = vmatprep.subr.bf16.mxu0 0
  %695 = vmatpush1.bf16.msra.mxu0 0
  %696 = vmatprep.subr.bf16.mxu0 0
  %697 = vmatpush1.bf16.msra.mxu0 0
  %698 = vmatprep.subr.bf16.mxu0 0
  %699 = vmatpush1.bf16.msra.mxu0 0
  %700 = vmatprep.subr.bf16.mxu0 0
  %701 = vmatpush1.bf16.msra.mxu0 0
  %702 = vmatprep.subr.bf16.mxu0 0
  %703 = vmatpush1.bf16.msra.mxu0 %v678
  %704 = vmatprep.subr.bf16.mxu0 0
  %705 = vmatpush1.bf16.msra.mxu0 %v677
  %706 = vmatprep.subr.bf16.mxu0 0
  %707 = vmatpush2.bf16.msra.mxu0 0
  %708 = vmatprep.subr.bf16.mxu0 0
  %709 = vmatpush2.bf16.msra.mxu0 0
  %710 = vmatprep.subr.bf16.mxu0 0
  %711 = vmatpush2.bf16.msra.mxu0 0
  %712 = vmatprep.subr.bf16.mxu0 0
  %713 = vmatpush2.bf16.msra.mxu0 0
  %714 = vmatprep.subr.bf16.mxu0 0
  %715 = vmatpush2.bf16.msra.mxu0 0
  %716 = vmatprep.subr.bf16.mxu0 0
  %717 = vmatpush2.bf16.msra.mxu0 0
  %718 = vmatprep.subr.bf16.mxu0 0
  %719 = vmatpush2.bf16.msra.mxu0 0
  %720 = vmatprep.subr.bf16.mxu0 0
  %721 = vmatpush2.bf16.msra.mxu0 0
  %722 = vmatprep.mubr.bf16.mxu0 0
  %723 = vmatmul.mubr.bf16.gmra.mxu0 %v682
  %v724 = vpop.f32.mrf.mxu0
  %v725 = vadd.f32 0.0, %v724
  %v726 = vpop.f32.mrf.mxu0
  %v727 = vpop.f32.mrf.mxu0
  %v728 = vadd.f32 0.0, %v727
  %v729 = vpop.f32.mrf.mxu0
  %730 = vmatprep.mubr.bf16.mxu0 0
  %731 = vmatmul.mubr.bf16.gmra.mxu0 %v685
  %v732 = vpop.f32.mrf.mxu0
  %v733 = vadd.f32 0.0, %v732
  %v734 = vpop.f32.mrf.mxu0
  %v735 = vpop.f32.mrf.mxu0
  %v736 = vadd.f32 0.0, %v735
  %v737 = vpop.f32.mrf.mxu0
  %738 = vmatprep.mubr.bf16.mxu0 0
  %739 = vmatmul.mubr.bf16.gmra.mxu0 %v688
  %v740 = vpop.f32.mrf.mxu0
  %v741 = vadd.f32 0.0, %v740
  %v742 = vpop.f32.mrf.mxu0
  %v743 = vpop.f32.mrf.mxu0
  %v744 = vadd.f32 0.0, %v743
  %v745 = vpop.f32.mrf.mxu0
  %746 = vdwg.mxu0
  %v747 = vadd.f32 %v636, %v725
  %v748 = vadd.f32 %v637, %v728
  %v749 = vadd.f32 %v638, %v733
  %v750 = vadd.f32 %v639, %v736
  %v751 = vadd.f32 %v640, %v741
  %v752 = vadd.f32 %v641, %v744
  %s753 = scalar_lea.vmem %s1, 112
  %v754 = vld [vmem:[%s753] sm:$0xf]
  %v755 = vld [vmem:[%s753 + $0x4] sm:$0xf]
  %v756 = vld [vmem:[%s753 + $0x8] sm:$0xf]
  %v757 = vld [vmem:[%s753 + $0xc] sm:$0xf]
  %v762 = vunpack.c.l.b16 %v754
  %v763 = vunpack.c.l.b16 %v755
  %v764 = vunpack.c.l.b16 %v756
  %v765 = vunpack.c.l.b16 %v757
  %v766 = vpack.c.b16 %v763, %v762
  %v767 = vpack.c.b16 %v765, %v764
  %770 = vmatprep.subr.bf16.mxu0 0
  %771 = vmatpush1.bf16.msra.mxu0 0
  %772 = vmatprep.subr.bf16.mxu0 0
  %773 = vmatpush1.bf16.msra.mxu0 0
  %774 = vmatprep.subr.bf16.mxu0 0
  %775 = vmatpush1.bf16.msra.mxu0 0
  %776 = vmatprep.subr.bf16.mxu0 0
  %777 = vmatpush1.bf16.msra.mxu0 0
  %778 = vmatprep.subr.bf16.mxu0 0
  %779 = vmatpush1.bf16.msra.mxu0 0
  %780 = vmatprep.subr.bf16.mxu0 0
  %781 = vmatpush1.bf16.msra.mxu0 0
  %782 = vmatprep.subr.bf16.mxu0 0
  %783 = vmatpush1.bf16.msra.mxu0 %v767
  %784 = vmatprep.subr.bf16.mxu0 0
  %785 = vmatpush1.bf16.msra.mxu0 %v766
  %786 = vmatprep.subr.bf16.mxu0 0
  %787 = vmatpush2.bf16.msra.mxu0 0
  %788 = vmatprep.subr.bf16.mxu0 0
  %789 = vmatpush2.bf16.msra.mxu0 0
  %790 = vmatprep.subr.bf16.mxu0 0
  %791 = vmatpush2.bf16.msra.mxu0 0
  %792 = vmatprep.subr.bf16.mxu0 0
  %793 = vmatpush2.bf16.msra.mxu0 0
  %794 = vmatprep.subr.bf16.mxu0 0
  %795 = vmatpush2.bf16.msra.mxu0 0
  %796 = vmatprep.subr.bf16.mxu0 0
  %797 = vmatpush2.bf16.msra.mxu0 0
  %798 = vmatprep.subr.bf16.mxu0 0
  %799 = vmatpush2.bf16.msra.mxu0 0
  %800 = vmatprep.subr.bf16.mxu0 0
  %801 = vmatpush2.bf16.msra.mxu0 0
  %802 = vmatprep.mubr.bf16.mxu0 0
  %803 = vmatmul.mubr.bf16.gmra.mxu0 %v682
  %v804 = vpop.f32.mrf.mxu0
  %v805 = vadd.f32 0.0, %v804
  %v806 = vpop.f32.mrf.mxu0
  %v807 = vpop.f32.mrf.mxu0
  %v808 = vadd.f32 0.0, %v807
  %v809 = vpop.f32.mrf.mxu0
  %810 = vmatprep.mubr.bf16.mxu0 0
  %811 = vmatmul.mubr.bf16.gmra.mxu0 %v685
  %v812 = vpop.f32.mrf.mxu0
  %v813 = vadd.f32 0.0, %v812
  %v814 = vpop.f32.mrf.mxu0
  %v815 = vpop.f32.mrf.mxu0
  %v816 = vadd.f32 0.0, %v815
  %v817 = vpop.f32.mrf.mxu0
  %818 = vmatprep.mubr.bf16.mxu0 0
  %819 = vmatmul.mubr.bf16.gmra.mxu0 %v688
  %v820 = vpop.f32.mrf.mxu0
  %v821 = vadd.f32 0.0, %v820
  %v822 = vpop.f32.mrf.mxu0
  %v823 = vpop.f32.mrf.mxu0
  %v824 = vadd.f32 0.0, %v823
  %v825 = vpop.f32.mrf.mxu0
  %826 = vdwg.mxu0
  %v833 = vrot.slane %v805, 1
  %v834 = vrot.slane %v808, 1
  %v835 = vsel %vm130, %v833, %v834
  %v836 = vrot.slane %v813, 1
  %v837 = vsel %vm130, %v834, %v836
  %v838 = vrot.slane %v816, 1
  %v839 = vsel %vm130, %v836, %v838
  %v840 = vrot.slane %v821, 1
  %v841 = vsel %vm130, %v838, %v840
  %v842 = vrot.slane %v824, 1
  %v843 = vsel %vm130, %v840, %v842
  %v850 = vsel %vm130, %v842, 0.0
  %v851 = vadd.f32 %v747, %v835
  %v852 = vadd.f32 %v748, %v837
  %v853 = vadd.f32 %v749, %v839
  %v854 = vadd.f32 %v750, %v841
  %v855 = vadd.f32 %v751, %v843
  %v856 = vadd.f32 %v752, %v850
  %s857 = scalar_lea.vmem %s1, 128
  %v858 = vld [vmem:[%s857] sm:$0xf]
  %v859 = vld [vmem:[%s857 + $0x4] sm:$0xf]
  %v860 = vld [vmem:[%s857 + $0x8] sm:$0xf]
  %v861 = vld [vmem:[%s857 + $0xc] sm:$0xf]
  %v866 = vunpack.c.l.b16 %v858
  %v867 = vunpack.c.l.b16 %v859
  %v868 = vunpack.c.l.b16 %v860
  %v869 = vunpack.c.l.b16 %v861
  %v870 = vpack.c.b16 %v867, %v866
  %v871 = vpack.c.b16 %v869, %v868
  %874 = vmatprep.subr.bf16.mxu0 0
  %875 = vmatpush1.bf16.msra.mxu0 0
  %876 = vmatprep.subr.bf16.mxu0 0
  %877 = vmatpush1.bf16.msra.mxu0 0
  %878 = vmatprep.subr.bf16.mxu0 0
  %879 = vmatpush1.bf16.msra.mxu0 0
  %880 = vmatprep.subr.bf16.mxu0 0
  %881 = vmatpush1.bf16.msra.mxu0 0
  %882 = vmatprep.subr.bf16.mxu0 0
  %883 = vmatpush1.bf16.msra.mxu0 0
  %884 = vmatprep.subr.bf16.mxu0 0
  %885 = vmatpush1.bf16.msra.mxu0 0
  %886 = vmatprep.subr.bf16.mxu0 0
  %887 = vmatpush1.bf16.msra.mxu0 %v871
  %888 = vmatprep.subr.bf16.mxu0 0
  %889 = vmatpush1.bf16.msra.mxu0 %v870
  %890 = vmatprep.subr.bf16.mxu0 0
  %891 = vmatpush2.bf16.msra.mxu0 0
  %892 = vmatprep.subr.bf16.mxu0 0
  %893 = vmatpush2.bf16.msra.mxu0 0
  %894 = vmatprep.subr.bf16.mxu0 0
  %895 = vmatpush2.bf16.msra.mxu0 0
  %896 = vmatprep.subr.bf16.mxu0 0
  %897 = vmatpush2.bf16.msra.mxu0 0
  %898 = vmatprep.subr.bf16.mxu0 0
  %899 = vmatpush2.bf16.msra.mxu0 0
  %900 = vmatprep.subr.bf16.mxu0 0
  %901 = vmatpush2.bf16.msra.mxu0 0
  %902 = vmatprep.subr.bf16.mxu0 0
  %903 = vmatpush2.bf16.msra.mxu0 0
  %904 = vmatprep.subr.bf16.mxu0 0
  %905 = vmatpush2.bf16.msra.mxu0 0
  %906 = vmatprep.mubr.bf16.mxu0 0
  %907 = vmatmul.mubr.bf16.gmra.mxu0 %v682
  %v908 = vpop.f32.mrf.mxu0
  %v909 = vadd.f32 0.0, %v908
  %v910 = vpop.f32.mrf.mxu0
  %v911 = vpop.f32.mrf.mxu0
  %v912 = vadd.f32 0.0, %v911
  %v913 = vpop.f32.mrf.mxu0
  %914 = vmatprep.mubr.bf16.mxu0 0
  %915 = vmatmul.mubr.bf16.gmra.mxu0 %v685
  %v916 = vpop.f32.mrf.mxu0
  %v917 = vadd.f32 0.0, %v916
  %v918 = vpop.f32.mrf.mxu0
  %v919 = vpop.f32.mrf.mxu0
  %v920 = vadd.f32 0.0, %v919
  %v921 = vpop.f32.mrf.mxu0
  %922 = vmatprep.mubr.bf16.mxu0 0
  %923 = vmatmul.mubr.bf16.gmra.mxu0 %v688
  %v924 = vpop.f32.mrf.mxu0
  %v925 = vadd.f32 0.0, %v924
  %v926 = vpop.f32.mrf.mxu0
  %v927 = vpop.f32.mrf.mxu0
  %v928 = vadd.f32 0.0, %v927
  %v929 = vpop.f32.mrf.mxu0
  %930 = vdwg.mxu0
  %v937 = vrot.slane %v909, 2
  %v938 = vrot.slane %v912, 2
  %v939 = vsel %vm298, %v937, %v938
  %v940 = vrot.slane %v917, 2
  %v941 = vsel %vm298, %v938, %v940
  %v942 = vrot.slane %v920, 2
  %v943 = vsel %vm298, %v940, %v942
  %v944 = vrot.slane %v925, 2
  %v945 = vsel %vm298, %v942, %v944
  %v946 = vrot.slane %v928, 2
  %v947 = vsel %vm298, %v944, %v946
  %v954 = vsel %vm298, %v946, 0.0
  %v955 = vadd.f32 %v851, %v939
  %v956 = vadd.f32 %v852, %v941
  %v957 = vadd.f32 %v853, %v943
  %v958 = vadd.f32 %v854, %v945
  %v959 = vadd.f32 %v855, %v947
  %v960 = vadd.f32 %v856, %v954
  %v961 = vld [vmem:[%s2] sm:$0x1]
  %v963 = vlaneseq
  %v964 = vshrl.u32 %v963, 7
  %v965 = vsub.s32 0, %v964
  %v966 = vrot.slane %v961, %v965
  %v968 = vadd.f32 %v955, %v966
  %v969 = vadd.f32 %v956, %v966
  %v970 = vadd.f32 %v957, %v966
  %v971 = vadd.f32 %v958, %v966
  %v972 = vadd.f32 %v959, %v966
  %v973 = vadd.f32 %v960, %v966
  %974 = vst.msk [vmem:[%s3] sm:$0xff] %vm57, %v968
  %975 = vst.msk [vmem:[%s3 + $0x8] sm:$0xff] %vm57, %v969
  %976 = vst.msk [vmem:[%s3 + $0x10] sm:$0xff] %vm57, %v970
  %977 = vst.msk [vmem:[%s3 + $0x18] sm:$0xff] %vm57, %v971
  %978 = vst.msk [vmem:[%s3 + $0x20] sm:$0xff] %vm57, %v972
  %979 = vst.msk [vmem:[%s3 + $0x28] sm:$0xff] %vm57, %v973
  // Predicated region
  $region14: #{encoder_forward.7} parent=0 // pred_check
    _
  $region15: #{encoder_forward.7} parent=0 // pred_check_branch
    %981 = sbr.rel (0) target = $region17
  $region16: #{encoder_forward.7} parent=0 // pred_region
    _
  $region17: #{encoder_forward.7} parent=0 // pred_fallthru
    _
  // Predicated region
  $region18: #{encoder_forward.7} parent=0 // pred_check
    _
  $region19: #{encoder_forward.7} parent=0 // pred_check_branch
    %983 = sbr.rel (0) target = $region21
  $region20: #{encoder_forward.7} parent=0 // pred_region
    _
  $region21: #{encoder_forward.7} parent=0 // pred_fallthru
    _

// kernel: encoder_forward.9
$region0: #{encoder_forward.9}
  #allocation0 [shape = 'u32[]', space=smem, size = 0x4, offset = 0x4, fixed_abs, tag = 'smem constant byte address 0x4 - core index']
  #allocation1 [shape = 'u32[144,128]{1,0:T(1,128)}', space=vmem, size = 0x12000, scoped, tag = 'internal scratch']
  %s0 = inlined_call_operand.vmem [shape: bf16[3,48,32], index: 0, kind: input, shape index: {}]
  %s1 = inlined_call_operand.vmem [shape: bf16[9,32,16], index: 1, kind: input, shape index: {}]
  %s2 = inlined_call_operand.vmem [shape: f32[1,16], index: 2, kind: input, shape index: {}]
  %s3 = inlined_call_operand.vmem [shape: bf16[16,32], index: 3, kind: input, shape index: {}]
  %s4 = inlined_call_operand.vmem [shape: f32[1,32], index: 4, kind: input, shape index: {}]
  %s5 = inlined_call_operand.vmem [shape: f32[48,32], index: 5, kind: output, shape index: {}]
  %s6 = sld [smem:[#allocation0]]
  $region30: #{encoder_forward.9} parent=0
    _
  %s8 = ssub.s32 1, %s6
  %s9 = scalar_select 0, %s8, %s6
  // Predicated region
  $region2: #{encoder_forward.9} parent=0 // pred_check
    _
  $region3: #{encoder_forward.9} parent=0 // pred_check_branch
    %11 = sbr.rel (0) target = $region5
  $region4: #{encoder_forward.9} parent=0 // pred_region
    _
  $region5: #{encoder_forward.9} parent=0 // pred_fallthru
    _
  // Predicated region
  $region6: #{encoder_forward.9} parent=0 // pred_check
    _
  $region7: #{encoder_forward.9} parent=0 // pred_check_branch
    %13 = sbr.rel (0) target = $region9
  $region8: #{encoder_forward.9} parent=0 // pred_region
    _
  $region9: #{encoder_forward.9} parent=0 // pred_fallthru
    _
  // Predicated region
  $region10: #{encoder_forward.9} parent=0 // pred_check
    _
  $region11: #{encoder_forward.9} parent=0 // pred_check_branch
    %15 = sbr.rel (0) target = $region13
  $region12: #{encoder_forward.9} parent=0 // pred_region
    _
  $region13: #{encoder_forward.9} parent=0 // pred_fallthru
    _
  // Predicated region
  $region14: #{encoder_forward.9} parent=0 // pred_check
    _
  $region15: #{encoder_forward.9} parent=0 // pred_check_branch
    %17 = sbr.rel (0) target = $region17
  $region16: #{encoder_forward.9} parent=0 // pred_region
    _
  $region17: #{encoder_forward.9} parent=0 // pred_fallthru
    _
  // Predicated region
  $region18: #{encoder_forward.9} parent=0 // pred_check
    _
  $region19: #{encoder_forward.9} parent=0 // pred_check_branch
    %19 = sbr.rel (0) target = $region21
  $region20: #{encoder_forward.9} parent=0 // pred_region
    _
  $region21: #{encoder_forward.9} parent=0 // pred_fallthru
    _
  %v21 = vld [vmem:[%s0] sm:$0xf]
  %v22 = vld [vmem:[%s0 + $0x4] sm:$0xf]
  %v23 = vld [vmem:[%s0 + $0x8] sm:$0xf]
  %v24 = vld [vmem:[%s0 + $0xc] sm:$0xf]
  %v25 = vld [vmem:[%s0 + $0x10] sm:$0xf]
  %v26 = vld [vmem:[%s0 + $0x14] sm:$0xf]
  %v27 = vmax.bf16 %v21, 0
  %v28 = vmax.bf16 %v22, 0
  %v29 = vmax.bf16 %v23, 0
  %v30 = vmax.bf16 %v24, 0
  %v31 = vmax.bf16 %v25, 0
  %v32 = vmax.bf16 %v26, 0
  %v33 = vld [vmem:[%s1] sm:$0xf]
  %v34 = vld [vmem:[%s1 + $0x4] sm:$0xf]
  %v35 = vld [vmem:[%s1 + $0x8] sm:$0xf]
  %v36 = vld [vmem:[%s1 + $0xc] sm:$0xf]
  %s37 = scalar_lea.vmem %s1, 16
  %v38 = vld [vmem:[%s37] sm:$0xf]
  %v39 = vld [vmem:[%s37 + $0x4] sm:$0xf]
  %v40 = vld [vmem:[%s37 + $0x8] sm:$0xf]
  %v41 = vld [vmem:[%s37 + $0xc] sm:$0xf]
  %v48 = vunpack.c.l.b16 %v27
  %v49 = vunpack.c.l.b16 %v28
  %v50 = vunpack.c.l.b16 %v29
  %v51 = vunpack.c.l.b16 %v30
  %v52 = vunpack.c.l.b16 %v31
  %v53 = vunpack.c.l.b16 %v32
  %v54 = vpack.c.b16 %v49, %v48
  %v55 = vpack.c.b16 %v51, %v50
  %v56 = vpack.c.b16 %v53, %v52
  %v61 = vunpack.c.l.b16 %v38
  %v62 = vunpack.c.l.b16 %v39
  %v63 = vunpack.c.l.b16 %v40
  %v64 = vunpack.c.l.b16 %v41
  %v65 = vpack.c.b16 %v62, %v61
  %v66 = vpack.c.b16 %v64, %v63
  %vm69 = vcmask 261120
  %v71 = vsel %vm69, %v54, 0
  %v74 = vsel %vm69, %v55, 0
  %v77 = vsel %vm69, %v56, 0
  %79 = vmatprep.subr.bf16.mxu0 0
  %80 = vmatpush1.bf16.msra.mxu0 0
  %81 = vmatprep.subr.bf16.mxu0 0
  %82 = vmatpush1.bf16.msra.mxu0 0
  %83 = vmatprep.subr.bf16.mxu0 0
  %84 = vmatpush1.bf16.msra.mxu0 0
  %85 = vmatprep.subr.bf16.mxu0 0
  %86 = vmatpush1.bf16.msra.mxu0 0
  %87 = vmatprep.subr.bf16.mxu0 0
  %88 = vmatpush1.bf16.msra.mxu0 0
  %89 = vmatprep.subr.bf16.mxu0 0
  %90 = vmatpush1.bf16.msra.mxu0 0
  %91 = vmatprep.subr.bf16.mxu0 0
  %92 = vmatpush1.bf16.msra.mxu0 %v66
  %93 = vmatprep.subr.bf16.mxu0 0
  %94 = vmatpush1.bf16.msra.mxu0 %v65
  %95 = vmatprep.subr.bf16.mxu0 0
  %96 = vmatpush2.bf16.msra.mxu0 0
  %97 = vmatprep.subr.bf16.mxu0 0
  %98 = vmatpush2.bf16.msra.mxu0 0
  %99 = vmatprep.subr.bf16.mxu0 0
  %100 = vmatpush2.bf16.msra.mxu0 0
  %101 = vmatprep.subr.bf16.mxu0 0
  %102 = vmatpush2.bf16.msra.mxu0 0
  %103 = vmatprep.subr.bf16.mxu0 0
  %104 = vmatpush2.bf16.msra.mxu0 0
  %105 = vmatprep.subr.bf16.mxu0 0
  %106 = vmatpush2.bf16.msra.mxu0 0
  %107 = vmatprep.subr.bf16.mxu0 0
  %108 = vmatpush2.bf16.msra.mxu0 0
  %109 = vmatprep.subr.bf16.mxu0 0
  %110 = vmatpush2.bf16.msra.mxu0 0
  %111 = vmatprep.mubr.bf16.mxu0 0
  %112 = vmatmul.mubr.bf16.gmra.mxu0 %v71
  %v113 = vpop.f32.mrf.mxu0
  %v114 = vadd.f32 0.0, %v113
  %v115 = vpop.f32.mrf.mxu0
  %v116 = vpop.f32.mrf.mxu0
  %v117 = vadd.f32 0.0, %v116
  %v118 = vpop.f32.mrf.mxu0
  %119 = vmatprep.mubr.bf16.mxu0 0
  %120 = vmatmul.mubr.bf16.gmra.mxu0 %v74
  %v121 = vpop.f32.mrf.mxu0
  %v122 = vadd.f32 0.0, %v121
  %v123 = vpop.f32.mrf.mxu0
  %v124 = vpop.f32.mrf.mxu0
  %v125 = vadd.f32 0.0, %v124
  %v126 = vpop.f32.mrf.mxu0
  %127 = vmatprep.mubr.bf16.mxu0 0
  %128 = vmatmul.mubr.bf16.gmra.mxu0 %v77
  %v129 = vpop.f32.mrf.mxu0
  %v130 = vadd.f32 0.0, %v129
  %v131 = vpop.f32.mrf.mxu0
  %v132 = vpop.f32.mrf.mxu0
  %v133 = vadd.f32 0.0, %v132
  %v134 = vpop.f32.mrf.mxu0
  %135 = vdwg.mxu0
  %vm142 = vcmask 1046528
  %v143 = vrot.slane %v114, 1
  %v144 = vrot.slane %v117, 1
  %v145 = vsel %vm142, %v143, %v144
  %v146 = vrot.slane %v122, 1
  %v147 = vsel %vm142, %v144, %v146
  %v148 = vrot.slane %v125, 1
  %v149 = vsel %vm142, %v146, %v148
  %v150 = vrot.slane %v130, 1
  %v151 = vsel %vm142, %v148, %v150
  %v152 = vrot.slane %v133, 1
  %v153 = vsel %vm142, %v150, %v152
  %v160 = vsel %vm142, %v152, 0.0
  %v165 = vunpack.c.l.b16 %v33
  %v166 = vunpack.c.l.b16 %v34
  %v167 = vunpack.c.l.b16 %v35
  %v168 = vunpack.c.l.b16 %v36
  %v169 = vpack.c.b16 %v166, %v165
  %v170 = vpack.c.b16 %v168, %v167
  %173 = vmatprep.subr.bf16.mxu0 0
  %174 = vmatpush1.bf16.msra.mxu0 0
  %175 = vmatprep.subr.bf16.mxu0 0
  %176 = vmatpush1.bf16.msra.mxu0 0
  %177 = vmatprep.subr.bf16.mxu0 0
  %178 = vmatpush1.bf16.msra.mxu0 0
  %179 = vmatprep.subr.bf16.mxu0 0
  %180 = vmatpush1.bf16.msra.mxu0 0
  %181 = vmatprep.subr.bf16.mxu0 0
  %182 = vmatpush1.bf16.msra.mxu0 0
  %183 = vmatprep.subr.bf16.mxu0 0
  %184 = vmatpush1.bf16.msra.mxu0 0
  %185 = vmatprep.subr.bf16.mxu0 0
  %186 = vmatpush1.bf16.msra.mxu0 %v170
  %187 = vmatprep.subr.bf16.mxu0 0
  %188 = vmatpush1.bf16.msra.mxu0 %v169
  %189 = vmatprep.subr.bf16.mxu0 0
  %190 = vmatpush2.bf16.msra.mxu0 0
  %191 = vmatprep.subr.bf16.mxu0 0
  %192 = vmatpush2.bf16.msra.mxu0 0
  %193 = vmatprep.subr.bf16.mxu0 0
  %194 = vmatpush2.bf16.msra.mxu0 0
  %195 = vmatprep.subr.bf16.mxu0 0
  %196 = vmatpush2.bf16.msra.mxu0 0
  %197 = vmatprep.subr.bf16.mxu0 0
  %198 = vmatpush2.bf16.msra.mxu0 0
  %199 = vmatprep.subr.bf16.mxu0 0
  %200 = vmatpush2.bf16.msra.mxu0 0
  %201 = vmatprep.subr.bf16.mxu0 0
  %202 = vmatpush2.bf16.msra.mxu0 0
  %203 = vmatprep.subr.bf16.mxu0 0
  %204 = vmatpush2.bf16.msra.mxu0 0
  %205 = vmatprep.mubr.bf16.mxu0 0
  %206 = vmatmul.mubr.bf16.gmra.mxu0 %v71
  %v207 = vpop.f32.mrf.mxu0
  %v208 = vadd.f32 %v145, %v207
  %v209 = vpop.f32.mrf.mxu0
  %v210 = vpop.f32.mrf.mxu0
  %v211 = vadd.f32 %v147, %v210
  %v212 = vpop.f32.mrf.mxu0
  %213 = vmatprep.mubr.bf16.mxu0 0
  %214 = vmatmul.mubr.bf16.gmra.mxu0 %v74
  %v215 = vpop.f32.mrf.mxu0
  %v216 = vadd.f32 %v149, %v215
  %v217 = vpop.f32.mrf.mxu0
  %v218 = vpop.f32.mrf.mxu0
  %v219 = vadd.f32 %v151, %v218
  %v220 = vpop.f32.mrf.mxu0
  %221 = vmatprep.mubr.bf16.mxu0 0
  %222 = vmatmul.mubr.bf16.gmra.mxu0 %v77
  %v223 = vpop.f32.mrf.mxu0
  %v224 = vadd.f32 %v153, %v223
  %v225 = vpop.f32.mrf.mxu0
  %v226 = vpop.f32.mrf.mxu0
  %v227 = vadd.f32 %v160, %v226
  %v228 = vpop.f32.mrf.mxu0
  %229 = vdwg.mxu0
  %s230 = scalar_lea.vmem %s1, 32
  %v231 = vld [vmem:[%s230] sm:$0xf]
  %v232 = vld [vmem:[%s230 + $0x4] sm:$0xf]
  %v233 = vld [vmem:[%s230 + $0x8] sm:$0xf]
  %v234 = vld [vmem:[%s230 + $0xc] sm:$0xf]
  %v239 = vunpack.c.l.b16 %v231
  %v240 = vunpack.c.l.b16 %v232
  %v241 = vunpack.c.l.b16 %v233
  %v242 = vunpack.c.l.b16 %v234
  %v243 = vpack.c.b16 %v240, %v239
  %v244 = vpack.c.b16 %v242, %v241
  %247 = vmatprep.subr.bf16.mxu0 0
  %248 = vmatpush1.bf16.msra.mxu0 0
  %249 = vmatprep.subr.bf16.mxu0 0
  %250 = vmatpush1.bf16.msra.mxu0 0
  %251 = vmatprep.subr.bf16.mxu0 0
  %252 = vmatpush1.bf16.msra.mxu0 0
  %253 = vmatprep.subr.bf16.mxu0 0
  %254 = vmatpush1.bf16.msra.mxu0 0
  %255 = vmatprep.subr.bf16.mxu0 0
  %256 = vmatpush1.bf16.msra.mxu0 0
  %257 = vmatprep.subr.bf16.mxu0 0
  %258 = vmatpush1.bf16.msra.mxu0 0
  %259 = vmatprep.subr.bf16.mxu0 0
  %260 = vmatpush1.bf16.msra.mxu0 %v244
  %261 = vmatprep.subr.bf16.mxu0 0
  %262 = vmatpush1.bf16.msra.mxu0 %v243
  %263 = vmatprep.subr.bf16.mxu0 0
  %264 = vmatpush2.bf16.msra.mxu0 0
  %265 = vmatprep.subr.bf16.mxu0 0
  %266 = vmatpush2.bf16.msra.mxu0 0
  %267 = vmatprep.subr.bf16.mxu0 0
  %268 = vmatpush2.bf16.msra.mxu0 0
  %269 = vmatprep.subr.bf16.mxu0 0
  %270 = vmatpush2.bf16.msra.mxu0 0
  %271 = vmatprep.subr.bf16.mxu0 0
  %272 = vmatpush2.bf16.msra.mxu0 0
  %273 = vmatprep.subr.bf16.mxu0 0
  %274 = vmatpush2.bf16.msra.mxu0 0
  %275 = vmatprep.subr.bf16.mxu0 0
  %276 = vmatpush2.bf16.msra.mxu0 0
  %277 = vmatprep.subr.bf16.mxu0 0
  %278 = vmatpush2.bf16.msra.mxu0 0
  %279 = vmatprep.mubr.bf16.mxu0 0
  %280 = vmatmul.mubr.bf16.gmra.mxu0 %v71
  %v281 = vpop.f32.mrf.mxu0
  %v282 = vadd.f32 0.0, %v281
  %v283 = vpop.f32.mrf.mxu0
  %v284 = vpop.f32.mrf.mxu0
  %v285 = vadd.f32 0.0, %v284
  %v286 = vpop.f32.mrf.mxu0
  %287 = vmatprep.mubr.bf16.mxu0 0
  %288 = vmatmul.mubr.bf16.gmra.mxu0 %v74
  %v289 = vpop.f32.mrf.mxu0
  %v290 = vadd.f32 0.0, %v289
  %v291 = vpop.f32.mrf.mxu0
  %v292 = vpop.f32.mrf.mxu0
  %v293 = vadd.f32 0.0, %v292
  %v294 = vpop.f32.mrf.mxu0
  %295 = vmatprep.mubr.bf16.mxu0 0
  %296 = vmatmul.mubr.bf16.gmra.mxu0 %v77
  %v297 = vpop.f32.mrf.mxu0
  %v298 = vadd.f32 0.0, %v297
  %v299 = vpop.f32.mrf.mxu0
  %v300 = vpop.f32.mrf.mxu0
  %v301 = vadd.f32 0.0, %v300
  %v302 = vpop.f32.mrf.mxu0
  %303 = vdwg.mxu0
  %vm310 = vcmask 1045504
  %v311 = vrot.slane %v282, 2
  %v312 = vrot.slane %v285, 2
  %v313 = vsel %vm310, %v311, %v312
  %v314 = vrot.slane %v290, 2
  %v315 = vsel %vm310, %v312, %v314
  %v316 = vrot.slane %v293, 2
  %v317 = vsel %vm310, %v314, %v316
  %v318 = vrot.slane %v298, 2
  %v319 = vsel %vm310, %v316, %v318
  %v320 = vrot.slane %v301, 2
  %v321 = vsel %vm310, %v318, %v320
  %v328 = vsel %vm310, %v320, 0.0
  %v329 = vadd.f32 %v208, %v313
  %v330 = vadd.f32 %v211, %v315
  %v331 = vadd.f32 %v216, %v317
  %v332 = vadd.f32 %v219, %v319
  %v333 = vadd.f32 %v224, %v321
  %v334 = vadd.f32 %v227, %v328
  %s335 = scalar_lea.vmem %s0, 24
  %v336 = vld [vmem:[%s335] sm:$0xf]
  %v337 = vld [vmem:[%s335 + $0x4] sm:$0xf]
  %v338 = vld [vmem:[%s335 + $0x8] sm:$0xf]
  %v339 = vld [vmem:[%s335 + $0xc] sm:$0xf]
  %v340 = vld [vmem:[%s335 + $0x10] sm:$0xf]
  %v341 = vld [vmem:[%s335 + $0x14] sm:$0xf]
  %v342 = vmax.bf16 %v336, 0
  %v343 = vmax.bf16 %v337, 0
  %v344 = vmax.bf16 %v338, 0
  %v345 = vmax.bf16 %v339, 0
  %v346 = vmax.bf16 %v340, 0
  %v347 = vmax.bf16 %v341, 0
  %s348 = scalar_lea.vmem %s1, 48
  %v349 = vld [vmem:[%s348] sm:$0xf]
  %v350 = vld [vmem:[%s348 + $0x4] sm:$0xf]
  %v351 = vld [vmem:[%s348 + $0x8] sm:$0xf]
  %v352 = vld [vmem:[%s348 + $0xc] sm:$0xf]
  %v359 = vunpack.c.l.b16 %v342
  %v360 = vunpack.c.l.b16 %v343
  %v361 = vunpack.c.l.b16 %v344
  %v362 = vunpack.c.l.b16 %v345
  %v363 = vunpack.c.l.b16 %v346
  %v364 = vunpack.c.l.b16 %v347
  %v365 = vpack.c.b16 %v360, %v359
  %v366 = vpack.c.b16 %v362, %v361
  %v367 = vpack.c.b16 %v364, %v363
  %v372 = vunpack.c.l.b16 %v349
  %v373 = vunpack.c.l.b16 %v350
  %v374 = vunpack.c.l.b16 %v351
  %v375 = vunpack.c.l.b16 %v352
  %v376 = vpack.c.b16 %v373, %v372
  %v377 = vpack.c.b16 %v375, %v374
  %v381 = vsel %vm69, %v365, 0
  %v384 = vsel %vm69, %v366, 0
  %v387 = vsel %vm69, %v367, 0
  %389 = vmatprep.subr.bf16.mxu0 0
  %390 = vmatpush1.bf16.msra.mxu0 0
  %391 = vmatprep.subr.bf16.mxu0 0
  %392 = vmatpush1.bf16.msra.mxu0 0
  %393 = vmatprep.subr.bf16.mxu0 0
  %394 = vmatpush1.bf16.msra.mxu0 0
  %395 = vmatprep.subr.bf16.mxu0 0
  %396 = vmatpush1.bf16.msra.mxu0 0
  %397 = vmatprep.subr.bf16.mxu0 0
  %398 = vmatpush1.bf16.msra.mxu0 0
  %399 = vmatprep.subr.bf16.mxu0 0
  %400 = vmatpush1.bf16.msra.mxu0 0
  %401 = vmatprep.subr.bf16.mxu0 0
  %402 = vmatpush1.bf16.msra.mxu0 %v377
  %403 = vmatprep.subr.bf16.mxu0 0
  %404 = vmatpush1.bf16.msra.mxu0 %v376
  %405 = vmatprep.subr.bf16.mxu0 0
  %406 = vmatpush2.bf16.msra.mxu0 0
  %407 = vmatprep.subr.bf16.mxu0 0
  %408 = vmatpush2.bf16.msra.mxu0 0
  %409 = vmatprep.subr.bf16.mxu0 0
  %410 = vmatpush2.bf16.msra.mxu0 0
  %411 = vmatprep.subr.bf16.mxu0 0
  %412 = vmatpush2.bf16.msra.mxu0 0
  %413 = vmatprep.subr.bf16.mxu0 0
  %414 = vmatpush2.bf16.msra.mxu0 0
  %415 = vmatprep.subr.bf16.mxu0 0
  %416 = vmatpush2.bf16.msra.mxu0 0
  %417 = vmatprep.subr.bf16.mxu0 0
  %418 = vmatpush2.bf16.msra.mxu0 0
  %419 = vmatprep.subr.bf16.mxu0 0
  %420 = vmatpush2.bf16.msra.mxu0 0
  %421 = vmatprep.mubr.bf16.mxu0 0
  %422 = vmatmul.mubr.bf16.gmra.mxu0 %v381
  %v423 = vpop.f32.mrf.mxu0
  %v424 = vadd.f32 0.0, %v423
  %v425 = vpop.f32.mrf.mxu0
  %v426 = vpop.f32.mrf.mxu0
  %v427 = vadd.f32 0.0, %v426
  %v428 = vpop.f32.mrf.mxu0
  %429 = vmatprep.mubr.bf16.mxu0 0
  %430 = vmatmul.mubr.bf16.gmra.mxu0 %v384
  %v431 = vpop.f32.mrf.mxu0
  %v432 = vadd.f32 0.0, %v431
  %v433 = vpop.f32.mrf.mxu0
  %v434 = vpop.f32.mrf.mxu0
  %v435 = vadd.f32 0.0, %v434
  %v436 = vpop.f32.mrf.mxu0
  %437 = vmatprep.mubr.bf16.mxu0 0
  %438 = vmatmul.mubr.bf16.gmra.mxu0 %v387
  %v439 = vpop.f32.mrf.mxu0
  %v440 = vadd.f32 0.0, %v439
  %v441 = vpop.f32.mrf.mxu0
  %v442 = vpop.f32.mrf.mxu0
  %v443 = vadd.f32 0.0, %v442
  %v444 = vpop.f32.mrf.mxu0
  %445 = vdwg.mxu0
  %v446 = vadd.f32 %v329, %v424
  %v447 = vadd.f32 %v330, %v427
  %v448 = vadd.f32 %v331, %v432
  %v449 = vadd.f32 %v332, %v435
  %v450 = vadd.f32 %v333, %v440
  %v451 = vadd.f32 %v334, %v443
  %s452 = scalar_lea.vmem %s1, 64
  %v453 = vld [vmem:[%s452] sm:$0xf]
  %v454 = vld [vmem:[%s452 + $0x4] sm:$0xf]
  %v455 = vld [vmem:[%s452 + $0x8] sm:$0xf]
  %v456 = vld [vmem:[%s452 + $0xc] sm:$0xf]
  %v461 = vunpack.c.l.b16 %v453
  %v462 = vunpack.c.l.b16 %v454
  %v463 = vunpack.c.l.b16 %v455
  %v464 = vunpack.c.l.b16 %v456
  %v465 = vpack.c.b16 %v462, %v461
  %v466 = vpack.c.b16 %v464, %v463
  %469 = vmatprep.subr.bf16.mxu0 0
  %470 = vmatpush1.bf16.msra.mxu0 0
  %471 = vmatprep.subr.bf16.mxu0 0
  %472 = vmatpush1.bf16.msra.mxu0 0
  %473 = vmatprep.subr.bf16.mxu0 0
  %474 = vmatpush1.bf16.msra.mxu0 0
  %475 = vmatprep.subr.bf16.mxu0 0
  %476 = vmatpush1.bf16.msra.mxu0 0
  %477 = vmatprep.subr.bf16.mxu0 0
  %478 = vmatpush1.bf16.msra.mxu0 0
  %479 = vmatprep.subr.bf16.mxu0 0
  %480 = vmatpush1.bf16.msra.mxu0 0
  %481 = vmatprep.subr.bf16.mxu0 0
  %482 = vmatpush1.bf16.msra.mxu0 %v466
  %483 = vmatprep.subr.bf16.mxu0 0
  %484 = vmatpush1.bf16.msra.mxu0 %v465
  %485 = vmatprep.subr.bf16.mxu0 0
  %486 = vmatpush2.bf16.msra.mxu0 0
  %487 = vmatprep.subr.bf16.mxu0 0
  %488 = vmatpush2.bf16.msra.mxu0 0
  %489 = vmatprep.subr.bf16.mxu0 0
  %490 = vmatpush2.bf16.msra.mxu0 0
  %491 = vmatprep.subr.bf16.mxu0 0
  %492 = vmatpush2.bf16.msra.mxu0 0
  %493 = vmatprep.subr.bf16.mxu0 0
  %494 = vmatpush2.bf16.msra.mxu0 0
  %495 = vmatprep.subr.bf16.mxu0 0
  %496 = vmatpush2.bf16.msra.mxu0 0
  %497 = vmatprep.subr.bf16.mxu0 0
  %498 = vmatpush2.bf16.msra.mxu0 0
  %499 = vmatprep.subr.bf16.mxu0 0
  %500 = vmatpush2.bf16.msra.mxu0 0
  %501 = vmatprep.mubr.bf16.mxu0 0
  %502 = vmatmul.mubr.bf16.gmra.mxu0 %v381
  %v503 = vpop.f32.mrf.mxu0
  %v504 = vadd.f32 0.0, %v503
  %v505 = vpop.f32.mrf.mxu0
  %v506 = vpop.f32.mrf.mxu0
  %v507 = vadd.f32 0.0, %v506
  %v508 = vpop.f32.mrf.mxu0
  %509 = vmatprep.mubr.bf16.mxu0 0
  %510 = vmatmul.mubr.bf16.gmra.mxu0 %v384
  %v511 = vpop.f32.mrf.mxu0
  %v512 = vadd.f32 0.0, %v511
  %v513 = vpop.f32.mrf.mxu0
  %v514 = vpop.f32.mrf.mxu0
  %v515 = vadd.f32 0.0, %v514
  %v516 = vpop.f32.mrf.mxu0
  %517 = vmatprep.mubr.bf16.mxu0 0
  %518 = vmatmul.mubr.bf16.gmra.mxu0 %v387
  %v519 = vpop.f32.mrf.mxu0
  %v520 = vadd.f32 0.0, %v519
  %v521 = vpop.f32.mrf.mxu0
  %v522 = vpop.f32.mrf.mxu0
  %v523 = vadd.f32 0.0, %v522
  %v524 = vpop.f32.mrf.mxu0
  %525 = vdwg.mxu0
  %v532 = vrot.slane %v504, 1
  %v533 = vrot.slane %v507, 1
  %v534 = vsel %vm142, %v532, %v533
  %v535 = vrot.slane %v512, 1
  %v536 = vsel %vm142, %v533, %v535
  %v537 = vrot.slane %v515, 1
  %v538 = vsel %vm142, %v535, %v537
  %v539 = vrot.slane %v520, 1
  %v540 = vsel %vm142, %v537, %v539
  %v541 = vrot.slane %v523, 1
  %v542 = vsel %vm142, %v539, %v541
  %v549 = vsel %vm142, %v541, 0.0
  %v550 = vadd.f32 %v446, %v534
  %v551 = vadd.f32 %v447, %v536
  %v552 = vadd.f32 %v448, %v538
  %v553 = vadd.f32 %v449, %v540
  %v554 = vadd.f32 %v450, %v542
  %v555 = vadd.f32 %v451, %v549
  %s556 = scalar_lea.vmem %s1, 80
  %v557 = vld [vmem:[%s556] sm:$0xf]
  %v558 = vld [vmem:[%s556 + $0x4] sm:$0xf]
  %v559 = vld [vmem:[%s556 + $0x8] sm:$0xf]
  %v560 = vld [vmem:[%s556 + $0xc] sm:$0xf]
  %v565 = vunpack.c.l.b16 %v557
  %v566 = vunpack.c.l.b16 %v558
  %v567 = vunpack.c.l.b16 %v559
  %v568 = vunpack.c.l.b16 %v560
  %v569 = vpack.c.b16 %v566, %v565
  %v570 = vpack.c.b16 %v568, %v567
  %573 = vmatprep.subr.bf16.mxu0 0
  %574 = vmatpush1.bf16.msra.mxu0 0
  %575 = vmatprep.subr.bf16.mxu0 0
  %576 = vmatpush1.bf16.msra.mxu0 0
  %577 = vmatprep.subr.bf16.mxu0 0
  %578 = vmatpush1.bf16.msra.mxu0 0
  %579 = vmatprep.subr.bf16.mxu0 0
  %580 = vmatpush1.bf16.msra.mxu0 0
  %581 = vmatprep.subr.bf16.mxu0 0
  %582 = vmatpush1.bf16.msra.mxu0 0
  %583 = vmatprep.subr.bf16.mxu0 0
  %584 = vmatpush1.bf16.msra.mxu0 0
  %585 = vmatprep.subr.bf16.mxu0 0
  %586 = vmatpush1.bf16.msra.mxu0 %v570
  %587 = vmatprep.subr.bf16.mxu0 0
  %588 = vmatpush1.bf16.msra.mxu0 %v569
  %589 = vmatprep.subr.bf16.mxu0 0
  %590 = vmatpush2.bf16.msra.mxu0 0
  %591 = vmatprep.subr.bf16.mxu0 0
  %592 = vmatpush2.bf16.msra.mxu0 0
  %593 = vmatprep.subr.bf16.mxu0 0
  %594 = vmatpush2.bf16.msra.mxu0 0
  %595 = vmatprep.subr.bf16.mxu0 0
  %596 = vmatpush2.bf16.msra.mxu0 0
  %597 = vmatprep.subr.bf16.mxu0 0
  %598 = vmatpush2.bf16.msra.mxu0 0
  %599 = vmatprep.subr.bf16.mxu0 0
  %600 = vmatpush2.bf16.msra.mxu0 0
  %601 = vmatprep.subr.bf16.mxu0 0
  %602 = vmatpush2.bf16.msra.mxu0 0
  %603 = vmatprep.subr.bf16.mxu0 0
  %604 = vmatpush2.bf16.msra.mxu0 0
  %605 = vmatprep.mubr.bf16.mxu0 0
  %606 = vmatmul.mubr.bf16.gmra.mxu0 %v381
  %v607 = vpop.f32.mrf.mxu0
  %v608 = vadd.f32 0.0, %v607
  %v609 = vpop.f32.mrf.mxu0
  %v610 = vpop.f32.mrf.mxu0
  %v611 = vadd.f32 0.0, %v610
  %v612 = vpop.f32.mrf.mxu0
  %613 = vmatprep.mubr.bf16.mxu0 0
  %614 = vmatmul.mubr.bf16.gmra.mxu0 %v384
  %v615 = vpop.f32.mrf.mxu0
  %v616 = vadd.f32 0.0, %v615
  %v617 = vpop.f32.mrf.mxu0
  %v618 = vpop.f32.mrf.mxu0
  %v619 = vadd.f32 0.0, %v618
  %v620 = vpop.f32.mrf.mxu0
  %621 = vmatprep.mubr.bf16.mxu0 0
  %622 = vmatmul.mubr.bf16.gmra.mxu0 %v387
  %v623 = vpop.f32.mrf.mxu0
  %v624 = vadd.f32 0.0, %v623
  %v625 = vpop.f32.mrf.mxu0
  %v626 = vpop.f32.mrf.mxu0
  %v627 = vadd.f32 0.0, %v626
  %v628 = vpop.f32.mrf.mxu0
  %629 = vdwg.mxu0
  %v636 = vrot.slane %v608, 2
  %v637 = vrot.slane %v611, 2
  %v638 = vsel %vm310, %v636, %v637
  %v639 = vrot.slane %v616, 2
  %v640 = vsel %vm310, %v637, %v639
  %v641 = vrot.slane %v619, 2
  %v642 = vsel %vm310, %v639, %v641
  %v643 = vrot.slane %v624, 2
  %v644 = vsel %vm310, %v641, %v643
  %v645 = vrot.slane %v627, 2
  %v646 = vsel %vm310, %v643, %v645
  %v653 = vsel %vm310, %v645, 0.0
  %v654 = vadd.f32 %v550, %v638
  %v655 = vadd.f32 %v551, %v640
  %v656 = vadd.f32 %v552, %v642
  %v657 = vadd.f32 %v553, %v644
  %v658 = vadd.f32 %v554, %v646
  %v659 = vadd.f32 %v555, %v653
  %s660 = scalar_lea.vmem %s0, 48
  %v661 = vld [vmem:[%s660] sm:$0xf]
  %v662 = vld [vmem:[%s660 + $0x4] sm:$0xf]
  %v663 = vld [vmem:[%s660 + $0x8] sm:$0xf]
  %v664 = vld [vmem:[%s660 + $0xc] sm:$0xf]
  %v665 = vld [vmem:[%s660 + $0x10] sm:$0xf]
  %v666 = vld [vmem:[%s660 + $0x14] sm:$0xf]
  %v667 = vmax.bf16 %v661, 0
  %v668 = vmax.bf16 %v662, 0
  %v669 = vmax.bf16 %v663, 0
  %v670 = vmax.bf16 %v664, 0
  %v671 = vmax.bf16 %v665, 0
  %v672 = vmax.bf16 %v666, 0
  %s673 = scalar_lea.vmem %s1, 96
  %v674 = vld [vmem:[%s673] sm:$0xf]
  %v675 = vld [vmem:[%s673 + $0x4] sm:$0xf]
  %v676 = vld [vmem:[%s673 + $0x8] sm:$0xf]
  %v677 = vld [vmem:[%s673 + $0xc] sm:$0xf]
  %v684 = vunpack.c.l.b16 %v667
  %v685 = vunpack.c.l.b16 %v668
  %v686 = vunpack.c.l.b16 %v669
  %v687 = vunpack.c.l.b16 %v670
  %v688 = vunpack.c.l.b16 %v671
  %v689 = vunpack.c.l.b16 %v672
  %v690 = vpack.c.b16 %v685, %v684
  %v691 = vpack.c.b16 %v687, %v686
  %v692 = vpack.c.b16 %v689, %v688
  %v697 = vunpack.c.l.b16 %v674
  %v698 = vunpack.c.l.b16 %v675
  %v699 = vunpack.c.l.b16 %v676
  %v700 = vunpack.c.l.b16 %v677
  %v701 = vpack.c.b16 %v698, %v697
  %v702 = vpack.c.b16 %v700, %v699
  %v706 = vsel %vm69, %v690, 0
  %v709 = vsel %vm69, %v691, 0
  %v712 = vsel %vm69, %v692, 0
  %714 = vmatprep.subr.bf16.mxu0 0
  %715 = vmatpush1.bf16.msra.mxu0 0
  %716 = vmatprep.subr.bf16.mxu0 0
  %717 = vmatpush1.bf16.msra.mxu0 0
  %718 = vmatprep.subr.bf16.mxu0 0
  %719 = vmatpush1.bf16.msra.mxu0 0
  %720 = vmatprep.subr.bf16.mxu0 0
  %721 = vmatpush1.bf16.msra.mxu0 0
  %722 = vmatprep.subr.bf16.mxu0 0
  %723 = vmatpush1.bf16.msra.mxu0 0
  %724 = vmatprep.subr.bf16.mxu0 0
  %725 = vmatpush1.bf16.msra.mxu0 0
  %726 = vmatprep.subr.bf16.mxu0 0
  %727 = vmatpush1.bf16.msra.mxu0 %v702
  %728 = vmatprep.subr.bf16.mxu0 0
  %729 = vmatpush1.bf16.msra.mxu0 %v701
  %730 = vmatprep.subr.bf16.mxu0 0
  %731 = vmatpush2.bf16.msra.mxu0 0
  %732 = vmatprep.subr.bf16.mxu0 0
  %733 = vmatpush2.bf16.msra.mxu0 0
  %734 = vmatprep.subr.bf16.mxu0 0
  %735 = vmatpush2.bf16.msra.mxu0 0
  %736 = vmatprep.subr.bf16.mxu0 0
  %737 = vmatpush2.bf16.msra.mxu0 0
  %738 = vmatprep.subr.bf16.mxu0 0
  %739 = vmatpush2.bf16.msra.mxu0 0
  %740 = vmatprep.subr.bf16.mxu0 0
  %741 = vmatpush2.bf16.msra.mxu0 0
  %742 = vmatprep.subr.bf16.mxu0 0
  %743 = vmatpush2.bf16.msra.mxu0 0
  %744 = vmatprep.subr.bf16.mxu0 0
  %745 = vmatpush2.bf16.msra.mxu0 0
  %746 = vmatprep.mubr.bf16.mxu0 0
  %747 = vmatmul.mubr.bf16.gmra.mxu0 %v706
  %v748 = vpop.f32.mrf.mxu0
  %v749 = vadd.f32 0.0, %v748
  %v750 = vpop.f32.mrf.mxu0
  %v751 = vpop.f32.mrf.mxu0
  %v752 = vadd.f32 0.0, %v751
  %v753 = vpop.f32.mrf.mxu0
  %754 = vmatprep.mubr.bf16.mxu0 0
  %755 = vmatmul.mubr.bf16.gmra.mxu0 %v709
  %v756 = vpop.f32.mrf.mxu0
  %v757 = vadd.f32 0.0, %v756
  %v758 = vpop.f32.mrf.mxu0
  %v759 = vpop.f32.mrf.mxu0
  %v760 = vadd.f32 0.0, %v759
  %v761 = vpop.f32.mrf.mxu0
  %762 = vmatprep.mubr.bf16.mxu0 0
  %763 = vmatmul.mubr.bf16.gmra.mxu0 %v712
  %v764 = vpop.f32.mrf.mxu0
  %v765 = vadd.f32 0.0, %v764
  %v766 = vpop.f32.mrf.mxu0
  %v767 = vpop.f32.mrf.mxu0
  %v768 = vadd.f32 0.0, %v767
  %v769 = vpop.f32.mrf.mxu0
  %770 = vdwg.mxu0
  %v771 = vadd.f32 %v654, %v749
  %v772 = vadd.f32 %v655, %v752
  %v773 = vadd.f32 %v656, %v757
  %v774 = vadd.f32 %v657, %v760
  %v775 = vadd.f32 %v658, %v765
  %v776 = vadd.f32 %v659, %v768
  %s777 = scalar_lea.vmem %s1, 112
  %v778 = vld [vmem:[%s777] sm:$0xf]
  %v779 = vld [vmem:[%s777 + $0x4] sm:$0xf]
  %v780 = vld [vmem:[%s777 + $0x8] sm:$0xf]
  %v781 = vld [vmem:[%s777 + $0xc] sm:$0xf]
  %v786 = vunpack.c.l.b16 %v778
  %v787 = vunpack.c.l.b16 %v779
  %v788 = vunpack.c.l.b16 %v780
  %v789 = vunpack.c.l.b16 %v781
  %v790 = vpack.c.b16 %v787, %v786
  %v791 = vpack.c.b16 %v789, %v788
  %794 = vmatprep.subr.bf16.mxu0 0
  %795 = vmatpush1.bf16.msra.mxu0 0
  %796 = vmatprep.subr.bf16.mxu0 0
  %797 = vmatpush1.bf16.msra.mxu0 0
  %798 = vmatprep.subr.bf16.mxu0 0
  %799 = vmatpush1.bf16.msra.mxu0 0
  %800 = vmatprep.subr.bf16.mxu0 0
  %801 = vmatpush1.bf16.msra.mxu0 0
  %802 = vmatprep.subr.bf16.mxu0 0
  %803 = vmatpush1.bf16.msra.mxu0 0
  %804 = vmatprep.subr.bf16.mxu0 0
  %805 = vmatpush1.bf16.msra.mxu0 0
  %806 = vmatprep.subr.bf16.mxu0 0
  %807 = vmatpush1.bf16.msra.mxu0 %v791
  %808 = vmatprep.subr.bf16.mxu0 0
  %809 = vmatpush1.bf16.msra.mxu0 %v790
  %810 = vmatprep.subr.bf16.mxu0 0
  %811 = vmatpush2.bf16.msra.mxu0 0
  %812 = vmatprep.subr.bf16.mxu0 0
  %813 = vmatpush2.bf16.msra.mxu0 0
  %814 = vmatprep.subr.bf16.mxu0 0
  %815 = vmatpush2.bf16.msra.mxu0 0
  %816 = vmatprep.subr.bf16.mxu0 0
  %817 = vmatpush2.bf16.msra.mxu0 0
  %818 = vmatprep.subr.bf16.mxu0 0
  %819 = vmatpush2.bf16.msra.mxu0 0
  %820 = vmatprep.subr.bf16.mxu0 0
  %821 = vmatpush2.bf16.msra.mxu0 0
  %822 = vmatprep.subr.bf16.mxu0 0
  %823 = vmatpush2.bf16.msra.mxu0 0
  %824 = vmatprep.subr.bf16.mxu0 0
  %825 = vmatpush2.bf16.msra.mxu0 0
  %826 = vmatprep.mubr.bf16.mxu0 0
  %827 = vmatmul.mubr.bf16.gmra.mxu0 %v706
  %v828 = vpop.f32.mrf.mxu0
  %v829 = vadd.f32 0.0, %v828
  %v830 = vpop.f32.mrf.mxu0
  %v831 = vpop.f32.mrf.mxu0
  %v832 = vadd.f32 0.0, %v831
  %v833 = vpop.f32.mrf.mxu0
  %834 = vmatprep.mubr.bf16.mxu0 0
  %835 = vmatmul.mubr.bf16.gmra.mxu0 %v709
  %v836 = vpop.f32.mrf.mxu0
  %v837 = vadd.f32 0.0, %v836
  %v838 = vpop.f32.mrf.mxu0
  %v839 = vpop.f32.mrf.mxu0
  %v840 = vadd.f32 0.0, %v839
  %v841 = vpop.f32.mrf.mxu0
  %842 = vmatprep.mubr.bf16.mxu0 0
  %843 = vmatmul.mubr.bf16.gmra.mxu0 %v712
  %v844 = vpop.f32.mrf.mxu0
  %v845 = vadd.f32 0.0, %v844
  %v846 = vpop.f32.mrf.mxu0
  %v847 = vpop.f32.mrf.mxu0
  %v848 = vadd.f32 0.0, %v847
  %v849 = vpop.f32.mrf.mxu0
  %850 = vdwg.mxu0
  %v857 = vrot.slane %v829, 1
  %v858 = vrot.slane %v832, 1
  %v859 = vsel %vm142, %v857, %v858
  %v860 = vrot.slane %v837, 1
  %v861 = vsel %vm142, %v858, %v860
  %v862 = vrot.slane %v840, 1
  %v863 = vsel %vm142, %v860, %v862
  %v864 = vrot.slane %v845, 1
  %v865 = vsel %vm142, %v862, %v864
  %v866 = vrot.slane %v848, 1
  %v867 = vsel %vm142, %v864, %v866
  %v874 = vsel %vm142, %v866, 0.0
  %v875 = vadd.f32 %v771, %v859
  %v876 = vadd.f32 %v772, %v861
  %v877 = vadd.f32 %v773, %v863
  %v878 = vadd.f32 %v774, %v865
  %v879 = vadd.f32 %v775, %v867
  %v880 = vadd.f32 %v776, %v874
  %s881 = scalar_lea.vmem %s1, 128
  %v882 = vld [vmem:[%s881] sm:$0xf]
  %v883 = vld [vmem:[%s881 + $0x4] sm:$0xf]
  %v884 = vld [vmem:[%s881 + $0x8] sm:$0xf]
  %v885 = vld [vmem:[%s881 + $0xc] sm:$0xf]
  %v890 = vunpack.c.l.b16 %v882
  %v891 = vunpack.c.l.b16 %v883
  %v892 = vunpack.c.l.b16 %v884
  %v893 = vunpack.c.l.b16 %v885
  %v894 = vpack.c.b16 %v891, %v890
  %v895 = vpack.c.b16 %v893, %v892
  %898 = vmatprep.subr.bf16.mxu0 0
  %899 = vmatpush1.bf16.msra.mxu0 0
  %900 = vmatprep.subr.bf16.mxu0 0
  %901 = vmatpush1.bf16.msra.mxu0 0
  %902 = vmatprep.subr.bf16.mxu0 0
  %903 = vmatpush1.bf16.msra.mxu0 0
  %904 = vmatprep.subr.bf16.mxu0 0
  %905 = vmatpush1.bf16.msra.mxu0 0
  %906 = vmatprep.subr.bf16.mxu0 0
  %907 = vmatpush1.bf16.msra.mxu0 0
  %908 = vmatprep.subr.bf16.mxu0 0
  %909 = vmatpush1.bf16.msra.mxu0 0
  %910 = vmatprep.subr.bf16.mxu0 0
  %911 = vmatpush1.bf16.msra.mxu0 %v895
  %912 = vmatprep.subr.bf16.mxu0 0
  %913 = vmatpush1.bf16.msra.mxu0 %v894
  %914 = vmatprep.subr.bf16.mxu0 0
  %915 = vmatpush2.bf16.msra.mxu0 0
  %916 = vmatprep.subr.bf16.mxu0 0
  %917 = vmatpush2.bf16.msra.mxu0 0
  %918 = vmatprep.subr.bf16.mxu0 0
  %919 = vmatpush2.bf16.msra.mxu0 0
  %920 = vmatprep.subr.bf16.mxu0 0
  %921 = vmatpush2.bf16.msra.mxu0 0
  %922 = vmatprep.subr.bf16.mxu0 0
  %923 = vmatpush2.bf16.msra.mxu0 0
  %924 = vmatprep.subr.bf16.mxu0 0
  %925 = vmatpush2.bf16.msra.mxu0 0
  %926 = vmatprep.subr.bf16.mxu0 0
  %927 = vmatpush2.bf16.msra.mxu0 0
  %928 = vmatprep.subr.bf16.mxu0 0
  %929 = vmatpush2.bf16.msra.mxu0 0
  %930 = vmatprep.mubr.bf16.mxu0 0
  %931 = vmatmul.mubr.bf16.gmra.mxu0 %v706
  %v932 = vpop.f32.mrf.mxu0
  %v933 = vadd.f32 0.0, %v932
  %v934 = vpop.f32.mrf.mxu0
  %v935 = vpop.f32.mrf.mxu0
  %v936 = vadd.f32 0.0, %v935
  %v937 = vpop.f32.mrf.mxu0
  %938 = vmatprep.mubr.bf16.mxu0 0
  %939 = vmatmul.mubr.bf16.gmra.mxu0 %v709
  %v940 = vpop.f32.mrf.mxu0
  %v941 = vadd.f32 0.0, %v940
  %v942 = vpop.f32.mrf.mxu0
  %v943 = vpop.f32.mrf.mxu0
  %v944 = vadd.f32 0.0, %v943
  %v945 = vpop.f32.mrf.mxu0
  %946 = vmatprep.mubr.bf16.mxu0 0
  %947 = vmatmul.mubr.bf16.gmra.mxu0 %v712
  %v948 = vpop.f32.mrf.mxu0
  %v949 = vadd.f32 0.0, %v948
  %v950 = vpop.f32.mrf.mxu0
  %v951 = vpop.f32.mrf.mxu0
  %v952 = vadd.f32 0.0, %v951
  %v953 = vpop.f32.mrf.mxu0
  %954 = vdwg.mxu0
  %v961 = vrot.slane %v933, 2
  %v962 = vrot.slane %v936, 2
  %v963 = vsel %vm310, %v961, %v962
  %v964 = vrot.slane %v941, 2
  %v965 = vsel %vm310, %v962, %v964
  %v966 = vrot.slane %v944, 2
  %v967 = vsel %vm310, %v964, %v966
  %v968 = vrot.slane %v949, 2
  %v969 = vsel %vm310, %v966, %v968
  %v970 = vrot.slane %v952, 2
  %v971 = vsel %vm310, %v968, %v970
  %v978 = vsel %vm310, %v970, 0.0
  %v979 = vadd.f32 %v875, %v963
  %v980 = vadd.f32 %v876, %v965
  %v981 = vadd.f32 %v877, %v967
  %v982 = vadd.f32 %v878, %v969
  %v983 = vadd.f32 %v879, %v971
  %v984 = vadd.f32 %v880, %v978
  %v985 = vld [vmem:[%s2] sm:$0x1]
  %v987 = vlaneseq
  %v988 = vshrl.u32 %v987, 7
  %v989 = vsub.s32 0, %v988
  %v990 = vrot.slane %v985, %v989
  %v992 = vadd.f32 %v979, %v990
  %v993 = vadd.f32 %v980, %v990
  %v994 = vadd.f32 %v981, %v990
  %v995 = vadd.f32 %v982, %v990
  %v996 = vadd.f32 %v983, %v990
  %v997 = vadd.f32 %v984, %v990
  %v998 = vmax.f32 %v992, 0.0
  %v999 = vmax.f32 %v993, 0.0
  %v1000 = vmax.f32 %v994, 0.0
  %v1001 = vmax.f32 %v995, 0.0
  %v1002 = vmax.f32 %v996, 0.0
  %v1003 = vmax.f32 %v997, 0.0
  %v1004 = vpack.c.bf16 %v999, %v998
  %v1005 = vpack.c.bf16 %v1001, %v1000
  %v1006 = vpack.c.bf16 %v1003, %v1002
  %v1007 = vld [vmem:[%s3] sm:$0xf]
  %v1008 = vld [vmem:[%s3 + $0x4] sm:$0xf]
  %v1009 = vld [vmem:[%s4] sm:$0x1]
  %v1011 = vlaneseq
  %v1012 = vshrl.u32 %v1011, 7
  %v1013 = vsub.s32 0, %v1012
  %v1014 = vrot.slane %v1009, %v1013
  %v1018 = vunpack.c.l.b16 %v1007
  %v1019 = vunpack.c.l.b16 %v1008
  %v1020 = vpack.c.b16 %v1019, %v1018
  %vm1022 = vcmask 130048
  %v1024 = vsel %vm1022, %v1004, 0
  %v1027 = vsel %vm1022, %v1005, 0
  %v1030 = vsel %vm1022, %v1006, 0
  %1032 = vmatprep.subr.bf16.mxu0 0
  %1033 = vmatpush1.bf16.msra.mxu0 0
  %1034 = vmatprep.subr.bf16.mxu0 0
  %1035 = vmatpush1.bf16.msra.mxu0 0
  %1036 = vmatprep.subr.bf16.mxu0 0
  %1037 = vmatpush1.bf16.msra.mxu0 0
  %1038 = vmatprep.subr.bf16.mxu0 0
  %1039 = vmatpush1.bf16.msra.mxu0 0
  %1040 = vmatprep.subr.bf16.mxu0 0
  %1041 = vmatpush1.bf16.msra.mxu0 0
  %1042 = vmatprep.subr.bf16.mxu0 0
  %1043 = vmatpush1.bf16.msra.mxu0 0
  %1044 = vmatprep.subr.bf16.mxu0 0
  %1045 = vmatpush1.bf16.msra.mxu0 0
  %1046 = vmatprep.subr.bf16.mxu0 0
  %1047 = vmatpush1.bf16.msra.mxu0 %v1020
  %1048 = vmatprep.subr.bf16.mxu0 0
  %1049 = vmatpush2.bf16.msra.mxu0 0
  %1050 = vmatprep.subr.bf16.mxu0 0
  %1051 = vmatpush2.bf16.msra.mxu0 0
  %1052 = vmatprep.subr.bf16.mxu0 0
  %1053 = vmatpush2.bf16.msra.mxu0 0
  %1054 = vmatprep.subr.bf16.mxu0 0
  %1055 = vmatpush2.bf16.msra.mxu0 0
  %1056 = vmatprep.subr.bf16.mxu0 0
  %1057 = vmatpush2.bf16.msra.mxu0 0
  %1058 = vmatprep.subr.bf16.mxu0 0
  %1059 = vmatpush2.bf16.msra.mxu0 0
  %1060 = vmatprep.subr.bf16.mxu0 0
  %1061 = vmatpush2.bf16.msra.mxu0 0
  %1062 = vmatprep.subr.bf16.mxu0 0
  %1063 = vmatpush2.bf16.msra.mxu0 0
  %1064 = vmatprep.mubr.bf16.mxu0 0
  %1065 = vmatmul.mubr.bf16.gmra.mxu0 %v1024
  %v1066 = vpop.f32.mrf.mxu0
  %v1067 = vadd.f32 %v1014, %v1066
  %v1068 = vpop.f32.mrf.mxu0
  %v1069 = vpop.f32.mrf.mxu0
  %v1070 = vadd.f32 %v1014, %v1069
  %v1071 = vpop.f32.mrf.mxu0
  %1072 = vmatprep.mubr.bf16.mxu0 0
  %1073 = vmatmul.mubr.bf16.gmra.mxu0 %v1027
  %v1074 = vpop.f32.mrf.mxu0
  %v1075 = vadd.f32 %v1014, %v1074
  %v1076 = vpop.f32.mrf.mxu0
  %v1077 = vpop.f32.mrf.mxu0
  %v1078 = vadd.f32 %v1014, %v1077
  %v1079 = vpop.f32.mrf.mxu0
  %1080 = vmatprep.mubr.bf16.mxu0 0
  %1081 = vmatmul.mubr.bf16.gmra.mxu0 %v1030
  %v1082 = vpop.f32.mrf.mxu0
  %v1083 = vadd.f32 %v1014, %v1082
  %v1084 = vpop.f32.mrf.mxu0
  %v1085 = vpop.f32.mrf.mxu0
  %v1086 = vadd.f32 %v1014, %v1085
  %v1087 = vpop.f32.mrf.mxu0
  %1088 = vdwg.mxu0
  %v1089 = vunpack.c.l.bf16 %v336
  %v1090 = vunpack.c.l.bf16 %v337
  %v1091 = vunpack.c.l.bf16 %v338
  %v1092 = vunpack.c.l.bf16 %v339
  %v1093 = vunpack.c.l.bf16 %v340
  %v1094 = vunpack.c.l.bf16 %v341
  %v1101 = vrot.slane %v1089, 1
  %v1102 = vrot.slane %v1090, 1
  %v1103 = vsel %vm142, %v1101, %v1102
  %v1104 = vrot.slane %v1091, 1
  %v1105 = vsel %vm142, %v1102, %v1104
  %v1106 = vrot.slane %v1092, 1
  %v1107 = vsel %vm142, %v1104, %v1106
  %v1108 = vrot.slane %v1093, 1
  %v1109 = vsel %vm142, %v1106, %v1108
  %v1110 = vrot.slane %v1094, 1
  %v1111 = vsel %vm142, %v1108, %v1110
  %v1118 = vsel %vm142, %v1110, 0.0
  %v1119 = vadd.f32 %v1067, %v1103
  %v1120 = vadd.f32 %v1070, %v1105
  %v1121 = vadd.f32 %v1075, %v1107
  %v1122 = vadd.f32 %v1078, %v1109
  %v1123 = vadd.f32 %v1083, %v1111
  %v1124 = vadd.f32 %v1086, %v1118
  %v1125 = vmax.f32 %v1119, 0.0
  %v1126 = vmax.f32 %v1120, 0.0
  %v1127 = vmax.f32 %v1121, 0.0
  %v1128 = vmax.f32 %v1122, 0.0
  %v1129 = vmax.f32 %v1123, 0.0
  %v1130 = vmax.f32 %v1124, 0.0
  %1131 = vst.msk [vmem:[%s5] sm:$0xff] %vm69, %v1125
  %1132 = vst.msk [vmem:[%s5 + $0x8] sm:$0xff] %vm69, %v1126
  %1133 = vst.msk [vmem:[%s5 + $0x10] sm:$0xff] %vm69, %v1127
  %1134 = vst.msk [vmem:[%s5 + $0x18] sm:$0xff] %vm69, %v1128
  %1135 = vst.msk [vmem:[%s5 + $0x20] sm:$0xff] %vm69, %v1129
  %1136 = vst.msk [vmem:[%s5 + $0x28] sm:$0xff] %vm69, %v1130
  // Predicated region
  $region22: #{encoder_forward.9} parent=0 // pred_check
    _
  $region23: #{encoder_forward.9} parent=0 // pred_check_branch
    %1138 = sbr.rel (0) target = $region25
  $region24: #{encoder_forward.9} parent=0 // pred_region
    _
  $region25: #{encoder_forward.9} parent=0 // pred_fallthru
    _
  // Predicated region
  $region26: #{encoder_forward.9} parent=0 // pred_check
    _
  $region27: #{encoder_forward.9} parent=0 // pred_check_branch
    %1140 = sbr.rel (0) target = $region29
  $region28: #{encoder_forward.9} parent=0 // pred_region
    _
  $region29: #{encoder_forward.9} parent=0 // pred_fallthru
    _

// kernel: encoder_forward.8
$region0: #{encoder_forward.8}
  #allocation0 [shape = 'u32[]', space=smem, size = 0x4, offset = 0x4, fixed_abs, tag = 'smem constant byte address 0x4 - core index']
  #allocation1 [shape = 'u32[144,128]{1,0:T(1,128)}', space=vmem, size = 0x12000, scoped, tag = 'internal scratch']
  %s0 = inlined_call_operand.vmem [shape: bf16[3,48,32], index: 0, kind: input, shape index: {}]
  %s1 = inlined_call_operand.vmem [shape: bf16[9,32,16], index: 1, kind: input, shape index: {}]
  %s2 = inlined_call_operand.vmem [shape: f32[1,16], index: 2, kind: input, shape index: {}]
  %s3 = inlined_call_operand.vmem [shape: bf16[16,32], index: 3, kind: input, shape index: {}]
  %s4 = inlined_call_operand.vmem [shape: f32[1,32], index: 4, kind: input, shape index: {}]
  %s5 = inlined_call_operand.vmem [shape: f32[48,32], index: 5, kind: output, shape index: {}]
  %s6 = sld [smem:[#allocation0]]
  $region30: #{encoder_forward.8} parent=0
    _
  %s8 = ssub.s32 1, %s6
  %s9 = scalar_select 0, %s8, %s6
  // Predicated region
  $region2: #{encoder_forward.8} parent=0 // pred_check
    _
  $region3: #{encoder_forward.8} parent=0 // pred_check_branch
    %11 = sbr.rel (0) target = $region5
  $region4: #{encoder_forward.8} parent=0 // pred_region
    _
  $region5: #{encoder_forward.8} parent=0 // pred_fallthru
    _
  // Predicated region
  $region6: #{encoder_forward.8} parent=0 // pred_check
    _
  $region7: #{encoder_forward.8} parent=0 // pred_check_branch
    %13 = sbr.rel (0) target = $region9
  $region8: #{encoder_forward.8} parent=0 // pred_region
    _
  $region9: #{encoder_forward.8} parent=0 // pred_fallthru
    _
  // Predicated region
  $region10: #{encoder_forward.8} parent=0 // pred_check
    _
  $region11: #{encoder_forward.8} parent=0 // pred_check_branch
    %15 = sbr.rel (0) target = $region13
  $region12: #{encoder_forward.8} parent=0 // pred_region
    _
  $region13: #{encoder_forward.8} parent=0 // pred_fallthru
    _
  // Predicated region
  $region14: #{encoder_forward.8} parent=0 // pred_check
    _
  $region15: #{encoder_forward.8} parent=0 // pred_check_branch
    %17 = sbr.rel (0) target = $region17
  $region16: #{encoder_forward.8} parent=0 // pred_region
    _
  $region17: #{encoder_forward.8} parent=0 // pred_fallthru
    _
  // Predicated region
  $region18: #{encoder_forward.8} parent=0 // pred_check
    _
  $region19: #{encoder_forward.8} parent=0 // pred_check_branch
    %19 = sbr.rel (0) target = $region21
  $region20: #{encoder_forward.8} parent=0 // pred_region
    _
  $region21: #{encoder_forward.8} parent=0 // pred_fallthru
    _
  %v21 = vld [vmem:[%s0] sm:$0xf]
  %v22 = vld [vmem:[%s0 + $0x4] sm:$0xf]
  %v23 = vld [vmem:[%s0 + $0x8] sm:$0xf]
  %v24 = vld [vmem:[%s0 + $0xc] sm:$0xf]
  %v25 = vld [vmem:[%s0 + $0x10] sm:$0xf]
  %v26 = vld [vmem:[%s0 + $0x14] sm:$0xf]
  %v27 = vmax.bf16 %v21, 0
  %v28 = vmax.bf16 %v22, 0
  %v29 = vmax.bf16 %v23, 0
  %v30 = vmax.bf16 %v24, 0
  %v31 = vmax.bf16 %v25, 0
  %v32 = vmax.bf16 %v26, 0
  %v33 = vld [vmem:[%s1] sm:$0xf]
  %v34 = vld [vmem:[%s1 + $0x4] sm:$0xf]
  %v35 = vld [vmem:[%s1 + $0x8] sm:$0xf]
  %v36 = vld [vmem:[%s1 + $0xc] sm:$0xf]
  %s37 = scalar_lea.vmem %s1, 16
  %v38 = vld [vmem:[%s37] sm:$0xf]
  %v39 = vld [vmem:[%s37 + $0x4] sm:$0xf]
  %v40 = vld [vmem:[%s37 + $0x8] sm:$0xf]
  %v41 = vld [vmem:[%s37 + $0xc] sm:$0xf]
  %v48 = vunpack.c.l.b16 %v27
  %v49 = vunpack.c.l.b16 %v28
  %v50 = vunpack.c.l.b16 %v29
  %v51 = vunpack.c.l.b16 %v30
  %v52 = vunpack.c.l.b16 %v31
  %v53 = vunpack.c.l.b16 %v32
  %v54 = vpack.c.b16 %v49, %v48
  %v55 = vpack.c.b16 %v51, %v50
  %v56 = vpack.c.b16 %v53, %v52
  %v61 = vunpack.c.l.b16 %v38
  %v62 = vunpack.c.l.b16 %v39
  %v63 = vunpack.c.l.b16 %v40
  %v64 = vunpack.c.l.b16 %v41
  %v65 = vpack.c.b16 %v62, %v61
  %v66 = vpack.c.b16 %v64, %v63
  %vm69 = vcmask 261120
  %v71 = vsel %vm69, %v54, 0
  %v74 = vsel %vm69, %v55, 0
  %v77 = vsel %vm69, %v56, 0
  %79 = vmatprep.subr.bf16.mxu0 0
  %80 = vmatpush1.bf16.msra.mxu0 0
  %81 = vmatprep.subr.bf16.mxu0 0
  %82 = vmatpush1.bf16.msra.mxu0 0
  %83 = vmatprep.subr.bf16.mxu0 0
  %84 = vmatpush1.bf16.msra.mxu0 0
  %85 = vmatprep.subr.bf16.mxu0 0
  %86 = vmatpush1.bf16.msra.mxu0 0
  %87 = vmatprep.subr.bf16.mxu0 0
  %88 = vmatpush1.bf16.msra.mxu0 0
  %89 = vmatprep.subr.bf16.mxu0 0
  %90 = vmatpush1.bf16.msra.mxu0 0
  %91 = vmatprep.subr.bf16.mxu0 0
  %92 = vmatpush1.bf16.msra.mxu0 %v66
  %93 = vmatprep.subr.bf16.mxu0 0
  %94 = vmatpush1.bf16.msra.mxu0 %v65
  %95 = vmatprep.subr.bf16.mxu0 0
  %96 = vmatpush2.bf16.msra.mxu0 0
  %97 = vmatprep.subr.bf16.mxu0 0
  %98 = vmatpush2.bf16.msra.mxu0 0
  %99 = vmatprep.subr.bf16.mxu0 0
  %100 = vmatpush2.bf16.msra.mxu0 0
  %101 = vmatprep.subr.bf16.mxu0 0
  %102 = vmatpush2.bf16.msra.mxu0 0
  %103 = vmatprep.subr.bf16.mxu0 0
  %104 = vmatpush2.bf16.msra.mxu0 0
  %105 = vmatprep.subr.bf16.mxu0 0
  %106 = vmatpush2.bf16.msra.mxu0 0
  %107 = vmatprep.subr.bf16.mxu0 0
  %108 = vmatpush2.bf16.msra.mxu0 0
  %109 = vmatprep.subr.bf16.mxu0 0
  %110 = vmatpush2.bf16.msra.mxu0 0
  %111 = vmatprep.mubr.bf16.mxu0 0
  %112 = vmatmul.mubr.bf16.gmra.mxu0 %v71
  %v113 = vpop.f32.mrf.mxu0
  %v114 = vadd.f32 0.0, %v113
  %v115 = vpop.f32.mrf.mxu0
  %v116 = vpop.f32.mrf.mxu0
  %v117 = vadd.f32 0.0, %v116
  %v118 = vpop.f32.mrf.mxu0
  %119 = vmatprep.mubr.bf16.mxu0 0
  %120 = vmatmul.mubr.bf16.gmra.mxu0 %v74
  %v121 = vpop.f32.mrf.mxu0
  %v122 = vadd.f32 0.0, %v121
  %v123 = vpop.f32.mrf.mxu0
  %v124 = vpop.f32.mrf.mxu0
  %v125 = vadd.f32 0.0, %v124
  %v126 = vpop.f32.mrf.mxu0
  %127 = vmatprep.mubr.bf16.mxu0 0
  %128 = vmatmul.mubr.bf16.gmra.mxu0 %v77
  %v129 = vpop.f32.mrf.mxu0
  %v130 = vadd.f32 0.0, %v129
  %v131 = vpop.f32.mrf.mxu0
  %v132 = vpop.f32.mrf.mxu0
  %v133 = vadd.f32 0.0, %v132
  %v134 = vpop.f32.mrf.mxu0
  %135 = vdwg.mxu0
  %vm142 = vcmask 1046528
  %v143 = vrot.slane %v114, 1
  %v144 = vrot.slane %v117, 1
  %v145 = vsel %vm142, %v143, %v144
  %v146 = vrot.slane %v122, 1
  %v147 = vsel %vm142, %v144, %v146
  %v148 = vrot.slane %v125, 1
  %v149 = vsel %vm142, %v146, %v148
  %v150 = vrot.slane %v130, 1
  %v151 = vsel %vm142, %v148, %v150
  %v152 = vrot.slane %v133, 1
  %v153 = vsel %vm142, %v150, %v152
  %v160 = vsel %vm142, %v152, 0.0
  %v165 = vunpack.c.l.b16 %v33
  %v166 = vunpack.c.l.b16 %v34
  %v167 = vunpack.c.l.b16 %v35
  %v168 = vunpack.c.l.b16 %v36
  %v169 = vpack.c.b16 %v166, %v165
  %v170 = vpack.c.b16 %v168, %v167
  %173 = vmatprep.subr.bf16.mxu0 0
  %174 = vmatpush1.bf16.msra.mxu0 0
  %175 = vmatprep.subr.bf16.mxu0 0
  %176 = vmatpush1.bf16.msra.mxu0 0
  %177 = vmatprep.subr.bf16.mxu0 0
  %178 = vmatpush1.bf16.msra.mxu0 0
  %179 = vmatprep.subr.bf16.mxu0 0
  %180 = vmatpush1.bf16.msra.mxu0 0
  %181 = vmatprep.subr.bf16.mxu0 0
  %182 = vmatpush1.bf16.msra.mxu0 0
  %183 = vmatprep.subr.bf16.mxu0 0
  %184 = vmatpush1.bf16.msra.mxu0 0
  %185 = vmatprep.subr.bf16.mxu0 0
  %186 = vmatpush1.bf16.msra.mxu0 %v170
  %187 = vmatprep.subr.bf16.mxu0 0
  %188 = vmatpush1.bf16.msra.mxu0 %v169
  %189 = vmatprep.subr.bf16.mxu0 0
  %190 = vmatpush2.bf16.msra.mxu0 0
  %191 = vmatprep.subr.bf16.mxu0 0
  %192 = vmatpush2.bf16.msra.mxu0 0
  %193 = vmatprep.subr.bf16.mxu0 0
  %194 = vmatpush2.bf16.msra.mxu0 0
  %195 = vmatprep.subr.bf16.mxu0 0
  %196 = vmatpush2.bf16.msra.mxu0 0
  %197 = vmatprep.subr.bf16.mxu0 0
  %198 = vmatpush2.bf16.msra.mxu0 0
  %199 = vmatprep.subr.bf16.mxu0 0
  %200 = vmatpush2.bf16.msra.mxu0 0
  %201 = vmatprep.subr.bf16.mxu0 0
  %202 = vmatpush2.bf16.msra.mxu0 0
  %203 = vmatprep.subr.bf16.mxu0 0
  %204 = vmatpush2.bf16.msra.mxu0 0
  %205 = vmatprep.mubr.bf16.mxu0 0
  %206 = vmatmul.mubr.bf16.gmra.mxu0 %v71
  %v207 = vpop.f32.mrf.mxu0
  %v208 = vadd.f32 %v145, %v207
  %v209 = vpop.f32.mrf.mxu0
  %v210 = vpop.f32.mrf.mxu0
  %v211 = vadd.f32 %v147, %v210
  %v212 = vpop.f32.mrf.mxu0
  %213 = vmatprep.mubr.bf16.mxu0 0
  %214 = vmatmul.mubr.bf16.gmra.mxu0 %v74
  %v215 = vpop.f32.mrf.mxu0
  %v216 = vadd.f32 %v149, %v215
  %v217 = vpop.f32.mrf.mxu0
  %v218 = vpop.f32.mrf.mxu0
  %v219 = vadd.f32 %v151, %v218
  %v220 = vpop.f32.mrf.mxu0
  %221 = vmatprep.mubr.bf16.mxu0 0
  %222 = vmatmul.mubr.bf16.gmra.mxu0 %v77
  %v223 = vpop.f32.mrf.mxu0
  %v224 = vadd.f32 %v153, %v223
  %v225 = vpop.f32.mrf.mxu0
  %v226 = vpop.f32.mrf.mxu0
  %v227 = vadd.f32 %v160, %v226
  %v228 = vpop.f32.mrf.mxu0
  %229 = vdwg.mxu0
  %s230 = scalar_lea.vmem %s1, 32
  %v231 = vld [vmem:[%s230] sm:$0xf]
  %v232 = vld [vmem:[%s230 + $0x4] sm:$0xf]
  %v233 = vld [vmem:[%s230 + $0x8] sm:$0xf]
  %v234 = vld [vmem:[%s230 + $0xc] sm:$0xf]
  %v239 = vunpack.c.l.b16 %v231
  %v240 = vunpack.c.l.b16 %v232
  %v241 = vunpack.c.l.b16 %v233
  %v242 = vunpack.c.l.b16 %v234
  %v243 = vpack.c.b16 %v240, %v239
  %v244 = vpack.c.b16 %v242, %v241
  %247 = vmatprep.subr.bf16.mxu0 0
  %248 = vmatpush1.bf16.msra.mxu0 0
  %249 = vmatprep.subr.bf16.mxu0 0
  %250 = vmatpush1.bf16.msra.mxu0 0
  %251 = vmatprep.subr.bf16.mxu0 0
  %252 = vmatpush1.bf16.msra.mxu0 0
  %253 = vmatprep.subr.bf16.mxu0 0
  %254 = vmatpush1.bf16.msra.mxu0 0
  %255 = vmatprep.subr.bf16.mxu0 0
  %256 = vmatpush1.bf16.msra.mxu0 0
  %257 = vmatprep.subr.bf16.mxu0 0
  %258 = vmatpush1.bf16.msra.mxu0 0
  %259 = vmatprep.subr.bf16.mxu0 0
  %260 = vmatpush1.bf16.msra.mxu0 %v244
  %261 = vmatprep.subr.bf16.mxu0 0
  %262 = vmatpush1.bf16.msra.mxu0 %v243
  %263 = vmatprep.subr.bf16.mxu0 0
  %264 = vmatpush2.bf16.msra.mxu0 0
  %265 = vmatprep.subr.bf16.mxu0 0
  %266 = vmatpush2.bf16.msra.mxu0 0
  %267 = vmatprep.subr.bf16.mxu0 0
  %268 = vmatpush2.bf16.msra.mxu0 0
  %269 = vmatprep.subr.bf16.mxu0 0
  %270 = vmatpush2.bf16.msra.mxu0 0
  %271 = vmatprep.subr.bf16.mxu0 0
  %272 = vmatpush2.bf16.msra.mxu0 0
  %273 = vmatprep.subr.bf16.mxu0 0
  %274 = vmatpush2.bf16.msra.mxu0 0
  %275 = vmatprep.subr.bf16.mxu0 0
  %276 = vmatpush2.bf16.msra.mxu0 0
  %277 = vmatprep.subr.bf16.mxu0 0
  %278 = vmatpush2.bf16.msra.mxu0 0
  %279 = vmatprep.mubr.bf16.mxu0 0
  %280 = vmatmul.mubr.bf16.gmra.mxu0 %v71
  %v281 = vpop.f32.mrf.mxu0
  %v282 = vadd.f32 0.0, %v281
  %v283 = vpop.f32.mrf.mxu0
  %v284 = vpop.f32.mrf.mxu0
  %v285 = vadd.f32 0.0, %v284
  %v286 = vpop.f32.mrf.mxu0
  %287 = vmatprep.mubr.bf16.mxu0 0
  %288 = vmatmul.mubr.bf16.gmra.mxu0 %v74
  %v289 = vpop.f32.mrf.mxu0
  %v290 = vadd.f32 0.0, %v289
  %v291 = vpop.f32.mrf.mxu0
  %v292 = vpop.f32.mrf.mxu0
  %v293 = vadd.f32 0.0, %v292
  %v294 = vpop.f32.mrf.mxu0
  %295 = vmatprep.mubr.bf16.mxu0 0
  %296 = vmatmul.mubr.bf16.gmra.mxu0 %v77
  %v297 = vpop.f32.mrf.mxu0
  %v298 = vadd.f32 0.0, %v297
  %v299 = vpop.f32.mrf.mxu0
  %v300 = vpop.f32.mrf.mxu0
  %v301 = vadd.f32 0.0, %v300
  %v302 = vpop.f32.mrf.mxu0
  %303 = vdwg.mxu0
  %vm310 = vcmask 1045504
  %v311 = vrot.slane %v282, 2
  %v312 = vrot.slane %v285, 2
  %v313 = vsel %vm310, %v311, %v312
  %v314 = vrot.slane %v290, 2
  %v315 = vsel %vm310, %v312, %v314
  %v316 = vrot.slane %v293, 2
  %v317 = vsel %vm310, %v314, %v316
  %v318 = vrot.slane %v298, 2
  %v319 = vsel %vm310, %v316, %v318
  %v320 = vrot.slane %v301, 2
  %v321 = vsel %vm310, %v318, %v320
  %v328 = vsel %vm310, %v320, 0.0
  %v329 = vadd.f32 %v208, %v313
  %v330 = vadd.f32 %v211, %v315
  %v331 = vadd.f32 %v216, %v317
  %v332 = vadd.f32 %v219, %v319
  %v333 = vadd.f32 %v224, %v321
  %v334 = vadd.f32 %v227, %v328
  %s335 = scalar_lea.vmem %s0, 24
  %v336 = vld [vmem:[%s335] sm:$0xf]
  %v337 = vld [vmem:[%s335 + $0x4] sm:$0xf]
  %v338 = vld [vmem:[%s335 + $0x8] sm:$0xf]
  %v339 = vld [vmem:[%s335 + $0xc] sm:$0xf]
  %v340 = vld [vmem:[%s335 + $0x10] sm:$0xf]
  %v341 = vld [vmem:[%s335 + $0x14] sm:$0xf]
  %v342 = vmax.bf16 %v336, 0
  %v343 = vmax.bf16 %v337, 0
  %v344 = vmax.bf16 %v338, 0
  %v345 = vmax.bf16 %v339, 0
  %v346 = vmax.bf16 %v340, 0
  %v347 = vmax.bf16 %v341, 0
  %s348 = scalar_lea.vmem %s1, 48
  %v349 = vld [vmem:[%s348] sm:$0xf]
  %v350 = vld [vmem:[%s348 + $0x4] sm:$0xf]
  %v351 = vld [vmem:[%s348 + $0x8] sm:$0xf]
  %v352 = vld [vmem:[%s348 + $0xc] sm:$0xf]
  %v359 = vunpack.c.l.b16 %v342
  %v360 = vunpack.c.l.b16 %v343
  %v361 = vunpack.c.l.b16 %v344
  %v362 = vunpack.c.l.b16 %v345
  %v363 = vunpack.c.l.b16 %v346
  %v364 = vunpack.c.l.b16 %v347
  %v365 = vpack.c.b16 %v360, %v359
  %v366 = vpack.c.b16 %v362, %v361
  %v367 = vpack.c.b16 %v364, %v363
  %v372 = vunpack.c.l.b16 %v349
  %v373 = vunpack.c.l.b16 %v350
  %v374 = vunpack.c.l.b16 %v351
  %v375 = vunpack.c.l.b16 %v352
  %v376 = vpack.c.b16 %v373, %v372
  %v377 = vpack.c.b16 %v375, %v374
  %v381 = vsel %vm69, %v365, 0
  %v384 = vsel %vm69, %v366, 0
  %v387 = vsel %vm69, %v367, 0
  %389 = vmatprep.subr.bf16.mxu0 0
  %390 = vmatpush1.bf16.msra.mxu0 0
  %391 = vmatprep.subr.bf16.mxu0 0
  %392 = vmatpush1.bf16.msra.mxu0 0
  %393 = vmatprep.subr.bf16.mxu0 0
  %394 = vmatpush1.bf16.msra.mxu0 0
  %395 = vmatprep.subr.bf16.mxu0 0
  %396 = vmatpush1.bf16.msra.mxu0 0
  %397 = vmatprep.subr.bf16.mxu0 0
  %398 = vmatpush1.bf16.msra.mxu0 0
  %399 = vmatprep.subr.bf16.mxu0 0
  %400 = vmatpush1.bf16.msra.mxu0 0
  %401 = vmatprep.subr.bf16.mxu0 0
  %402 = vmatpush1.bf16.msra.mxu0 %v377
  %403 = vmatprep.subr.bf16.mxu0 0
  %404 = vmatpush1.bf16.msra.mxu0 %v376
  %405 = vmatprep.subr.bf16.mxu0 0
  %406 = vmatpush2.bf16.msra.mxu0 0
  %407 = vmatprep.subr.bf16.mxu0 0
  %408 = vmatpush2.bf16.msra.mxu0 0
  %409 = vmatprep.subr.bf16.mxu0 0
  %410 = vmatpush2.bf16.msra.mxu0 0
  %411 = vmatprep.subr.bf16.mxu0 0
  %412 = vmatpush2.bf16.msra.mxu0 0
  %413 = vmatprep.subr.bf16.mxu0 0
  %414 = vmatpush2.bf16.msra.mxu0 0
  %415 = vmatprep.subr.bf16.mxu0 0
  %416 = vmatpush2.bf16.msra.mxu0 0
  %417 = vmatprep.subr.bf16.mxu0 0
  %418 = vmatpush2.bf16.msra.mxu0 0
  %419 = vmatprep.subr.bf16.mxu0 0
  %420 = vmatpush2.bf16.msra.mxu0 0
  %421 = vmatprep.mubr.bf16.mxu0 0
  %422 = vmatmul.mubr.bf16.gmra.mxu0 %v381
  %v423 = vpop.f32.mrf.mxu0
  %v424 = vadd.f32 0.0, %v423
  %v425 = vpop.f32.mrf.mxu0
  %v426 = vpop.f32.mrf.mxu0
  %v427 = vadd.f32 0.0, %v426
  %v428 = vpop.f32.mrf.mxu0
  %429 = vmatprep.mubr.bf16.mxu0 0
  %430 = vmatmul.mubr.bf16.gmra.mxu0 %v384
  %v431 = vpop.f32.mrf.mxu0
  %v432 = vadd.f32 0.0, %v431
  %v433 = vpop.f32.mrf.mxu0
  %v434 = vpop.f32.mrf.mxu0
  %v435 = vadd.f32 0.0, %v434
  %v436 = vpop.f32.mrf.mxu0
  %437 = vmatprep.mubr.bf16.mxu0 0
  %438 = vmatmul.mubr.bf16.gmra.mxu0 %v387
  %v439 = vpop.f32.mrf.mxu0
  %v440 = vadd.f32 0.0, %v439
  %v441 = vpop.f32.mrf.mxu0
  %v442 = vpop.f32.mrf.mxu0
  %v443 = vadd.f32 0.0, %v442
  %v444 = vpop.f32.mrf.mxu0
  %445 = vdwg.mxu0
  %v446 = vadd.f32 %v329, %v424
  %v447 = vadd.f32 %v330, %v427
  %v448 = vadd.f32 %v331, %v432
  %v449 = vadd.f32 %v332, %v435
  %v450 = vadd.f32 %v333, %v440
  %v451 = vadd.f32 %v334, %v443
  %s452 = scalar_lea.vmem %s1, 64
  %v453 = vld [vmem:[%s452] sm:$0xf]
  %v454 = vld [vmem:[%s452 + $0x4] sm:$0xf]
  %v455 = vld [vmem:[%s452 + $0x8] sm:$0xf]
  %v456 = vld [vmem:[%s452 + $0xc] sm:$0xf]
  %v461 = vunpack.c.l.b16 %v453
  %v462 = vunpack.c.l.b16 %v454
  %v463 = vunpack.c.l.b16 %v455
  %v464 = vunpack.c.l.b16 %v456
  %v465 = vpack.c.b16 %v462, %v461
  %v466 = vpack.c.b16 %v464, %v463
  %469 = vmatprep.subr.bf16.mxu0 0
  %470 = vmatpush1.bf16.msra.mxu0 0
  %471 = vmatprep.subr.bf16.mxu0 0
  %472 = vmatpush1.bf16.msra.mxu0 0
  %473 = vmatprep.subr.bf16.mxu0 0
  %474 = vmatpush1.bf16.msra.mxu0 0
  %475 = vmatprep.subr.bf16.mxu0 0
  %476 = vmatpush1.bf16.msra.mxu0 0
  %477 = vmatprep.subr.bf16.mxu0 0
  %478 = vmatpush1.bf16.msra.mxu0 0
  %479 = vmatprep.subr.bf16.mxu0 0
  %480 = vmatpush1.bf16.msra.mxu0 0
  %481 = vmatprep.subr.bf16.mxu0 0
  %482 = vmatpush1.bf16.msra.mxu0 %v466
  %483 = vmatprep.subr.bf16.mxu0 0
  %484 = vmatpush1.bf16.msra.mxu0 %v465
  %485 = vmatprep.subr.bf16.mxu0 0
  %486 = vmatpush2.bf16.msra.mxu0 0
  %487 = vmatprep.subr.bf16.mxu0 0
  %488 = vmatpush2.bf16.msra.mxu0 0
  %489 = vmatprep.subr.bf16.mxu0 0
  %490 = vmatpush2.bf16.msra.mxu0 0
  %491 = vmatprep.subr.bf16.mxu0 0
  %492 = vmatpush2.bf16.msra.mxu0 0
  %493 = vmatprep.subr.bf16.mxu0 0
  %494 = vmatpush2.bf16.msra.mxu0 0
  %495 = vmatprep.subr.bf16.mxu0 0
  %496 = vmatpush2.bf16.msra.mxu0 0
  %497 = vmatprep.subr.bf16.mxu0 0
  %498 = vmatpush2.bf16.msra.mxu0 0
  %499 = vmatprep.subr.bf16.mxu0 0
  %500 = vmatpush2.bf16.msra.mxu0 0
  %501 = vmatprep.mubr.bf16.mxu0 0
  %502 = vmatmul.mubr.bf16.gmra.mxu0 %v381
  %v503 = vpop.f32.mrf.mxu0
  %v504 = vadd.f32 0.0, %v503
  %v505 = vpop.f32.mrf.mxu0
  %v506 = vpop.f32.mrf.mxu0
  %v507 = vadd.f32 0.0, %v506
  %v508 = vpop.f32.mrf.mxu0
  %509 = vmatprep.mubr.bf16.mxu0 0
  %510 = vmatmul.mubr.bf16.gmra.mxu0 %v384
  %v511 = vpop.f32.mrf.mxu0
  %v512 = vadd.f32 0.0, %v511
  %v513 = vpop.f32.mrf.mxu0
  %v514 = vpop.f32.mrf.mxu0
  %v515 = vadd.f32 0.0, %v514
  %v516 = vpop.f32.mrf.mxu0
  %517 = vmatprep.mubr.bf16.mxu0 0
  %518 = vmatmul.mubr.bf16.gmra.mxu0 %v387
  %v519 = vpop.f32.mrf.mxu0
  %v520 = vadd.f32 0.0, %v519
  %v521 = vpop.f32.mrf.mxu0
  %v522 = vpop.f32.mrf.mxu0
  %v523 = vadd.f32 0.0, %v522
  %v524 = vpop.f32.mrf.mxu0
  %525 = vdwg.mxu0
  %v532 = vrot.slane %v504, 1
  %v533 = vrot.slane %v507, 1
  %v534 = vsel %vm142, %v532, %v533
  %v535 = vrot.slane %v512, 1
  %v536 = vsel %vm142, %v533, %v535
  %v537 = vrot.slane %v515, 1
  %v538 = vsel %vm142, %v535, %v537
  %v539 = vrot.slane %v520, 1
  %v540 = vsel %vm142, %v537, %v539
  %v541 = vrot.slane %v523, 1
  %v542 = vsel %vm142, %v539, %v541
  %v549 = vsel %vm142, %v541, 0.0
  %v550 = vadd.f32 %v446, %v534
  %v551 = vadd.f32 %v447, %v536
  %v552 = vadd.f32 %v448, %v538
  %v553 = vadd.f32 %v449, %v540
  %v554 = vadd.f32 %v450, %v542
  %v555 = vadd.f32 %v451, %v549
  %s556 = scalar_lea.vmem %s1, 80
  %v557 = vld [vmem:[%s556] sm:$0xf]
  %v558 = vld [vmem:[%s556 + $0x4] sm:$0xf]
  %v559 = vld [vmem:[%s556 + $0x8] sm:$0xf]
  %v560 = vld [vmem:[%s556 + $0xc] sm:$0xf]
  %v565 = vunpack.c.l.b16 %v557
  %v566 = vunpack.c.l.b16 %v558
  %v567 = vunpack.c.l.b16 %v559
  %v568 = vunpack.c.l.b16 %v560
  %v569 = vpack.c.b16 %v566, %v565
  %v570 = vpack.c.b16 %v568, %v567
  %573 = vmatprep.subr.bf16.mxu0 0
  %574 = vmatpush1.bf16.msra.mxu0 0
  %575 = vmatprep.subr.bf16.mxu0 0
  %576 = vmatpush1.bf16.msra.mxu0 0
  %577 = vmatprep.subr.bf16.mxu0 0
  %578 = vmatpush1.bf16.msra.mxu0 0
  %579 = vmatprep.subr.bf16.mxu0 0
  %580 = vmatpush1.bf16.msra.mxu0 0
  %581 = vmatprep.subr.bf16.mxu0 0
  %582 = vmatpush1.bf16.msra.mxu0 0
  %583 = vmatprep.subr.bf16.mxu0 0
  %584 = vmatpush1.bf16.msra.mxu0 0
  %585 = vmatprep.subr.bf16.mxu0 0
  %586 = vmatpush1.bf16.msra.mxu0 %v570
  %587 = vmatprep.subr.bf16.mxu0 0
  %588 = vmatpush1.bf16.msra.mxu0 %v569
  %589 = vmatprep.subr.bf16.mxu0 0
  %590 = vmatpush2.bf16.msra.mxu0 0
  %591 = vmatprep.subr.bf16.mxu0 0
  %592 = vmatpush2.bf16.msra.mxu0 0
  %593 = vmatprep.subr.bf16.mxu0 0
  %594 = vmatpush2.bf16.msra.mxu0 0
  %595 = vmatprep.subr.bf16.mxu0 0
  %596 = vmatpush2.bf16.msra.mxu0 0
  %597 = vmatprep.subr.bf16.mxu0 0
  %598 = vmatpush2.bf16.msra.mxu0 0
  %599 = vmatprep.subr.bf16.mxu0 0
  %600 = vmatpush2.bf16.msra.mxu0 0
  %601 = vmatprep.subr.bf16.mxu0 0
  %602 = vmatpush2.bf16.msra.mxu0 0
  %603 = vmatprep.subr.bf16.mxu0 0
  %604 = vmatpush2.bf16.msra.mxu0 0
  %605 = vmatprep.mubr.bf16.mxu0 0
  %606 = vmatmul.mubr.bf16.gmra.mxu0 %v381
  %v607 = vpop.f32.mrf.mxu0
  %v608 = vadd.f32 0.0, %v607
  %v609 = vpop.f32.mrf.mxu0
  %v610 = vpop.f32.mrf.mxu0
  %v611 = vadd.f32 0.0, %v610
  %v612 = vpop.f32.mrf.mxu0
  %613 = vmatprep.mubr.bf16.mxu0 0
  %614 = vmatmul.mubr.bf16.gmra.mxu0 %v384
  %v615 = vpop.f32.mrf.mxu0
  %v616 = vadd.f32 0.0, %v615
  %v617 = vpop.f32.mrf.mxu0
  %v618 = vpop.f32.mrf.mxu0
  %v619 = vadd.f32 0.0, %v618
  %v620 = vpop.f32.mrf.mxu0
  %621 = vmatprep.mubr.bf16.mxu0 0
  %622 = vmatmul.mubr.bf16.gmra.mxu0 %v387
  %v623 = vpop.f32.mrf.mxu0
  %v624 = vadd.f32 0.0, %v623
  %v625 = vpop.f32.mrf.mxu0
  %v626 = vpop.f32.mrf.mxu0
  %v627 = vadd.f32 0.0, %v626
  %v628 = vpop.f32.mrf.mxu0
  %629 = vdwg.mxu0
  %v636 = vrot.slane %v608, 2
  %v637 = vrot.slane %v611, 2
  %v638 = vsel %vm310, %v636, %v637
  %v639 = vrot.slane %v616, 2
  %v640 = vsel %vm310, %v637, %v639
  %v641 = vrot.slane %v619, 2
  %v642 = vsel %vm310, %v639, %v641
  %v643 = vrot.slane %v624, 2
  %v644 = vsel %vm310, %v641, %v643
  %v645 = vrot.slane %v627, 2
  %v646 = vsel %vm310, %v643, %v645
  %v653 = vsel %vm310, %v645, 0.0
  %v654 = vadd.f32 %v550, %v638
  %v655 = vadd.f32 %v551, %v640
  %v656 = vadd.f32 %v552, %v642
  %v657 = vadd.f32 %v553, %v644
  %v658 = vadd.f32 %v554, %v646
  %v659 = vadd.f32 %v555, %v653
  %s660 = scalar_lea.vmem %s0, 48
  %v661 = vld [vmem:[%s660] sm:$0xf]
  %v662 = vld [vmem:[%s660 + $0x4] sm:$0xf]
  %v663 = vld [vmem:[%s660 + $0x8] sm:$0xf]
  %v664 = vld [vmem:[%s660 + $0xc] sm:$0xf]
  %v665 = vld [vmem:[%s660 + $0x10] sm:$0xf]
  %v666 = vld [vmem:[%s660 + $0x14] sm:$0xf]
  %v667 = vmax.bf16 %v661, 0
  %v668 = vmax.bf16 %v662, 0
  %v669 = vmax.bf16 %v663, 0
  %v670 = vmax.bf16 %v664, 0
  %v671 = vmax.bf16 %v665, 0
  %v672 = vmax.bf16 %v666, 0
  %s673 = scalar_lea.vmem %s1, 96
  %v674 = vld [vmem:[%s673] sm:$0xf]
  %v675 = vld [vmem:[%s673 + $0x4] sm:$0xf]
  %v676 = vld [vmem:[%s673 + $0x8] sm:$0xf]
  %v677 = vld [vmem:[%s673 + $0xc] sm:$0xf]
  %v684 = vunpack.c.l.b16 %v667
  %v685 = vunpack.c.l.b16 %v668
  %v686 = vunpack.c.l.b16 %v669
  %v687 = vunpack.c.l.b16 %v670
  %v688 = vunpack.c.l.b16 %v671
  %v689 = vunpack.c.l.b16 %v672
  %v690 = vpack.c.b16 %v685, %v684
  %v691 = vpack.c.b16 %v687, %v686
  %v692 = vpack.c.b16 %v689, %v688
  %v697 = vunpack.c.l.b16 %v674
  %v698 = vunpack.c.l.b16 %v675
  %v699 = vunpack.c.l.b16 %v676
  %v700 = vunpack.c.l.b16 %v677
  %v701 = vpack.c.b16 %v698, %v697
  %v702 = vpack.c.b16 %v700, %v699
  %v706 = vsel %vm69, %v690, 0
  %v709 = vsel %vm69, %v691, 0
  %v712 = vsel %vm69, %v692, 0
  %714 = vmatprep.subr.bf16.mxu0 0
  %715 = vmatpush1.bf16.msra.mxu0 0
  %716 = vmatprep.subr.bf16.mxu0 0
  %717 = vmatpush1.bf16.msra.mxu0 0
  %718 = vmatprep.subr.bf16.mxu0 0
  %719 = vmatpush1.bf16.msra.mxu0 0
  %720 = vmatprep.subr.bf16.mxu0 0
  %721 = vmatpush1.bf16.msra.mxu0 0
  %722 = vmatprep.subr.bf16.mxu0 0
  %723 = vmatpush1.bf16.msra.mxu0 0
  %724 = vmatprep.subr.bf16.mxu0 0
  %725 = vmatpush1.bf16.msra.mxu0 0
  %726 = vmatprep.subr.bf16.mxu0 0
  %727 = vmatpush1.bf16.msra.mxu0 %v702
  %728 = vmatprep.subr.bf16.mxu0 0
  %729 = vmatpush1.bf16.msra.mxu0 %v701
  %730 = vmatprep.subr.bf16.mxu0 0
  %731 = vmatpush2.bf16.msra.mxu0 0
  %732 = vmatprep.subr.bf16.mxu0 0
  %733 = vmatpush2.bf16.msra.mxu0 0
  %734 = vmatprep.subr.bf16.mxu0 0
  %735 = vmatpush2.bf16.msra.mxu0 0
  %736 = vmatprep.subr.bf16.mxu0 0
  %737 = vmatpush2.bf16.msra.mxu0 0
  %738 = vmatprep.subr.bf16.mxu0 0
  %739 = vmatpush2.bf16.msra.mxu0 0
  %740 = vmatprep.subr.bf16.mxu0 0
  %741 = vmatpush2.bf16.msra.mxu0 0
  %742 = vmatprep.subr.bf16.mxu0 0
  %743 = vmatpush2.bf16.msra.mxu0 0
  %744 = vmatprep.subr.bf16.mxu0 0
  %745 = vmatpush2.bf16.msra.mxu0 0
  %746 = vmatprep.mubr.bf16.mxu0 0
  %747 = vmatmul.mubr.bf16.gmra.mxu0 %v706
  %v748 = vpop.f32.mrf.mxu0
  %v749 = vadd.f32 0.0, %v748
  %v750 = vpop.f32.mrf.mxu0
  %v751 = vpop.f32.mrf.mxu0
  %v752 = vadd.f32 0.0, %v751
  %v753 = vpop.f32.mrf.mxu0
  %754 = vmatprep.mubr.bf16.mxu0 0
  %755 = vmatmul.mubr.bf16.gmra.mxu0 %v709
  %v756 = vpop.f32.mrf.mxu0
  %v757 = vadd.f32 0.0, %v756
  %v758 = vpop.f32.mrf.mxu0
  %v759 = vpop.f32.mrf.mxu0
  %v760 = vadd.f32 0.0, %v759
  %v761 = vpop.f32.mrf.mxu0
  %762 = vmatprep.mubr.bf16.mxu0 0
  %763 = vmatmul.mubr.bf16.gmra.mxu0 %v712
  %v764 = vpop.f32.mrf.mxu0
  %v765 = vadd.f32 0.0, %v764
  %v766 = vpop.f32.mrf.mxu0
  %v767 = vpop.f32.mrf.mxu0
  %v768 = vadd.f32 0.0, %v767
  %v769 = vpop.f32.mrf.mxu0
  %770 = vdwg.mxu0
  %v771 = vadd.f32 %v654, %v749
  %v772 = vadd.f32 %v655, %v752
  %v773 = vadd.f32 %v656, %v757
  %v774 = vadd.f32 %v657, %v760
  %v775 = vadd.f32 %v658, %v765
  %v776 = vadd.f32 %v659, %v768
  %s777 = scalar_lea.vmem %s1, 112
  %v778 = vld [vmem:[%s777] sm:$0xf]
  %v779 = vld [vmem:[%s777 + $0x4] sm:$0xf]
  %v780 = vld [vmem:[%s777 + $0x8] sm:$0xf]
  %v781 = vld [vmem:[%s777 + $0xc] sm:$0xf]
  %v786 = vunpack.c.l.b16 %v778
  %v787 = vunpack.c.l.b16 %v779
  %v788 = vunpack.c.l.b16 %v780
  %v789 = vunpack.c.l.b16 %v781
  %v790 = vpack.c.b16 %v787, %v786
  %v791 = vpack.c.b16 %v789, %v788
  %794 = vmatprep.subr.bf16.mxu0 0
  %795 = vmatpush1.bf16.msra.mxu0 0
  %796 = vmatprep.subr.bf16.mxu0 0
  %797 = vmatpush1.bf16.msra.mxu0 0
  %798 = vmatprep.subr.bf16.mxu0 0
  %799 = vmatpush1.bf16.msra.mxu0 0
  %800 = vmatprep.subr.bf16.mxu0 0
  %801 = vmatpush1.bf16.msra.mxu0 0
  %802 = vmatprep.subr.bf16.mxu0 0
  %803 = vmatpush1.bf16.msra.mxu0 0
  %804 = vmatprep.subr.bf16.mxu0 0
  %805 = vmatpush1.bf16.msra.mxu0 0
  %806 = vmatprep.subr.bf16.mxu0 0
  %807 = vmatpush1.bf16.msra.mxu0 %v791
  %808 = vmatprep.subr.bf16.mxu0 0
  %809 = vmatpush1.bf16.msra.mxu0 %v790
  %810 = vmatprep.subr.bf16.mxu0 0
  %811 = vmatpush2.bf16.msra.mxu0 0
  %812 = vmatprep.subr.bf16.mxu0 0
  %813 = vmatpush2.bf16.msra.mxu0 0
  %814 = vmatprep.subr.bf16.mxu0 0
  %815 = vmatpush2.bf16.msra.mxu0 0
  %816 = vmatprep.subr.bf16.mxu0 0
  %817 = vmatpush2.bf16.msra.mxu0 0
  %818 = vmatprep.subr.bf16.mxu0 0
  %819 = vmatpush2.bf16.msra.mxu0 0
  %820 = vmatprep.subr.bf16.mxu0 0
  %821 = vmatpush2.bf16.msra.mxu0 0
  %822 = vmatprep.subr.bf16.mxu0 0
  %823 = vmatpush2.bf16.msra.mxu0 0
  %824 = vmatprep.subr.bf16.mxu0 0
  %825 = vmatpush2.bf16.msra.mxu0 0
  %826 = vmatprep.mubr.bf16.mxu0 0
  %827 = vmatmul.mubr.bf16.gmra.mxu0 %v706
  %v828 = vpop.f32.mrf.mxu0
  %v829 = vadd.f32 0.0, %v828
  %v830 = vpop.f32.mrf.mxu0
  %v831 = vpop.f32.mrf.mxu0
  %v832 = vadd.f32 0.0, %v831
  %v833 = vpop.f32.mrf.mxu0
  %834 = vmatprep.mubr.bf16.mxu0 0
  %835 = vmatmul.mubr.bf16.gmra.mxu0 %v709
  %v836 = vpop.f32.mrf.mxu0
  %v837 = vadd.f32 0.0, %v836
  %v838 = vpop.f32.mrf.mxu0
  %v839 = vpop.f32.mrf.mxu0
  %v840 = vadd.f32 0.0, %v839
  %v841 = vpop.f32.mrf.mxu0
  %842 = vmatprep.mubr.bf16.mxu0 0
  %843 = vmatmul.mubr.bf16.gmra.mxu0 %v712
  %v844 = vpop.f32.mrf.mxu0
  %v845 = vadd.f32 0.0, %v844
  %v846 = vpop.f32.mrf.mxu0
  %v847 = vpop.f32.mrf.mxu0
  %v848 = vadd.f32 0.0, %v847
  %v849 = vpop.f32.mrf.mxu0
  %850 = vdwg.mxu0
  %v857 = vrot.slane %v829, 1
  %v858 = vrot.slane %v832, 1
  %v859 = vsel %vm142, %v857, %v858
  %v860 = vrot.slane %v837, 1
  %v861 = vsel %vm142, %v858, %v860
  %v862 = vrot.slane %v840, 1
  %v863 = vsel %vm142, %v860, %v862
  %v864 = vrot.slane %v845, 1
  %v865 = vsel %vm142, %v862, %v864
  %v866 = vrot.slane %v848, 1
  %v867 = vsel %vm142, %v864, %v866
  %v874 = vsel %vm142, %v866, 0.0
  %v875 = vadd.f32 %v771, %v859
  %v876 = vadd.f32 %v772, %v861
  %v877 = vadd.f32 %v773, %v863
  %v878 = vadd.f32 %v774, %v865
  %v879 = vadd.f32 %v775, %v867
  %v880 = vadd.f32 %v776, %v874
  %s881 = scalar_lea.vmem %s1, 128
  %v882 = vld [vmem:[%s881] sm:$0xf]
  %v883 = vld [vmem:[%s881 + $0x4] sm:$0xf]
  %v884 = vld [vmem:[%s881 + $0x8] sm:$0xf]
  %v885 = vld [vmem:[%s881 + $0xc] sm:$0xf]
  %v890 = vunpack.c.l.b16 %v882
  %v891 = vunpack.c.l.b16 %v883
  %v892 = vunpack.c.l.b16 %v884
  %v893 = vunpack.c.l.b16 %v885
  %v894 = vpack.c.b16 %v891, %v890
  %v895 = vpack.c.b16 %v893, %v892
  %898 = vmatprep.subr.bf16.mxu0 0
  %899 = vmatpush1.bf16.msra.mxu0 0
  %900 = vmatprep.subr.bf16.mxu0 0
  %901 = vmatpush1.bf16.msra.mxu0 0
  %902 = vmatprep.subr.bf16.mxu0 0
  %903 = vmatpush1.bf16.msra.mxu0 0
  %904 = vmatprep.subr.bf16.mxu0 0
  %905 = vmatpush1.bf16.msra.mxu0 0
  %906 = vmatprep.subr.bf16.mxu0 0
  %907 = vmatpush1.bf16.msra.mxu0 0
  %908 = vmatprep.subr.bf16.mxu0 0
  %909 = vmatpush1.bf16.msra.mxu0 0
  %910 = vmatprep.subr.bf16.mxu0 0
  %911 = vmatpush1.bf16.msra.mxu0 %v895
  %912 = vmatprep.subr.bf16.mxu0 0
  %913 = vmatpush1.bf16.msra.mxu0 %v894
  %914 = vmatprep.subr.bf16.mxu0 0
  %915 = vmatpush2.bf16.msra.mxu0 0
  %916 = vmatprep.subr.bf16.mxu0 0
  %917 = vmatpush2.bf16.msra.mxu0 0
  %918 = vmatprep.subr.bf16.mxu0 0
  %919 = vmatpush2.bf16.msra.mxu0 0
  %920 = vmatprep.subr.bf16.mxu0 0
  %921 = vmatpush2.bf16.msra.mxu0 0
  %922 = vmatprep.subr.bf16.mxu0 0
  %923 = vmatpush2.bf16.msra.mxu0 0
  %924 = vmatprep.subr.bf16.mxu0 0
  %925 = vmatpush2.bf16.msra.mxu0 0
  %926 = vmatprep.subr.bf16.mxu0 0
  %927 = vmatpush2.bf16.msra.mxu0 0
  %928 = vmatprep.subr.bf16.mxu0 0
  %929 = vmatpush2.bf16.msra.mxu0 0
  %930 = vmatprep.mubr.bf16.mxu0 0
  %931 = vmatmul.mubr.bf16.gmra.mxu0 %v706
  %v932 = vpop.f32.mrf.mxu0
  %v933 = vadd.f32 0.0, %v932
  %v934 = vpop.f32.mrf.mxu0
  %v935 = vpop.f32.mrf.mxu0
  %v936 = vadd.f32 0.0, %v935
  %v937 = vpop.f32.mrf.mxu0
  %938 = vmatprep.mubr.bf16.mxu0 0
  %939 = vmatmul.mubr.bf16.gmra.mxu0 %v709
  %v940 = vpop.f32.mrf.mxu0
  %v941 = vadd.f32 0.0, %v940
  %v942 = vpop.f32.mrf.mxu0
  %v943 = vpop.f32.mrf.mxu0
  %v944 = vadd.f32 0.0, %v943
  %v945 = vpop.f32.mrf.mxu0
  %946 = vmatprep.mubr.bf16.mxu0 0
  %947 = vmatmul.mubr.bf16.gmra.mxu0 %v712
  %v948 = vpop.f32.mrf.mxu0
  %v949 = vadd.f32 0.0, %v948
  %v950 = vpop.f32.mrf.mxu0
  %v951 = vpop.f32.mrf.mxu0
  %v952 = vadd.f32 0.0, %v951
  %v953 = vpop.f32.mrf.mxu0
  %954 = vdwg.mxu0
  %v961 = vrot.slane %v933, 2
  %v962 = vrot.slane %v936, 2
  %v963 = vsel %vm310, %v961, %v962
  %v964 = vrot.slane %v941, 2
  %v965 = vsel %vm310, %v962, %v964
  %v966 = vrot.slane %v944, 2
  %v967 = vsel %vm310, %v964, %v966
  %v968 = vrot.slane %v949, 2
  %v969 = vsel %vm310, %v966, %v968
  %v970 = vrot.slane %v952, 2
  %v971 = vsel %vm310, %v968, %v970
  %v978 = vsel %vm310, %v970, 0.0
  %v979 = vadd.f32 %v875, %v963
  %v980 = vadd.f32 %v876, %v965
  %v981 = vadd.f32 %v877, %v967
  %v982 = vadd.f32 %v878, %v969
  %v983 = vadd.f32 %v879, %v971
  %v984 = vadd.f32 %v880, %v978
  %v985 = vld [vmem:[%s2] sm:$0x1]
  %v987 = vlaneseq
  %v988 = vshrl.u32 %v987, 7
  %v989 = vsub.s32 0, %v988
  %v990 = vrot.slane %v985, %v989
  %v992 = vadd.f32 %v979, %v990
  %v993 = vadd.f32 %v980, %v990
  %v994 = vadd.f32 %v981, %v990
  %v995 = vadd.f32 %v982, %v990
  %v996 = vadd.f32 %v983, %v990
  %v997 = vadd.f32 %v984, %v990
  %v998 = vmax.f32 %v992, 0.0
  %v999 = vmax.f32 %v993, 0.0
  %v1000 = vmax.f32 %v994, 0.0
  %v1001 = vmax.f32 %v995, 0.0
  %v1002 = vmax.f32 %v996, 0.0
  %v1003 = vmax.f32 %v997, 0.0
  %v1004 = vpack.c.bf16 %v999, %v998
  %v1005 = vpack.c.bf16 %v1001, %v1000
  %v1006 = vpack.c.bf16 %v1003, %v1002
  %v1007 = vld [vmem:[%s3] sm:$0xf]
  %v1008 = vld [vmem:[%s3 + $0x4] sm:$0xf]
  %v1009 = vld [vmem:[%s4] sm:$0x1]
  %v1011 = vlaneseq
  %v1012 = vshrl.u32 %v1011, 7
  %v1013 = vsub.s32 0, %v1012
  %v1014 = vrot.slane %v1009, %v1013
  %v1018 = vunpack.c.l.b16 %v1007
  %v1019 = vunpack.c.l.b16 %v1008
  %v1020 = vpack.c.b16 %v1019, %v1018
  %vm1022 = vcmask 130048
  %v1024 = vsel %vm1022, %v1004, 0
  %v1027 = vsel %vm1022, %v1005, 0
  %v1030 = vsel %vm1022, %v1006, 0
  %1032 = vmatprep.subr.bf16.mxu0 0
  %1033 = vmatpush1.bf16.msra.mxu0 0
  %1034 = vmatprep.subr.bf16.mxu0 0
  %1035 = vmatpush1.bf16.msra.mxu0 0
  %1036 = vmatprep.subr.bf16.mxu0 0
  %1037 = vmatpush1.bf16.msra.mxu0 0
  %1038 = vmatprep.subr.bf16.mxu0 0
  %1039 = vmatpush1.bf16.msra.mxu0 0
  %1040 = vmatprep.subr.bf16.mxu0 0
  %1041 = vmatpush1.bf16.msra.mxu0 0
  %1042 = vmatprep.subr.bf16.mxu0 0
  %1043 = vmatpush1.bf16.msra.mxu0 0
  %1044 = vmatprep.subr.bf16.mxu0 0
  %1045 = vmatpush1.bf16.msra.mxu0 0
  %1046 = vmatprep.subr.bf16.mxu0 0
  %1047 = vmatpush1.bf16.msra.mxu0 %v1020
  %1048 = vmatprep.subr.bf16.mxu0 0
  %1049 = vmatpush2.bf16.msra.mxu0 0
  %1050 = vmatprep.subr.bf16.mxu0 0
  %1051 = vmatpush2.bf16.msra.mxu0 0
  %1052 = vmatprep.subr.bf16.mxu0 0
  %1053 = vmatpush2.bf16.msra.mxu0 0
  %1054 = vmatprep.subr.bf16.mxu0 0
  %1055 = vmatpush2.bf16.msra.mxu0 0
  %1056 = vmatprep.subr.bf16.mxu0 0
  %1057 = vmatpush2.bf16.msra.mxu0 0
  %1058 = vmatprep.subr.bf16.mxu0 0
  %1059 = vmatpush2.bf16.msra.mxu0 0
  %1060 = vmatprep.subr.bf16.mxu0 0
  %1061 = vmatpush2.bf16.msra.mxu0 0
  %1062 = vmatprep.subr.bf16.mxu0 0
  %1063 = vmatpush2.bf16.msra.mxu0 0
  %1064 = vmatprep.mubr.bf16.mxu0 0
  %1065 = vmatmul.mubr.bf16.gmra.mxu0 %v1024
  %v1066 = vpop.f32.mrf.mxu0
  %v1067 = vadd.f32 %v1014, %v1066
  %v1068 = vpop.f32.mrf.mxu0
  %v1069 = vpop.f32.mrf.mxu0
  %v1070 = vadd.f32 %v1014, %v1069
  %v1071 = vpop.f32.mrf.mxu0
  %1072 = vmatprep.mubr.bf16.mxu0 0
  %1073 = vmatmul.mubr.bf16.gmra.mxu0 %v1027
  %v1074 = vpop.f32.mrf.mxu0
  %v1075 = vadd.f32 %v1014, %v1074
  %v1076 = vpop.f32.mrf.mxu0
  %v1077 = vpop.f32.mrf.mxu0
  %v1078 = vadd.f32 %v1014, %v1077
  %v1079 = vpop.f32.mrf.mxu0
  %1080 = vmatprep.mubr.bf16.mxu0 0
  %1081 = vmatmul.mubr.bf16.gmra.mxu0 %v1030
  %v1082 = vpop.f32.mrf.mxu0
  %v1083 = vadd.f32 %v1014, %v1082
  %v1084 = vpop.f32.mrf.mxu0
  %v1085 = vpop.f32.mrf.mxu0
  %v1086 = vadd.f32 %v1014, %v1085
  %v1087 = vpop.f32.mrf.mxu0
  %1088 = vdwg.mxu0
  %v1089 = vunpack.c.l.bf16 %v336
  %v1090 = vunpack.c.l.bf16 %v337
  %v1091 = vunpack.c.l.bf16 %v338
  %v1092 = vunpack.c.l.bf16 %v339
  %v1093 = vunpack.c.l.bf16 %v340
  %v1094 = vunpack.c.l.bf16 %v341
  %v1101 = vrot.slane %v1089, 1
  %v1102 = vrot.slane %v1090, 1
  %v1103 = vsel %vm142, %v1101, %v1102
  %v1104 = vrot.slane %v1091, 1
  %v1105 = vsel %vm142, %v1102, %v1104
  %v1106 = vrot.slane %v1092, 1
  %v1107 = vsel %vm142, %v1104, %v1106
  %v1108 = vrot.slane %v1093, 1
  %v1109 = vsel %vm142, %v1106, %v1108
  %v1110 = vrot.slane %v1094, 1
  %v1111 = vsel %vm142, %v1108, %v1110
  %v1118 = vsel %vm142, %v1110, 0.0
  %v1119 = vadd.f32 %v1067, %v1103
  %v1120 = vadd.f32 %v1070, %v1105
  %v1121 = vadd.f32 %v1075, %v1107
  %v1122 = vadd.f32 %v1078, %v1109
  %v1123 = vadd.f32 %v1083, %v1111
  %v1124 = vadd.f32 %v1086, %v1118
  %1125 = vst.msk [vmem:[%s5] sm:$0xff] %vm69, %v1119
  %1126 = vst.msk [vmem:[%s5 + $0x8] sm:$0xff] %vm69, %v1120
  %1127 = vst.msk [vmem:[%s5 + $0x10] sm:$0xff] %vm69, %v1121
  %1128 = vst.msk [vmem:[%s5 + $0x18] sm:$0xff] %vm69, %v1122
  %1129 = vst.msk [vmem:[%s5 + $0x20] sm:$0xff] %vm69, %v1123
  %1130 = vst.msk [vmem:[%s5 + $0x28] sm:$0xff] %vm69, %v1124
  // Predicated region
  $region22: #{encoder_forward.8} parent=0 // pred_check
    _
  $region23: #{encoder_forward.8} parent=0 // pred_check_branch
    %1132 = sbr.rel (0) target = $region25
  $region24: #{encoder_forward.8} parent=0 // pred_region
    _
  $region25: #{encoder_forward.8} parent=0 // pred_fallthru
    _
  // Predicated region
  $region26: #{encoder_forward.8} parent=0 // pred_check
    _
  $region27: #{encoder_forward.8} parent=0 // pred_check_branch
    %1134 = sbr.rel (0) target = $region29
  $region28: #{encoder_forward.8} parent=0 // pred_region
    _
  $region29: #{encoder_forward.8} parent=0 // pred_fallthru
    _

</llo_original>
